<compile_context>
chip_gen: v7x
topology: tpu7x:2x2x1
jax: 0.10.0
libtpu: 0.0.40
codegen_flags: <defaults>
</compile_context>

<pallas_src>
import jax
import jax.numpy as jnp
from jax.experimental import pallas as pl
from jax.experimental.pallas import tpu as pltpu


# ----------------------------------------------------------------------------
# Fused Pallas kernel: all LSTM layers + MLP head, one invocation per batch shard
# ----------------------------------------------------------------------------
def _make_drqn_kernel(num_layers, seq_len):
    T = seq_len

    def kernel(*refs):
        # inputs : x, h0, c0, (wih_t, whh_t, b) * L, w1_t, b1, w2_t, b2
        # outputs: q, h_n, c_n
        # scratch: seq (T,B,H), gx (T,B,4H), h_scr (B,H), c_scr (B,H)
        x_ref, h0_ref, c0_ref = refs[:3]
        pos = 3
        layer_refs = []
        for _ in range(num_layers):
            layer_refs.append(refs[pos:pos + 3])
            pos += 3
        w1_ref, b1_ref, w2_ref, b2_ref = refs[pos:pos + 4]
        pos += 4
        q_ref, hn_ref, cn_ref = refs[pos:pos + 3]
        pos += 3
        seq_ref, gx_ref, h_scr, c_scr = refs[pos:pos + 4]

        H = hn_ref.shape[-1]

        for layer, (wih_ref, whh_ref, b_ref) in enumerate(layer_refs):
            is_last = (layer == num_layers - 1)

            # ---- Hoisted input projection -------------------------------------
            # Independent across t (no h dependence): an unrolled loop of 2-D MXU
            # matmuls that the scheduler pipelines; results parked in VMEM scratch.
            # Gate columns are pre-permuted to [i, f, o, g]; bias folded in.
            def proj(t, carry, layer=layer):
                xt = x_ref[t] if layer == 0 else seq_ref[t]           # (B, in)
                gx_ref[t] = (
                    jnp.dot(xt, wih_ref[...], preferred_element_type=jnp.float32)
                    + b_ref[...])
                return carry

            jax.lax.fori_loop(0, T, proj, 0, unroll=True)

            # ---- Serial recurrence: only h @ W_hh + elementwise per step -------
            h_scr[...] = h0_ref[layer]
            c_scr[...] = c0_ref[layer]

            def step(t, carry, is_last=is_last):
                gates = gx_ref[t] + jnp.dot(
                    h_scr[...], whh_ref[...], preferred_element_type=jnp.float32)
                # gate order [i, f, o, g]: one sigmoid over 3H lanes + one tanh
                sig = jax.nn.sigmoid(gates[:, : 3 * H])
                i_g = sig[:, :H]
                f_g = sig[:, H:2 * H]
                o_g = sig[:, 2 * H:]
                g_g = jnp.tanh(gates[:, 3 * H:])
                c_new = f_g * c_scr[...] + i_g * g_g
                h_new = o_g * jnp.tanh(c_new)
                c_scr[...] = c_new
                h_scr[...] = h_new
                if not is_last:
                    # sequence output only feeds the next layer; never leaves VMEM
                    seq_ref[t] = h_new
                return carry

            jax.lax.fori_loop(0, T, step, 0, unroll=True)

            hn_ref[layer] = h_scr[...]
            cn_ref[layer] = c_scr[...]

        # ---- MLP head (Linear -> ReLU -> Linear) on last layer's final hidden ---
        z = jnp.dot(h_scr[...], w1_ref[...],
                    preferred_element_type=jnp.float32) + b1_ref[...]
        z = jnp.maximum(z, 0.0)
        q_ref[...] = jnp.dot(z, w2_ref[...],
                             preferred_element_type=jnp.float32) + b2_ref[...]

    return kernel


def drqn_fused(features, h0, c0, lstm_params, mlp_params, *, batch_block=None):
    """One pallas_call for the whole DRQNModule forward. Returns (q, h_n, c_n)."""
    T, B, I = features.shape
    L = len(lstm_params)
    H = lstm_params[0]["whh_t"].shape[0]
    A = mlp_params["w2_t"].shape[1]

    # Optional batch sharding (megacore). Falls back to a single program if the
    # requested block would violate the (8,128) tiling rules.
    if (batch_block is None or batch_block >= B
            or B % batch_block != 0 or batch_block % 8 != 0):
        batch_block = B
    Bb = batch_block
    nb = B // Bb

    kernel = _make_drqn_kernel(L, T)

    flat_args = [features, h0, c0]
    in_specs = [
        pl.BlockSpec((T, Bb, I), lambda b: (0, b, 0)),
        pl.BlockSpec((L, Bb, H), lambda b: (0, b, 0)),
        pl.BlockSpec((L, Bb, H), lambda b: (0, b, 0)),
    ]
    for lp in lstm_params:
        flat_args += [lp["wih_t"], lp["whh_t"], lp["b"]]
        in_specs += [
            pl.BlockSpec(lp["wih_t"].shape, lambda b: (0, 0)),
            pl.BlockSpec(lp["whh_t"].shape, lambda b: (0, 0)),
            pl.BlockSpec(lp["b"].shape, lambda b: (0, 0)),
        ]
    flat_args += [mlp_params["w1_t"], mlp_params["b1"],
                  mlp_params["w2_t"], mlp_params["b2"]]
    in_specs += [
        pl.BlockSpec(mlp_params["w1_t"].shape, lambda b: (0, 0)),
        pl.BlockSpec(mlp_params["b1"].shape, lambda b: (0, 0)),
        pl.BlockSpec(mlp_params["w2_t"].shape, lambda b: (0, 0)),
        pl.BlockSpec(mlp_params["b2"].shape, lambda b: (0, 0)),
    ]

    out_specs = [
        pl.BlockSpec((Bb, A), lambda b: (b, 0)),
        pl.BlockSpec((L, Bb, H), lambda b: (0, b, 0)),
        pl.BlockSpec((L, Bb, H), lambda b: (0, b, 0)),
    ]
    out_shape = [
        jax.ShapeDtypeStruct((B, A), jnp.float32),
        jax.ShapeDtypeStruct((L, B, H), jnp.float32),
        jax.ShapeDtypeStruct((L, B, H), jnp.float32),
    ]
    scratch_shapes = [
        pltpu.VMEM((T, Bb, H), jnp.float32),      # previous layer's sequence
        pltpu.VMEM((T, Bb, 4 * H), jnp.float32),  # hoisted input-gate projection
        pltpu.VMEM((Bb, H), jnp.float32),         # running h
        pltpu.VMEM((Bb, H), jnp.float32),         # running c
    ]

    q, h_n, c_n = pl.pallas_call(
        kernel,
        grid=(nb,),
        in_specs=in_specs,
        out_specs=out_specs,
        out_shape=out_shape,
        scratch_shapes=scratch_shapes,
        compiler_params=pltpu.CompilerParams(
            dimension_semantics=("parallel",)),   # batch shards are independent
    )(*flat_args)
    return q, h_n, c_n


# ----------------------------------------------------------------------------
# Module-level forward (mirrors DRQNModule.forward semantics)
# ----------------------------------------------------------------------------
def drqn_module_forward(features, lstm_states, kparams, *, batch_block=None):
    """Returns (q_values, (h_n, c_n)) like DRQNModule.forward."""
    num_layers = len(kparams["lstm"])
    H = kparams["lstm"][0]["whh_t"].shape[0]

    # TODO(synk): torch.nn.utils.rnn.PackedSequence inputs have no Pallas
    # equivalent; dense (T, B, I) tensors only.
    if features.ndim == 2:
        features = features.reshape(1, *features.shape)

    if lstm_states is not None:
        h0_all, c0_all = lstm_states
        d_dim, b_dim, h_dim = h0_all.shape
        if d_dim != num_layers:
            # Faithful to the PyTorch module's (unusual) reshape branch; note it
            # produces odd semantics whenever b_dim != num_layers.
            h0_all = h0_all.reshape(b_dim, d_dim, h_dim)
            c0_all = c0_all.reshape(b_dim, d_dim, h_dim)
    else:
        B = features.shape[1]
        h0_all = jnp.zeros((num_layers, B, H), jnp.float32)
        c0_all = jnp.zeros((num_layers, B, H), jnp.float32)

    q, h_n, c_n = drqn_fused(features, h0_all, c0_all,
                             kparams["lstm"], kparams["mlp"],
                             batch_block=batch_block)
    return q, (h_n, c_n)


# ----------------------------------------------------------------------------
# Parameter construction (PyTorch layout) + conversion to kernel layout
# ----------------------------------------------------------------------------
def make_torch_params(key, input_size, hidden_size, num_layers, mlp_hidden, n_actions):
    """Synthetic parameters in PyTorch layout (gate row order i,f,g,o)."""
    p = {"lstm": [], "mlp": {}}
    bound = 1.0 / (hidden_size ** 0.5)
    for layer in range(num_layers):
        in_sz = input_size if layer == 0 else hidden_size
        key, k1, k2, k3, k4 = jax.random.split(key, 5)
        p["lstm"].append({
            "wih": jax.random.uniform(k1, (4 * hidden_size, in_sz), jnp.float32, -bound, bound),
            "whh": jax.random.uniform(k2, (4 * hidden_size, hidden_size), jnp.float32, -bound, bound),
            "bih": jax.random.uniform(k3, (4 * hidden_size,), jnp.float32, -bound, bound),
            "bhh": jax.random.uniform(k4, (4 * hidden_size,), jnp.float32, -bound, bound),
        })
    key, k1, k2, k3, k4 = jax.random.split(key, 5)
    b1b = 1.0 / (hidden_size ** 0.5)
    b2b = 1.0 / (mlp_hidden ** 0.5)
    p["mlp"] = {
        "w1": jax.random.uniform(k1, (mlp_hidden, hidden_size), jnp.float32, -b1b, b1b),
        "b1": jax.random.uniform(k2, (mlp_hidden,), jnp.float32, -b1b, b1b),
        "w2": jax.random.uniform(k3, (n_actions, mlp_hidden), jnp.float32, -b2b, b2b),
        "b2": jax.random.uniform(k4, (n_actions,), jnp.float32, -b2b, b2b),
    }
    return p


def prepare_kernel_params(tparams, hidden_size, weight_dtype=jnp.float32):
    """Transpose weights, fold biases, and permute gates i,f,g,o -> i,f,o,g.
    weight_dtype=jnp.bfloat16 is a valid option on v6e/v7x (f32 accumulation kept)."""
    H = hidden_size
    perm = jnp.concatenate([jnp.arange(0, H), jnp.arange(H, 2 * H),
                            jnp.arange(3 * H, 4 * H), jnp.arange(2 * H, 3 * H)])
    kp = {"lstm": [], "mlp": {}}
    for lp in tparams["lstm"]:
        kp["lstm"].append({
            "wih_t": lp["wih"][perm].T.astype(weight_dtype),               # (in, 4H)
            "whh_t": lp["whh"][perm].T.astype(weight_dtype),               # (H, 4H)
            "b": (lp["bih"] + lp["bhh"])[perm].reshape(1, 4 * H).astype(jnp.float32),
        })
    mp = tparams["mlp"]
    kp["mlp"] = {
        "w1_t": mp["w1"].T.astype(weight_dtype),
        "b1": mp["b1"].reshape(1, -1).astype(jnp.float32),
        "w2_t": mp["w2"].T.astype(weight_dtype),
        "b2": mp["b2"].reshape(1, -1).astype(jnp.float32),
    }
    return kp


# ----------------------------------------------------------------------------
# Pure-JAX reference with PyTorch LSTM semantics (correctness check only)
# ----------------------------------------------------------------------------
def reference_forward(features, lstm_states, tparams):
    if features.ndim == 2:
        features = features.reshape(1, *features.shape)
    h_all, c_all = lstm_states
    x = features
    hn_list, cn_list = [], []
    for li, lp in enumerate(tparams["lstm"]):
        H = lp["whh"].shape[1]
        h, c = h_all[li], c_all[li]
        ys = []
        for t in range(x.shape[0]):
            gates = x[t] @ lp["wih"].T + lp["bih"] + h @ lp["whh"].T + lp["bhh"]
            i = jax.nn.sigmoid(gates[:, 0 * H:1 * H])
            f = jax.nn.sigmoid(gates[:, 1 * H:2 * H])
            g = jnp.tanh(gates[:, 2 * H:3 * H])
            o = jax.nn.sigmoid(gates[:, 3 * H:4 * H])
            c = f * c + i * g
            h = o * jnp.tanh(c)
            ys.append(h)
        x = jnp.stack(ys)
        hn_list.append(h)
        cn_list.append(c)
    h_n = jnp.stack(hn_list)
    c_n = jnp.stack(cn_list)
    mp = tparams["mlp"]
    z = jnp.maximum(h_n[-1] @ mp["w1"].T + mp["b1"], 0.0)
    out = z @ mp["w2"].T + mp["b2"]
    return out, (h_n, c_n)


# ----------------------------------------------------------------------------
if __name__ == "__main__":
    T, B, INPUT, HIDDEN, NUM_LAYERS, MLP_HIDDEN, N_ACTIONS = 8, 2, 16, 32, 2, 64, 8

    key = jax.random.PRNGKey(0)
    key, kf, kh, kc = jax.random.split(key, 4)
    features = jax.random.normal(kf, (T, B, INPUT), jnp.float32)
    h0 = jax.random.normal(kh, (NUM_LAYERS, B, HIDDEN), jnp.float32) * 0.1
    c0 = jax.random.normal(kc, (NUM_LAYERS, B, HIDDEN), jnp.float32) * 0.1

    tparams = make_torch_params(key, INPUT, HIDDEN, NUM_LAYERS, MLP_HIDDEN, N_ACTIONS)
    kparams = prepare_kernel_params(tparams, HIDDEN)  # f32 so the check is tight

    out, (h_n, c_n) = drqn_module_forward(features, (h0, c0), kparams)
    jax.block_until_ready((out, h_n, c_n))

    ref_out, (ref_h, ref_c) = reference_forward(features, (h0, c0), tparams)
    assert out.shape == (B, N_ACTIONS)
    assert h_n.shape == (NUM_LAYERS, B, HIDDEN) and c_n.shape == (NUM_LAYERS, B, HIDDEN)
    assert jnp.allclose(out, ref_out, atol=1e-4, rtol=1e-4)
    assert jnp.allclose(h_n, ref_h, atol=1e-4, rtol=1e-4)
    assert jnp.allclose(c_n, ref_c, atol=1e-4, rtol=1e-4)

    print("KERNEL_OK")
</pallas_src>

<mosaic_0001>
module attributes {stable_mosaic.version = 11 : i64} {
  func.func @kernel(%arg0: i32, %arg1: memref<8x2x16xf32, #tpu.memory_space<vmem>>, %arg2: memref<2x2x32xf32, #tpu.memory_space<vmem>>, %arg3: memref<2x2x32xf32, #tpu.memory_space<vmem>>, %arg4: memref<16x128xf32, #tpu.memory_space<vmem>>, %arg5: memref<32x128xf32, #tpu.memory_space<vmem>>, %arg6: memref<1x128xf32, #tpu.memory_space<vmem>>, %arg7: memref<32x128xf32, #tpu.memory_space<vmem>>, %arg8: memref<32x128xf32, #tpu.memory_space<vmem>>, %arg9: memref<1x128xf32, #tpu.memory_space<vmem>>, %arg10: memref<32x64xf32, #tpu.memory_space<vmem>>, %arg11: memref<1x64xf32, #tpu.memory_space<vmem>>, %arg12: memref<64x8xf32, #tpu.memory_space<vmem>>, %arg13: memref<1x8xf32, #tpu.memory_space<vmem>>, %arg14: memref<2x8xf32, #tpu.memory_space<vmem>>, %arg15: memref<2x2x32xf32, #tpu.memory_space<vmem>>, %arg16: memref<2x2x32xf32, #tpu.memory_space<vmem>>, %arg17: memref<8x2x32xf32, #tpu.memory_space<vmem>>, %arg18: memref<8x2x128xf32, #tpu.memory_space<vmem>>, %arg19: memref<2x32xf32, #tpu.memory_space<vmem>>, %arg20: memref<2x32xf32, #tpu.memory_space<vmem>>) attributes {dimension_semantics = [#tpu.dimension_semantics<parallel>], iteration_bounds = array<i64: 1>, scalar_prefetch = 0 : i64, scratch_operands = 4 : i64, tpu.core_type = #tpu.core_type<tc>, window_params = [{transform_indices = @transform_0, window_bounds = array<i64: 8, 2, 16>}, {transform_indices = @transform_1, window_bounds = array<i64: 2, 2, 32>}, {transform_indices = @transform_2, window_bounds = array<i64: 2, 2, 32>}, {pipeline_mode = #tpu.pipeline_mode<synchronous>, transform_indices = @transform_3, window_bounds = array<i64: 16, 128>}, {pipeline_mode = #tpu.pipeline_mode<synchronous>, transform_indices = @transform_4, window_bounds = array<i64: 32, 128>}, {pipeline_mode = #tpu.pipeline_mode<synchronous>, transform_indices = @transform_5, window_bounds = array<i64: 1, 128>}, {pipeline_mode = #tpu.pipeline_mode<synchronous>, transform_indices = @transform_6, window_bounds = array<i64: 32, 128>}, {pipeline_mode = #tpu.pipeline_mode<synchronous>, transform_indices = @transform_7, window_bounds = array<i64: 32, 128>}, {pipeline_mode = #tpu.pipeline_mode<synchronous>, transform_indices = @transform_8, window_bounds = array<i64: 1, 128>}, {pipeline_mode = #tpu.pipeline_mode<synchronous>, transform_indices = @transform_9, window_bounds = array<i64: 32, 64>}, {pipeline_mode = #tpu.pipeline_mode<synchronous>, transform_indices = @transform_10, window_bounds = array<i64: 1, 64>}, {pipeline_mode = #tpu.pipeline_mode<synchronous>, transform_indices = @transform_11, window_bounds = array<i64: 64, 8>}, {pipeline_mode = #tpu.pipeline_mode<synchronous>, transform_indices = @transform_12, window_bounds = array<i64: 1, 8>}, {transform_indices = @transform_13, window_bounds = array<i64: 2, 8>}, {transform_indices = @transform_14, window_bounds = array<i64: 2, 2, 32>}, {transform_indices = @transform_15, window_bounds = array<i64: 2, 2, 32>}]} {
    %c0_i32 = arith.constant 0 : i32
    %0 = arith.index_cast %c0_i32 : i32 to index
    %c0 = arith.constant 0 : index
    %c0_0 = arith.constant 0 : index
    %1 = vector.load %arg1[%0, %c0, %c0_0] : memref<8x2x16xf32, #tpu.memory_space<vmem>>, vector<1x2x16xf32>
    %2 = vector.shape_cast %1 : vector<1x2x16xf32> to vector<2x16xf32>
    %c0_1 = arith.constant 0 : index
    %c0_2 = arith.constant 0 : index
    %3 = vector.load %arg4[%c0_1, %c0_2] : memref<16x128xf32, #tpu.memory_space<vmem>>, vector<16x128xf32>
    %cst = arith.constant dense<0.000000e+00> : vector<2x128xf32>
    %4 = tpu.matmul %2, %3, %cst {dimension_numbers = #tpu.dot_dimension_numbers<[1], [0], [0], [1], [0, 0, 1, 1], [], []>} : vector<2x16xf32>, vector<16x128xf32>, vector<2x128xf32> -> vector<2x128xf32>
    %c0_3 = arith.constant 0 : index
    %c0_4 = arith.constant 0 : index
    %5 = vector.load %arg6[%c0_3, %c0_4] : memref<1x128xf32, #tpu.memory_space<vmem>>, vector<1x128xf32>
    %6 = vector.broadcast %5 : vector<1x128xf32> to vector<2x128xf32>
    %7 = arith.addf %4, %6 : vector<2x128xf32>
    %8 = arith.index_cast %c0_i32 : i32 to index
    %c0_5 = arith.constant 0 : index
    %c0_6 = arith.constant 0 : index
    %9 = vector.load %arg18[%8, %c0_5, %c0_6] : memref<8x2x128xf32, #tpu.memory_space<vmem>>, vector<1x2x128xf32>
    %10 = vector.shape_cast %9 : vector<1x2x128xf32> to vector<2x128xf32>
    %11 = vector.shape_cast %7 : vector<2x128xf32> to vector<1x2x128xf32>
    tpu.vector_store %arg18[%8, %c0_5, %c0_6], %11 {strides = array<i32>} : memref<8x2x128xf32, #tpu.memory_space<vmem>>, vector<1x2x128xf32>,
    %c1_i32 = arith.constant 1 : i32
    %12 = arith.index_cast %c1_i32 : i32 to index
    %c0_7 = arith.constant 0 : index
    %c0_8 = arith.constant 0 : index
    %13 = vector.load %arg1[%12, %c0_7, %c0_8] : memref<8x2x16xf32, #tpu.memory_space<vmem>>, vector<1x2x16xf32>
    %14 = vector.shape_cast %13 : vector<1x2x16xf32> to vector<2x16xf32>
    %c0_9 = arith.constant 0 : index
    %c0_10 = arith.constant 0 : index
    %15 = vector.load %arg4[%c0_9, %c0_10] : memref<16x128xf32, #tpu.memory_space<vmem>>, vector<16x128xf32>
    %cst_11 = arith.constant dense<0.000000e+00> : vector<2x128xf32>
    %16 = tpu.matmul %14, %15, %cst_11 {dimension_numbers = #tpu.dot_dimension_numbers<[1], [0], [0], [1], [0, 0, 1, 1], [], []>} : vector<2x16xf32>, vector<16x128xf32>, vector<2x128xf32> -> vector<2x128xf32>
    %c0_12 = arith.constant 0 : index
    %c0_13 = arith.constant 0 : index
    %17 = vector.load %arg6[%c0_12, %c0_13] : memref<1x128xf32, #tpu.memory_space<vmem>>, vector<1x128xf32>
    %18 = vector.broadcast %17 : vector<1x128xf32> to vector<2x128xf32>
    %19 = arith.addf %16, %18 : vector<2x128xf32>
    %20 = arith.index_cast %c1_i32 : i32 to index
    %c0_14 = arith.constant 0 : index
    %c0_15 = arith.constant 0 : index
    %21 = vector.load %arg18[%20, %c0_14, %c0_15] : memref<8x2x128xf32, #tpu.memory_space<vmem>>, vector<1x2x128xf32>
    %22 = vector.shape_cast %21 : vector<1x2x128xf32> to vector<2x128xf32>
    %23 = vector.shape_cast %19 : vector<2x128xf32> to vector<1x2x128xf32>
    tpu.vector_store %arg18[%20, %c0_14, %c0_15], %23 {strides = array<i32>} : memref<8x2x128xf32, #tpu.memory_space<vmem>>, vector<1x2x128xf32>,
    %c2_i32 = arith.constant 2 : i32
    %24 = arith.index_cast %c2_i32 : i32 to index
    %c0_16 = arith.constant 0 : index
    %c0_17 = arith.constant 0 : index
    %25 = vector.load %arg1[%24, %c0_16, %c0_17] : memref<8x2x16xf32, #tpu.memory_space<vmem>>, vector<1x2x16xf32>
    %26 = vector.shape_cast %25 : vector<1x2x16xf32> to vector<2x16xf32>
    %c0_18 = arith.constant 0 : index
    %c0_19 = arith.constant 0 : index
    %27 = vector.load %arg4[%c0_18, %c0_19] : memref<16x128xf32, #tpu.memory_space<vmem>>, vector<16x128xf32>
    %cst_20 = arith.constant dense<0.000000e+00> : vector<2x128xf32>
    %28 = tpu.matmul %26, %27, %cst_20 {dimension_numbers = #tpu.dot_dimension_numbers<[1], [0], [0], [1], [0, 0, 1, 1], [], []>} : vector<2x16xf32>, vector<16x128xf32>, vector<2x128xf32> -> vector<2x128xf32>
    %c0_21 = arith.constant 0 : index
    %c0_22 = arith.constant 0 : index
    %29 = vector.load %arg6[%c0_21, %c0_22] : memref<1x128xf32, #tpu.memory_space<vmem>>, vector<1x128xf32>
    %30 = vector.broadcast %29 : vector<1x128xf32> to vector<2x128xf32>
    %31 = arith.addf %28, %30 : vector<2x128xf32>
    %32 = arith.index_cast %c2_i32 : i32 to index
    %c0_23 = arith.constant 0 : index
    %c0_24 = arith.constant 0 : index
    %33 = vector.load %arg18[%32, %c0_23, %c0_24] : memref<8x2x128xf32, #tpu.memory_space<vmem>>, vector<1x2x128xf32>
    %34 = vector.shape_cast %33 : vector<1x2x128xf32> to vector<2x128xf32>
    %35 = vector.shape_cast %31 : vector<2x128xf32> to vector<1x2x128xf32>
    tpu.vector_store %arg18[%32, %c0_23, %c0_24], %35 {strides = array<i32>} : memref<8x2x128xf32, #tpu.memory_space<vmem>>, vector<1x2x128xf32>,
    %c3_i32 = arith.constant 3 : i32
    %36 = arith.index_cast %c3_i32 : i32 to index
    %c0_25 = arith.constant 0 : index
    %c0_26 = arith.constant 0 : index
    %37 = vector.load %arg1[%36, %c0_25, %c0_26] : memref<8x2x16xf32, #tpu.memory_space<vmem>>, vector<1x2x16xf32>
    %38 = vector.shape_cast %37 : vector<1x2x16xf32> to vector<2x16xf32>
    %c0_27 = arith.constant 0 : index
    %c0_28 = arith.constant 0 : index
    %39 = vector.load %arg4[%c0_27, %c0_28] : memref<16x128xf32, #tpu.memory_space<vmem>>, vector<16x128xf32>
    %cst_29 = arith.constant dense<0.000000e+00> : vector<2x128xf32>
    %40 = tpu.matmul %38, %39, %cst_29 {dimension_numbers = #tpu.dot_dimension_numbers<[1], [0], [0], [1], [0, 0, 1, 1], [], []>} : vector<2x16xf32>, vector<16x128xf32>, vector<2x128xf32> -> vector<2x128xf32>
    %c0_30 = arith.constant 0 : index
    %c0_31 = arith.constant 0 : index
    %41 = vector.load %arg6[%c0_30, %c0_31] : memref<1x128xf32, #tpu.memory_space<vmem>>, vector<1x128xf32>
    %42 = vector.broadcast %41 : vector<1x128xf32> to vector<2x128xf32>
    %43 = arith.addf %40, %42 : vector<2x128xf32>
    %44 = arith.index_cast %c3_i32 : i32 to index
    %c0_32 = arith.constant 0 : index
    %c0_33 = arith.constant 0 : index
    %45 = vector.load %arg18[%44, %c0_32, %c0_33] : memref<8x2x128xf32, #tpu.memory_space<vmem>>, vector<1x2x128xf32>
    %46 = vector.shape_cast %45 : vector<1x2x128xf32> to vector<2x128xf32>
    %47 = vector.shape_cast %43 : vector<2x128xf32> to vector<1x2x128xf32>
    tpu.vector_store %arg18[%44, %c0_32, %c0_33], %47 {strides = array<i32>} : memref<8x2x128xf32, #tpu.memory_space<vmem>>, vector<1x2x128xf32>,
    %c4_i32 = arith.constant 4 : i32
    %48 = arith.index_cast %c4_i32 : i32 to index
    %c0_34 = arith.constant 0 : index
    %c0_35 = arith.constant 0 : index
    %49 = vector.load %arg1[%48, %c0_34, %c0_35] : memref<8x2x16xf32, #tpu.memory_space<vmem>>, vector<1x2x16xf32>
    %50 = vector.shape_cast %49 : vector<1x2x16xf32> to vector<2x16xf32>
    %c0_36 = arith.constant 0 : index
    %c0_37 = arith.constant 0 : index
    %51 = vector.load %arg4[%c0_36, %c0_37] : memref<16x128xf32, #tpu.memory_space<vmem>>, vector<16x128xf32>
    %cst_38 = arith.constant dense<0.000000e+00> : vector<2x128xf32>
    %52 = tpu.matmul %50, %51, %cst_38 {dimension_numbers = #tpu.dot_dimension_numbers<[1], [0], [0], [1], [0, 0, 1, 1], [], []>} : vector<2x16xf32>, vector<16x128xf32>, vector<2x128xf32> -> vector<2x128xf32>
    %c0_39 = arith.constant 0 : index
    %c0_40 = arith.constant 0 : index
    %53 = vector.load %arg6[%c0_39, %c0_40] : memref<1x128xf32, #tpu.memory_space<vmem>>, vector<1x128xf32>
    %54 = vector.broadcast %53 : vector<1x128xf32> to vector<2x128xf32>
    %55 = arith.addf %52, %54 : vector<2x128xf32>
    %56 = arith.index_cast %c4_i32 : i32 to index
    %c0_41 = arith.constant 0 : index
    %c0_42 = arith.constant 0 : index
    %57 = vector.load %arg18[%56, %c0_41, %c0_42] : memref<8x2x128xf32, #tpu.memory_space<vmem>>, vector<1x2x128xf32>
    %58 = vector.shape_cast %57 : vector<1x2x128xf32> to vector<2x128xf32>
    %59 = vector.shape_cast %55 : vector<2x128xf32> to vector<1x2x128xf32>
    tpu.vector_store %arg18[%56, %c0_41, %c0_42], %59 {strides = array<i32>} : memref<8x2x128xf32, #tpu.memory_space<vmem>>, vector<1x2x128xf32>,
    %c5_i32 = arith.constant 5 : i32
    %60 = arith.index_cast %c5_i32 : i32 to index
    %c0_43 = arith.constant 0 : index
    %c0_44 = arith.constant 0 : index
    %61 = vector.load %arg1[%60, %c0_43, %c0_44] : memref<8x2x16xf32, #tpu.memory_space<vmem>>, vector<1x2x16xf32>
    %62 = vector.shape_cast %61 : vector<1x2x16xf32> to vector<2x16xf32>
    %c0_45 = arith.constant 0 : index
    %c0_46 = arith.constant 0 : index
    %63 = vector.load %arg4[%c0_45, %c0_46] : memref<16x128xf32, #tpu.memory_space<vmem>>, vector<16x128xf32>
    %cst_47 = arith.constant dense<0.000000e+00> : vector<2x128xf32>
    %64 = tpu.matmul %62, %63, %cst_47 {dimension_numbers = #tpu.dot_dimension_numbers<[1], [0], [0], [1], [0, 0, 1, 1], [], []>} : vector<2x16xf32>, vector<16x128xf32>, vector<2x128xf32> -> vector<2x128xf32>
    %c0_48 = arith.constant 0 : index
    %c0_49 = arith.constant 0 : index
    %65 = vector.load %arg6[%c0_48, %c0_49] : memref<1x128xf32, #tpu.memory_space<vmem>>, vector<1x128xf32>
    %66 = vector.broadcast %65 : vector<1x128xf32> to vector<2x128xf32>
    %67 = arith.addf %64, %66 : vector<2x128xf32>
    %68 = arith.index_cast %c5_i32 : i32 to index
    %c0_50 = arith.constant 0 : index
    %c0_51 = arith.constant 0 : index
    %69 = vector.load %arg18[%68, %c0_50, %c0_51] : memref<8x2x128xf32, #tpu.memory_space<vmem>>, vector<1x2x128xf32>
    %70 = vector.shape_cast %69 : vector<1x2x128xf32> to vector<2x128xf32>
    %71 = vector.shape_cast %67 : vector<2x128xf32> to vector<1x2x128xf32>
    tpu.vector_store %arg18[%68, %c0_50, %c0_51], %71 {strides = array<i32>} : memref<8x2x128xf32, #tpu.memory_space<vmem>>, vector<1x2x128xf32>,
    %c6_i32 = arith.constant 6 : i32
    %72 = arith.index_cast %c6_i32 : i32 to index
    %c0_52 = arith.constant 0 : index
    %c0_53 = arith.constant 0 : index
    %73 = vector.load %arg1[%72, %c0_52, %c0_53] : memref<8x2x16xf32, #tpu.memory_space<vmem>>, vector<1x2x16xf32>
    %74 = vector.shape_cast %73 : vector<1x2x16xf32> to vector<2x16xf32>
    %c0_54 = arith.constant 0 : index
    %c0_55 = arith.constant 0 : index
    %75 = vector.load %arg4[%c0_54, %c0_55] : memref<16x128xf32, #tpu.memory_space<vmem>>, vector<16x128xf32>
    %cst_56 = arith.constant dense<0.000000e+00> : vector<2x128xf32>
    %76 = tpu.matmul %74, %75, %cst_56 {dimension_numbers = #tpu.dot_dimension_numbers<[1], [0], [0], [1], [0, 0, 1, 1], [], []>} : vector<2x16xf32>, vector<16x128xf32>, vector<2x128xf32> -> vector<2x128xf32>
    %c0_57 = arith.constant 0 : index
    %c0_58 = arith.constant 0 : index
    %77 = vector.load %arg6[%c0_57, %c0_58] : memref<1x128xf32, #tpu.memory_space<vmem>>, vector<1x128xf32>
    %78 = vector.broadcast %77 : vector<1x128xf32> to vector<2x128xf32>
    %79 = arith.addf %76, %78 : vector<2x128xf32>
    %80 = arith.index_cast %c6_i32 : i32 to index
    %c0_59 = arith.constant 0 : index
    %c0_60 = arith.constant 0 : index
    %81 = vector.load %arg18[%80, %c0_59, %c0_60] : memref<8x2x128xf32, #tpu.memory_space<vmem>>, vector<1x2x128xf32>
    %82 = vector.shape_cast %81 : vector<1x2x128xf32> to vector<2x128xf32>
    %83 = vector.shape_cast %79 : vector<2x128xf32> to vector<1x2x128xf32>
    tpu.vector_store %arg18[%80, %c0_59, %c0_60], %83 {strides = array<i32>} : memref<8x2x128xf32, #tpu.memory_space<vmem>>, vector<1x2x128xf32>,
    %c7_i32 = arith.constant 7 : i32
    %84 = arith.index_cast %c7_i32 : i32 to index
    %c0_61 = arith.constant 0 : index
    %c0_62 = arith.constant 0 : index
    %85 = vector.load %arg1[%84, %c0_61, %c0_62] : memref<8x2x16xf32, #tpu.memory_space<vmem>>, vector<1x2x16xf32>
    %86 = vector.shape_cast %85 : vector<1x2x16xf32> to vector<2x16xf32>
    %c0_63 = arith.constant 0 : index
    %c0_64 = arith.constant 0 : index
    %87 = vector.load %arg4[%c0_63, %c0_64] : memref<16x128xf32, #tpu.memory_space<vmem>>, vector<16x128xf32>
    %cst_65 = arith.constant dense<0.000000e+00> : vector<2x128xf32>
    %88 = tpu.matmul %86, %87, %cst_65 {dimension_numbers = #tpu.dot_dimension_numbers<[1], [0], [0], [1], [0, 0, 1, 1], [], []>} : vector<2x16xf32>, vector<16x128xf32>, vector<2x128xf32> -> vector<2x128xf32>
    %c0_66 = arith.constant 0 : index
    %c0_67 = arith.constant 0 : index
    %89 = vector.load %arg6[%c0_66, %c0_67] : memref<1x128xf32, #tpu.memory_space<vmem>>, vector<1x128xf32>
    %90 = vector.broadcast %89 : vector<1x128xf32> to vector<2x128xf32>
    %91 = arith.addf %88, %90 : vector<2x128xf32>
    %92 = arith.index_cast %c7_i32 : i32 to index
    %c0_68 = arith.constant 0 : index
    %c0_69 = arith.constant 0 : index
    %93 = vector.load %arg18[%92, %c0_68, %c0_69] : memref<8x2x128xf32, #tpu.memory_space<vmem>>, vector<1x2x128xf32>
    %94 = vector.shape_cast %93 : vector<1x2x128xf32> to vector<2x128xf32>
    %95 = vector.shape_cast %91 : vector<2x128xf32> to vector<1x2x128xf32>
    tpu.vector_store %arg18[%92, %c0_68, %c0_69], %95 {strides = array<i32>} : memref<8x2x128xf32, #tpu.memory_space<vmem>>, vector<1x2x128xf32>,
    %c8_i32 = arith.constant 8 : i32
    %c0_70 = arith.constant 0 : index
    %c0_71 = arith.constant 0 : index
    %c0_72 = arith.constant 0 : index
    %96 = vector.load %arg2[%c0_70, %c0_71, %c0_72] : memref<2x2x32xf32, #tpu.memory_space<vmem>>, vector<1x2x32xf32>
    %97 = vector.shape_cast %96 : vector<1x2x32xf32> to vector<2x32xf32>
    %c0_73 = arith.constant 0 : index
    %c0_74 = arith.constant 0 : index
    %98 = vector.load %arg19[%c0_73, %c0_74] : memref<2x32xf32, #tpu.memory_space<vmem>>, vector<2x32xf32>
    tpu.vector_store %arg19[%c0_73, %c0_74], %97 {strides = array<i32>} : memref<2x32xf32, #tpu.memory_space<vmem>>, vector<2x32xf32>,
    %c0_75 = arith.constant 0 : index
    %c0_76 = arith.constant 0 : index
    %c0_77 = arith.constant 0 : index
    %99 = vector.load %arg3[%c0_75, %c0_76, %c0_77] : memref<2x2x32xf32, #tpu.memory_space<vmem>>, vector<1x2x32xf32>
    %100 = vector.shape_cast %99 : vector<1x2x32xf32> to vector<2x32xf32>
    %c0_78 = arith.constant 0 : index
    %c0_79 = arith.constant 0 : index
    %101 = vector.load %arg20[%c0_78, %c0_79] : memref<2x32xf32, #tpu.memory_space<vmem>>, vector<2x32xf32>
    tpu.vector_store %arg20[%c0_78, %c0_79], %100 {strides = array<i32>} : memref<2x32xf32, #tpu.memory_space<vmem>>, vector<2x32xf32>,
    %c0_i32_80 = arith.constant 0 : i32
    %102 = arith.index_cast %c0_i32_80 : i32 to index
    %c0_81 = arith.constant 0 : index
    %c0_82 = arith.constant 0 : index
    %103 = vector.load %arg18[%102, %c0_81, %c0_82] : memref<8x2x128xf32, #tpu.memory_space<vmem>>, vector<1x2x128xf32>
    %104 = vector.shape_cast %103 : vector<1x2x128xf32> to vector<2x128xf32>
    %c0_83 = arith.constant 0 : index
    %c0_84 = arith.constant 0 : index
    %105 = vector.load %arg19[%c0_83, %c0_84] : memref<2x32xf32, #tpu.memory_space<vmem>>, vector<2x32xf32>
    %c0_85 = arith.constant 0 : index
    %c0_86 = arith.constant 0 : index
    %106 = vector.load %arg5[%c0_85, %c0_86] : memref<32x128xf32, #tpu.memory_space<vmem>>, vector<32x128xf32>
    %cst_87 = arith.constant dense<0.000000e+00> : vector<2x128xf32>
    %107 = tpu.matmul %105, %106, %cst_87 {dimension_numbers = #tpu.dot_dimension_numbers<[1], [0], [0], [1], [0, 0, 1, 1], [], []>} : vector<2x32xf32>, vector<32x128xf32>, vector<2x128xf32> -> vector<2x128xf32>
    %108 = arith.addf %104, %107 : vector<2x128xf32>
    %109 = vector.extract_strided_slice %108 {offsets = [0, 0], sizes = [2, 96], strides = [1, 1]} : vector<2x128xf32> to vector<2x96xf32>
    %110 = arith.negf %109 : vector<2x96xf32>
    %111 = math.exp %110 : vector<2x96xf32>
    %cst_88 = arith.constant 1.000000e+00 : f32
    %112 = vector.broadcast %cst_88 : f32 to vector<2x96xf32>
    %113 = arith.addf %112, %111 : vector<2x96xf32>
    %114 = arith.divf %112, %113 : vector<2x96xf32>
    %115 = vector.extract_strided_slice %114 {offsets = [0, 0], sizes = [2, 32], strides = [1, 1]} : vector<2x96xf32> to vector<2x32xf32>
    %116 = vector.extract_strided_slice %114 {offsets = [0, 32], sizes = [2, 32], strides = [1, 1]} : vector<2x96xf32> to vector<2x32xf32>
    %117 = vector.extract_strided_slice %114 {offsets = [0, 64], sizes = [2, 32], strides = [1, 1]} : vector<2x96xf32> to vector<2x32xf32>
    %118 = vector.extract_strided_slice %108 {offsets = [0, 96], sizes = [2, 32], strides = [1, 1]} : vector<2x128xf32> to vector<2x32xf32>
    %119 = math.tanh %118 : vector<2x32xf32>
    %c0_89 = arith.constant 0 : index
    %c0_90 = arith.constant 0 : index
    %120 = vector.load %arg20[%c0_89, %c0_90] : memref<2x32xf32, #tpu.memory_space<vmem>>, vector<2x32xf32>
    %121 = arith.mulf %116, %120 : vector<2x32xf32>
    %122 = arith.mulf %115, %119 : vector<2x32xf32>
    %123 = arith.addf %121, %122 : vector<2x32xf32>
    %124 = math.tanh %123 : vector<2x32xf32>
    %125 = arith.mulf %117, %124 : vector<2x32xf32>
    %c0_91 = arith.constant 0 : index
    %c0_92 = arith.constant 0 : index
    %126 = vector.load %arg20[%c0_91, %c0_92] : memref<2x32xf32, #tpu.memory_space<vmem>>, vector<2x32xf32>
    tpu.vector_store %arg20[%c0_91, %c0_92], %123 {strides = array<i32>} : memref<2x32xf32, #tpu.memory_space<vmem>>, vector<2x32xf32>,
    %c0_93 = arith.constant 0 : index
    %c0_94 = arith.constant 0 : index
    %127 = vector.load %arg19[%c0_93, %c0_94] : memref<2x32xf32, #tpu.memory_space<vmem>>, vector<2x32xf32>
    tpu.vector_store %arg19[%c0_93, %c0_94], %125 {strides = array<i32>} : memref<2x32xf32, #tpu.memory_space<vmem>>, vector<2x32xf32>,
    %128 = arith.index_cast %c0_i32_80 : i32 to index
    %c0_95 = arith.constant 0 : index
    %c0_96 = arith.constant 0 : index
    %129 = vector.load %arg17[%128, %c0_95, %c0_96] : memref<8x2x32xf32, #tpu.memory_space<vmem>>, vector<1x2x32xf32>
    %130 = vector.shape_cast %129 : vector<1x2x32xf32> to vector<2x32xf32>
    %131 = vector.shape_cast %125 : vector<2x32xf32> to vector<1x2x32xf32>
    tpu.vector_store %arg17[%128, %c0_95, %c0_96], %131 {strides = array<i32>} : memref<8x2x32xf32, #tpu.memory_space<vmem>>, vector<1x2x32xf32>,
    %c1_i32_97 = arith.constant 1 : i32
    %132 = arith.index_cast %c1_i32_97 : i32 to index
    %c0_98 = arith.constant 0 : index
    %c0_99 = arith.constant 0 : index
    %133 = vector.load %arg18[%132, %c0_98, %c0_99] : memref<8x2x128xf32, #tpu.memory_space<vmem>>, vector<1x2x128xf32>
    %134 = vector.shape_cast %133 : vector<1x2x128xf32> to vector<2x128xf32>
    %c0_100 = arith.constant 0 : index
    %c0_101 = arith.constant 0 : index
    %135 = vector.load %arg19[%c0_100, %c0_101] : memref<2x32xf32, #tpu.memory_space<vmem>>, vector<2x32xf32>
    %c0_102 = arith.constant 0 : index
    %c0_103 = arith.constant 0 : index
    %136 = vector.load %arg5[%c0_102, %c0_103] : memref<32x128xf32, #tpu.memory_space<vmem>>, vector<32x128xf32>
    %cst_104 = arith.constant dense<0.000000e+00> : vector<2x128xf32>
    %137 = tpu.matmul %135, %136, %cst_104 {dimension_numbers = #tpu.dot_dimension_numbers<[1], [0], [0], [1], [0, 0, 1, 1], [], []>} : vector<2x32xf32>, vector<32x128xf32>, vector<2x128xf32> -> vector<2x128xf32>
    %138 = arith.addf %134, %137 : vector<2x128xf32>
    %139 = vector.extract_strided_slice %138 {offsets = [0, 0], sizes = [2, 96], strides = [1, 1]} : vector<2x128xf32> to vector<2x96xf32>
    %140 = arith.negf %139 : vector<2x96xf32>
    %141 = math.exp %140 : vector<2x96xf32>
    %cst_105 = arith.constant 1.000000e+00 : f32
    %142 = vector.broadcast %cst_105 : f32 to vector<2x96xf32>
    %143 = arith.addf %142, %141 : vector<2x96xf32>
    %144 = arith.divf %142, %143 : vector<2x96xf32>
    %145 = vector.extract_strided_slice %144 {offsets = [0, 0], sizes = [2, 32], strides = [1, 1]} : vector<2x96xf32> to vector<2x32xf32>
    %146 = vector.extract_strided_slice %144 {offsets = [0, 32], sizes = [2, 32], strides = [1, 1]} : vector<2x96xf32> to vector<2x32xf32>
    %147 = vector.extract_strided_slice %144 {offsets = [0, 64], sizes = [2, 32], strides = [1, 1]} : vector<2x96xf32> to vector<2x32xf32>
    %148 = vector.extract_strided_slice %138 {offsets = [0, 96], sizes = [2, 32], strides = [1, 1]} : vector<2x128xf32> to vector<2x32xf32>
    %149 = math.tanh %148 : vector<2x32xf32>
    %c0_106 = arith.constant 0 : index
    %c0_107 = arith.constant 0 : index
    %150 = vector.load %arg20[%c0_106, %c0_107] : memref<2x32xf32, #tpu.memory_space<vmem>>, vector<2x32xf32>
    %151 = arith.mulf %146, %150 : vector<2x32xf32>
    %152 = arith.mulf %145, %149 : vector<2x32xf32>
    %153 = arith.addf %151, %152 : vector<2x32xf32>
    %154 = math.tanh %153 : vector<2x32xf32>
    %155 = arith.mulf %147, %154 : vector<2x32xf32>
    %c0_108 = arith.constant 0 : index
    %c0_109 = arith.constant 0 : index
    %156 = vector.load %arg20[%c0_108, %c0_109] : memref<2x32xf32, #tpu.memory_space<vmem>>, vector<2x32xf32>
    tpu.vector_store %arg20[%c0_108, %c0_109], %153 {strides = array<i32>} : memref<2x32xf32, #tpu.memory_space<vmem>>, vector<2x32xf32>,
    %c0_110 = arith.constant 0 : index
    %c0_111 = arith.constant 0 : index
    %157 = vector.load %arg19[%c0_110, %c0_111] : memref<2x32xf32, #tpu.memory_space<vmem>>, vector<2x32xf32>
    tpu.vector_store %arg19[%c0_110, %c0_111], %155 {strides = array<i32>} : memref<2x32xf32, #tpu.memory_space<vmem>>, vector<2x32xf32>,
    %158 = arith.index_cast %c1_i32_97 : i32 to index
    %c0_112 = arith.constant 0 : index
    %c0_113 = arith.constant 0 : index
    %159 = vector.load %arg17[%158, %c0_112, %c0_113] : memref<8x2x32xf32, #tpu.memory_space<vmem>>, vector<1x2x32xf32>
    %160 = vector.shape_cast %159 : vector<1x2x32xf32> to vector<2x32xf32>
    %161 = vector.shape_cast %155 : vector<2x32xf32> to vector<1x2x32xf32>
    tpu.vector_store %arg17[%158, %c0_112, %c0_113], %161 {strides = array<i32>} : memref<8x2x32xf32, #tpu.memory_space<vmem>>, vector<1x2x32xf32>,
    %c2_i32_114 = arith.constant 2 : i32
    %162 = arith.index_cast %c2_i32_114 : i32 to index
    %c0_115 = arith.constant 0 : index
    %c0_116 = arith.constant 0 : index
    %163 = vector.load %arg18[%162, %c0_115, %c0_116] : memref<8x2x128xf32, #tpu.memory_space<vmem>>, vector<1x2x128xf32>
    %164 = vector.shape_cast %163 : vector<1x2x128xf32> to vector<2x128xf32>
    %c0_117 = arith.constant 0 : index
    %c0_118 = arith.constant 0 : index
    %165 = vector.load %arg19[%c0_117, %c0_118] : memref<2x32xf32, #tpu.memory_space<vmem>>, vector<2x32xf32>
    %c0_119 = arith.constant 0 : index
    %c0_120 = arith.constant 0 : index
    %166 = vector.load %arg5[%c0_119, %c0_120] : memref<32x128xf32, #tpu.memory_space<vmem>>, vector<32x128xf32>
    %cst_121 = arith.constant dense<0.000000e+00> : vector<2x128xf32>
    %167 = tpu.matmul %165, %166, %cst_121 {dimension_numbers = #tpu.dot_dimension_numbers<[1], [0], [0], [1], [0, 0, 1, 1], [], []>} : vector<2x32xf32>, vector<32x128xf32>, vector<2x128xf32> -> vector<2x128xf32>
    %168 = arith.addf %164, %167 : vector<2x128xf32>
    %169 = vector.extract_strided_slice %168 {offsets = [0, 0], sizes = [2, 96], strides = [1, 1]} : vector<2x128xf32> to vector<2x96xf32>
    %170 = arith.negf %169 : vector<2x96xf32>
    %171 = math.exp %170 : vector<2x96xf32>
    %cst_122 = arith.constant 1.000000e+00 : f32
    %172 = vector.broadcast %cst_122 : f32 to vector<2x96xf32>
    %173 = arith.addf %172, %171 : vector<2x96xf32>
    %174 = arith.divf %172, %173 : vector<2x96xf32>
    %175 = vector.extract_strided_slice %174 {offsets = [0, 0], sizes = [2, 32], strides = [1, 1]} : vector<2x96xf32> to vector<2x32xf32>
    %176 = vector.extract_strided_slice %174 {offsets = [0, 32], sizes = [2, 32], strides = [1, 1]} : vector<2x96xf32> to vector<2x32xf32>
    %177 = vector.extract_strided_slice %174 {offsets = [0, 64], sizes = [2, 32], strides = [1, 1]} : vector<2x96xf32> to vector<2x32xf32>
    %178 = vector.extract_strided_slice %168 {offsets = [0, 96], sizes = [2, 32], strides = [1, 1]} : vector<2x128xf32> to vector<2x32xf32>
    %179 = math.tanh %178 : vector<2x32xf32>
    %c0_123 = arith.constant 0 : index
    %c0_124 = arith.constant 0 : index
    %180 = vector.load %arg20[%c0_123, %c0_124] : memref<2x32xf32, #tpu.memory_space<vmem>>, vector<2x32xf32>
    %181 = arith.mulf %176, %180 : vector<2x32xf32>
    %182 = arith.mulf %175, %179 : vector<2x32xf32>
    %183 = arith.addf %181, %182 : vector<2x32xf32>
    %184 = math.tanh %183 : vector<2x32xf32>
    %185 = arith.mulf %177, %184 : vector<2x32xf32>
    %c0_125 = arith.constant 0 : index
    %c0_126 = arith.constant 0 : index
    %186 = vector.load %arg20[%c0_125, %c0_126] : memref<2x32xf32, #tpu.memory_space<vmem>>, vector<2x32xf32>
    tpu.vector_store %arg20[%c0_125, %c0_126], %183 {strides = array<i32>} : memref<2x32xf32, #tpu.memory_space<vmem>>, vector<2x32xf32>,
    %c0_127 = arith.constant 0 : index
    %c0_128 = arith.constant 0 : index
    %187 = vector.load %arg19[%c0_127, %c0_128] : memref<2x32xf32, #tpu.memory_space<vmem>>, vector<2x32xf32>
    tpu.vector_store %arg19[%c0_127, %c0_128], %185 {strides = array<i32>} : memref<2x32xf32, #tpu.memory_space<vmem>>, vector<2x32xf32>,
    %188 = arith.index_cast %c2_i32_114 : i32 to index
    %c0_129 = arith.constant 0 : index
    %c0_130 = arith.constant 0 : index
    %189 = vector.load %arg17[%188, %c0_129, %c0_130] : memref<8x2x32xf32, #tpu.memory_space<vmem>>, vector<1x2x32xf32>
    %190 = vector.shape_cast %189 : vector<1x2x32xf32> to vector<2x32xf32>
    %191 = vector.shape_cast %185 : vector<2x32xf32> to vector<1x2x32xf32>
    tpu.vector_store %arg17[%188, %c0_129, %c0_130], %191 {strides = array<i32>} : memref<8x2x32xf32, #tpu.memory_space<vmem>>, vector<1x2x32xf32>,
    %c3_i32_131 = arith.constant 3 : i32
    %192 = arith.index_cast %c3_i32_131 : i32 to index
    %c0_132 = arith.constant 0 : index
    %c0_133 = arith.constant 0 : index
    %193 = vector.load %arg18[%192, %c0_132, %c0_133] : memref<8x2x128xf32, #tpu.memory_space<vmem>>, vector<1x2x128xf32>
    %194 = vector.shape_cast %193 : vector<1x2x128xf32> to vector<2x128xf32>
    %c0_134 = arith.constant 0 : index
    %c0_135 = arith.constant 0 : index
    %195 = vector.load %arg19[%c0_134, %c0_135] : memref<2x32xf32, #tpu.memory_space<vmem>>, vector<2x32xf32>
    %c0_136 = arith.constant 0 : index
    %c0_137 = arith.constant 0 : index
    %196 = vector.load %arg5[%c0_136, %c0_137] : memref<32x128xf32, #tpu.memory_space<vmem>>, vector<32x128xf32>
    %cst_138 = arith.constant dense<0.000000e+00> : vector<2x128xf32>
    %197 = tpu.matmul %195, %196, %cst_138 {dimension_numbers = #tpu.dot_dimension_numbers<[1], [0], [0], [1], [0, 0, 1, 1], [], []>} : vector<2x32xf32>, vector<32x128xf32>, vector<2x128xf32> -> vector<2x128xf32>
    %198 = arith.addf %194, %197 : vector<2x128xf32>
    %199 = vector.extract_strided_slice %198 {offsets = [0, 0], sizes = [2, 96], strides = [1, 1]} : vector<2x128xf32> to vector<2x96xf32>
    %200 = arith.negf %199 : vector<2x96xf32>
    %201 = math.exp %200 : vector<2x96xf32>
    %cst_139 = arith.constant 1.000000e+00 : f32
    %202 = vector.broadcast %cst_139 : f32 to vector<2x96xf32>
    %203 = arith.addf %202, %201 : vector<2x96xf32>
    %204 = arith.divf %202, %203 : vector<2x96xf32>
    %205 = vector.extract_strided_slice %204 {offsets = [0, 0], sizes = [2, 32], strides = [1, 1]} : vector<2x96xf32> to vector<2x32xf32>
    %206 = vector.extract_strided_slice %204 {offsets = [0, 32], sizes = [2, 32], strides = [1, 1]} : vector<2x96xf32> to vector<2x32xf32>
    %207 = vector.extract_strided_slice %204 {offsets = [0, 64], sizes = [2, 32], strides = [1, 1]} : vector<2x96xf32> to vector<2x32xf32>
    %208 = vector.extract_strided_slice %198 {offsets = [0, 96], sizes = [2, 32], strides = [1, 1]} : vector<2x128xf32> to vector<2x32xf32>
    %209 = math.tanh %208 : vector<2x32xf32>
    %c0_140 = arith.constant 0 : index
    %c0_141 = arith.constant 0 : index
    %210 = vector.load %arg20[%c0_140, %c0_141] : memref<2x32xf32, #tpu.memory_space<vmem>>, vector<2x32xf32>
    %211 = arith.mulf %206, %210 : vector<2x32xf32>
    %212 = arith.mulf %205, %209 : vector<2x32xf32>
    %213 = arith.addf %211, %212 : vector<2x32xf32>
    %214 = math.tanh %213 : vector<2x32xf32>
    %215 = arith.mulf %207, %214 : vector<2x32xf32>
    %c0_142 = arith.constant 0 : index
    %c0_143 = arith.constant 0 : index
    %216 = vector.load %arg20[%c0_142, %c0_143] : memref<2x32xf32, #tpu.memory_space<vmem>>, vector<2x32xf32>
    tpu.vector_store %arg20[%c0_142, %c0_143], %213 {strides = array<i32>} : memref<2x32xf32, #tpu.memory_space<vmem>>, vector<2x32xf32>,
    %c0_144 = arith.constant 0 : index
    %c0_145 = arith.constant 0 : index
    %217 = vector.load %arg19[%c0_144, %c0_145] : memref<2x32xf32, #tpu.memory_space<vmem>>, vector<2x32xf32>
    tpu.vector_store %arg19[%c0_144, %c0_145], %215 {strides = array<i32>} : memref<2x32xf32, #tpu.memory_space<vmem>>, vector<2x32xf32>,
    %218 = arith.index_cast %c3_i32_131 : i32 to index
    %c0_146 = arith.constant 0 : index
    %c0_147 = arith.constant 0 : index
    %219 = vector.load %arg17[%218, %c0_146, %c0_147] : memref<8x2x32xf32, #tpu.memory_space<vmem>>, vector<1x2x32xf32>
    %220 = vector.shape_cast %219 : vector<1x2x32xf32> to vector<2x32xf32>
    %221 = vector.shape_cast %215 : vector<2x32xf32> to vector<1x2x32xf32>
    tpu.vector_store %arg17[%218, %c0_146, %c0_147], %221 {strides = array<i32>} : memref<8x2x32xf32, #tpu.memory_space<vmem>>, vector<1x2x32xf32>,
    %c4_i32_148 = arith.constant 4 : i32
    %222 = arith.index_cast %c4_i32_148 : i32 to index
    %c0_149 = arith.constant 0 : index
    %c0_150 = arith.constant 0 : index
    %223 = vector.load %arg18[%222, %c0_149, %c0_150] : memref<8x2x128xf32, #tpu.memory_space<vmem>>, vector<1x2x128xf32>
    %224 = vector.shape_cast %223 : vector<1x2x128xf32> to vector<2x128xf32>
    %c0_151 = arith.constant 0 : index
    %c0_152 = arith.constant 0 : index
    %225 = vector.load %arg19[%c0_151, %c0_152] : memref<2x32xf32, #tpu.memory_space<vmem>>, vector<2x32xf32>
    %c0_153 = arith.constant 0 : index
    %c0_154 = arith.constant 0 : index
    %226 = vector.load %arg5[%c0_153, %c0_154] : memref<32x128xf32, #tpu.memory_space<vmem>>, vector<32x128xf32>
    %cst_155 = arith.constant dense<0.000000e+00> : vector<2x128xf32>
    %227 = tpu.matmul %225, %226, %cst_155 {dimension_numbers = #tpu.dot_dimension_numbers<[1], [0], [0], [1], [0, 0, 1, 1], [], []>} : vector<2x32xf32>, vector<32x128xf32>, vector<2x128xf32> -> vector<2x128xf32>
    %228 = arith.addf %224, %227 : vector<2x128xf32>
    %229 = vector.extract_strided_slice %228 {offsets = [0, 0], sizes = [2, 96], strides = [1, 1]} : vector<2x128xf32> to vector<2x96xf32>
    %230 = arith.negf %229 : vector<2x96xf32>
    %231 = math.exp %230 : vector<2x96xf32>
    %cst_156 = arith.constant 1.000000e+00 : f32
    %232 = vector.broadcast %cst_156 : f32 to vector<2x96xf32>
    %233 = arith.addf %232, %231 : vector<2x96xf32>
    %234 = arith.divf %232, %233 : vector<2x96xf32>
    %235 = vector.extract_strided_slice %234 {offsets = [0, 0], sizes = [2, 32], strides = [1, 1]} : vector<2x96xf32> to vector<2x32xf32>
    %236 = vector.extract_strided_slice %234 {offsets = [0, 32], sizes = [2, 32], strides = [1, 1]} : vector<2x96xf32> to vector<2x32xf32>
    %237 = vector.extract_strided_slice %234 {offsets = [0, 64], sizes = [2, 32], strides = [1, 1]} : vector<2x96xf32> to vector<2x32xf32>
    %238 = vector.extract_strided_slice %228 {offsets = [0, 96], sizes = [2, 32], strides = [1, 1]} : vector<2x128xf32> to vector<2x32xf32>
    %239 = math.tanh %238 : vector<2x32xf32>
    %c0_157 = arith.constant 0 : index
    %c0_158 = arith.constant 0 : index
    %240 = vector.load %arg20[%c0_157, %c0_158] : memref<2x32xf32, #tpu.memory_space<vmem>>, vector<2x32xf32>
    %241 = arith.mulf %236, %240 : vector<2x32xf32>
    %242 = arith.mulf %235, %239 : vector<2x32xf32>
    %243 = arith.addf %241, %242 : vector<2x32xf32>
    %244 = math.tanh %243 : vector<2x32xf32>
    %245 = arith.mulf %237, %244 : vector<2x32xf32>
    %c0_159 = arith.constant 0 : index
    %c0_160 = arith.constant 0 : index
    %246 = vector.load %arg20[%c0_159, %c0_160] : memref<2x32xf32, #tpu.memory_space<vmem>>, vector<2x32xf32>
    tpu.vector_store %arg20[%c0_159, %c0_160], %243 {strides = array<i32>} : memref<2x32xf32, #tpu.memory_space<vmem>>, vector<2x32xf32>,
    %c0_161 = arith.constant 0 : index
    %c0_162 = arith.constant 0 : index
    %247 = vector.load %arg19[%c0_161, %c0_162] : memref<2x32xf32, #tpu.memory_space<vmem>>, vector<2x32xf32>
    tpu.vector_store %arg19[%c0_161, %c0_162], %245 {strides = array<i32>} : memref<2x32xf32, #tpu.memory_space<vmem>>, vector<2x32xf32>,
    %248 = arith.index_cast %c4_i32_148 : i32 to index
    %c0_163 = arith.constant 0 : index
    %c0_164 = arith.constant 0 : index
    %249 = vector.load %arg17[%248, %c0_163, %c0_164] : memref<8x2x32xf32, #tpu.memory_space<vmem>>, vector<1x2x32xf32>
    %250 = vector.shape_cast %249 : vector<1x2x32xf32> to vector<2x32xf32>
    %251 = vector.shape_cast %245 : vector<2x32xf32> to vector<1x2x32xf32>
    tpu.vector_store %arg17[%248, %c0_163, %c0_164], %251 {strides = array<i32>} : memref<8x2x32xf32, #tpu.memory_space<vmem>>, vector<1x2x32xf32>,
    %c5_i32_165 = arith.constant 5 : i32
    %252 = arith.index_cast %c5_i32_165 : i32 to index
    %c0_166 = arith.constant 0 : index
    %c0_167 = arith.constant 0 : index
    %253 = vector.load %arg18[%252, %c0_166, %c0_167] : memref<8x2x128xf32, #tpu.memory_space<vmem>>, vector<1x2x128xf32>
    %254 = vector.shape_cast %253 : vector<1x2x128xf32> to vector<2x128xf32>
    %c0_168 = arith.constant 0 : index
    %c0_169 = arith.constant 0 : index
    %255 = vector.load %arg19[%c0_168, %c0_169] : memref<2x32xf32, #tpu.memory_space<vmem>>, vector<2x32xf32>
    %c0_170 = arith.constant 0 : index
    %c0_171 = arith.constant 0 : index
    %256 = vector.load %arg5[%c0_170, %c0_171] : memref<32x128xf32, #tpu.memory_space<vmem>>, vector<32x128xf32>
    %cst_172 = arith.constant dense<0.000000e+00> : vector<2x128xf32>
    %257 = tpu.matmul %255, %256, %cst_172 {dimension_numbers = #tpu.dot_dimension_numbers<[1], [0], [0], [1], [0, 0, 1, 1], [], []>} : vector<2x32xf32>, vector<32x128xf32>, vector<2x128xf32> -> vector<2x128xf32>
    %258 = arith.addf %254, %257 : vector<2x128xf32>
    %259 = vector.extract_strided_slice %258 {offsets = [0, 0], sizes = [2, 96], strides = [1, 1]} : vector<2x128xf32> to vector<2x96xf32>
    %260 = arith.negf %259 : vector<2x96xf32>
    %261 = math.exp %260 : vector<2x96xf32>
    %cst_173 = arith.constant 1.000000e+00 : f32
    %262 = vector.broadcast %cst_173 : f32 to vector<2x96xf32>
    %263 = arith.addf %262, %261 : vector<2x96xf32>
    %264 = arith.divf %262, %263 : vector<2x96xf32>
    %265 = vector.extract_strided_slice %264 {offsets = [0, 0], sizes = [2, 32], strides = [1, 1]} : vector<2x96xf32> to vector<2x32xf32>
    %266 = vector.extract_strided_slice %264 {offsets = [0, 32], sizes = [2, 32], strides = [1, 1]} : vector<2x96xf32> to vector<2x32xf32>
    %267 = vector.extract_strided_slice %264 {offsets = [0, 64], sizes = [2, 32], strides = [1, 1]} : vector<2x96xf32> to vector<2x32xf32>
    %268 = vector.extract_strided_slice %258 {offsets = [0, 96], sizes = [2, 32], strides = [1, 1]} : vector<2x128xf32> to vector<2x32xf32>
    %269 = math.tanh %268 : vector<2x32xf32>
    %c0_174 = arith.constant 0 : index
    %c0_175 = arith.constant 0 : index
    %270 = vector.load %arg20[%c0_174, %c0_175] : memref<2x32xf32, #tpu.memory_space<vmem>>, vector<2x32xf32>
    %271 = arith.mulf %266, %270 : vector<2x32xf32>
    %272 = arith.mulf %265, %269 : vector<2x32xf32>
    %273 = arith.addf %271, %272 : vector<2x32xf32>
    %274 = math.tanh %273 : vector<2x32xf32>
    %275 = arith.mulf %267, %274 : vector<2x32xf32>
    %c0_176 = arith.constant 0 : index
    %c0_177 = arith.constant 0 : index
    %276 = vector.load %arg20[%c0_176, %c0_177] : memref<2x32xf32, #tpu.memory_space<vmem>>, vector<2x32xf32>
    tpu.vector_store %arg20[%c0_176, %c0_177], %273 {strides = array<i32>} : memref<2x32xf32, #tpu.memory_space<vmem>>, vector<2x32xf32>,
    %c0_178 = arith.constant 0 : index
    %c0_179 = arith.constant 0 : index
    %277 = vector.load %arg19[%c0_178, %c0_179] : memref<2x32xf32, #tpu.memory_space<vmem>>, vector<2x32xf32>
    tpu.vector_store %arg19[%c0_178, %c0_179], %275 {strides = array<i32>} : memref<2x32xf32, #tpu.memory_space<vmem>>, vector<2x32xf32>,
    %278 = arith.index_cast %c5_i32_165 : i32 to index
    %c0_180 = arith.constant 0 : index
    %c0_181 = arith.constant 0 : index
    %279 = vector.load %arg17[%278, %c0_180, %c0_181] : memref<8x2x32xf32, #tpu.memory_space<vmem>>, vector<1x2x32xf32>
    %280 = vector.shape_cast %279 : vector<1x2x32xf32> to vector<2x32xf32>
    %281 = vector.shape_cast %275 : vector<2x32xf32> to vector<1x2x32xf32>
    tpu.vector_store %arg17[%278, %c0_180, %c0_181], %281 {strides = array<i32>} : memref<8x2x32xf32, #tpu.memory_space<vmem>>, vector<1x2x32xf32>,
    %c6_i32_182 = arith.constant 6 : i32
    %282 = arith.index_cast %c6_i32_182 : i32 to index
    %c0_183 = arith.constant 0 : index
    %c0_184 = arith.constant 0 : index
    %283 = vector.load %arg18[%282, %c0_183, %c0_184] : memref<8x2x128xf32, #tpu.memory_space<vmem>>, vector<1x2x128xf32>
    %284 = vector.shape_cast %283 : vector<1x2x128xf32> to vector<2x128xf32>
    %c0_185 = arith.constant 0 : index
    %c0_186 = arith.constant 0 : index
    %285 = vector.load %arg19[%c0_185, %c0_186] : memref<2x32xf32, #tpu.memory_space<vmem>>, vector<2x32xf32>
    %c0_187 = arith.constant 0 : index
    %c0_188 = arith.constant 0 : index
    %286 = vector.load %arg5[%c0_187, %c0_188] : memref<32x128xf32, #tpu.memory_space<vmem>>, vector<32x128xf32>
    %cst_189 = arith.constant dense<0.000000e+00> : vector<2x128xf32>
    %287 = tpu.matmul %285, %286, %cst_189 {dimension_numbers = #tpu.dot_dimension_numbers<[1], [0], [0], [1], [0, 0, 1, 1], [], []>} : vector<2x32xf32>, vector<32x128xf32>, vector<2x128xf32> -> vector<2x128xf32>
    %288 = arith.addf %284, %287 : vector<2x128xf32>
    %289 = vector.extract_strided_slice %288 {offsets = [0, 0], sizes = [2, 96], strides = [1, 1]} : vector<2x128xf32> to vector<2x96xf32>
    %290 = arith.negf %289 : vector<2x96xf32>
    %291 = math.exp %290 : vector<2x96xf32>
    %cst_190 = arith.constant 1.000000e+00 : f32
    %292 = vector.broadcast %cst_190 : f32 to vector<2x96xf32>
    %293 = arith.addf %292, %291 : vector<2x96xf32>
    %294 = arith.divf %292, %293 : vector<2x96xf32>
    %295 = vector.extract_strided_slice %294 {offsets = [0, 0], sizes = [2, 32], strides = [1, 1]} : vector<2x96xf32> to vector<2x32xf32>
    %296 = vector.extract_strided_slice %294 {offsets = [0, 32], sizes = [2, 32], strides = [1, 1]} : vector<2x96xf32> to vector<2x32xf32>
    %297 = vector.extract_strided_slice %294 {offsets = [0, 64], sizes = [2, 32], strides = [1, 1]} : vector<2x96xf32> to vector<2x32xf32>
    %298 = vector.extract_strided_slice %288 {offsets = [0, 96], sizes = [2, 32], strides = [1, 1]} : vector<2x128xf32> to vector<2x32xf32>
    %299 = math.tanh %298 : vector<2x32xf32>
    %c0_191 = arith.constant 0 : index
    %c0_192 = arith.constant 0 : index
    %300 = vector.load %arg20[%c0_191, %c0_192] : memref<2x32xf32, #tpu.memory_space<vmem>>, vector<2x32xf32>
    %301 = arith.mulf %296, %300 : vector<2x32xf32>
    %302 = arith.mulf %295, %299 : vector<2x32xf32>
    %303 = arith.addf %301, %302 : vector<2x32xf32>
    %304 = math.tanh %303 : vector<2x32xf32>
    %305 = arith.mulf %297, %304 : vector<2x32xf32>
    %c0_193 = arith.constant 0 : index
    %c0_194 = arith.constant 0 : index
    %306 = vector.load %arg20[%c0_193, %c0_194] : memref<2x32xf32, #tpu.memory_space<vmem>>, vector<2x32xf32>
    tpu.vector_store %arg20[%c0_193, %c0_194], %303 {strides = array<i32>} : memref<2x32xf32, #tpu.memory_space<vmem>>, vector<2x32xf32>,
    %c0_195 = arith.constant 0 : index
    %c0_196 = arith.constant 0 : index
    %307 = vector.load %arg19[%c0_195, %c0_196] : memref<2x32xf32, #tpu.memory_space<vmem>>, vector<2x32xf32>
    tpu.vector_store %arg19[%c0_195, %c0_196], %305 {strides = array<i32>} : memref<2x32xf32, #tpu.memory_space<vmem>>, vector<2x32xf32>,
    %308 = arith.index_cast %c6_i32_182 : i32 to index
    %c0_197 = arith.constant 0 : index
    %c0_198 = arith.constant 0 : index
    %309 = vector.load %arg17[%308, %c0_197, %c0_198] : memref<8x2x32xf32, #tpu.memory_space<vmem>>, vector<1x2x32xf32>
    %310 = vector.shape_cast %309 : vector<1x2x32xf32> to vector<2x32xf32>
    %311 = vector.shape_cast %305 : vector<2x32xf32> to vector<1x2x32xf32>
    tpu.vector_store %arg17[%308, %c0_197, %c0_198], %311 {strides = array<i32>} : memref<8x2x32xf32, #tpu.memory_space<vmem>>, vector<1x2x32xf32>,
    %c7_i32_199 = arith.constant 7 : i32
    %312 = arith.index_cast %c7_i32_199 : i32 to index
    %c0_200 = arith.constant 0 : index
    %c0_201 = arith.constant 0 : index
    %313 = vector.load %arg18[%312, %c0_200, %c0_201] : memref<8x2x128xf32, #tpu.memory_space<vmem>>, vector<1x2x128xf32>
    %314 = vector.shape_cast %313 : vector<1x2x128xf32> to vector<2x128xf32>
    %c0_202 = arith.constant 0 : index
    %c0_203 = arith.constant 0 : index
    %315 = vector.load %arg19[%c0_202, %c0_203] : memref<2x32xf32, #tpu.memory_space<vmem>>, vector<2x32xf32>
    %c0_204 = arith.constant 0 : index
    %c0_205 = arith.constant 0 : index
    %316 = vector.load %arg5[%c0_204, %c0_205] : memref<32x128xf32, #tpu.memory_space<vmem>>, vector<32x128xf32>
    %cst_206 = arith.constant dense<0.000000e+00> : vector<2x128xf32>
    %317 = tpu.matmul %315, %316, %cst_206 {dimension_numbers = #tpu.dot_dimension_numbers<[1], [0], [0], [1], [0, 0, 1, 1], [], []>} : vector<2x32xf32>, vector<32x128xf32>, vector<2x128xf32> -> vector<2x128xf32>
    %318 = arith.addf %314, %317 : vector<2x128xf32>
    %319 = vector.extract_strided_slice %318 {offsets = [0, 0], sizes = [2, 96], strides = [1, 1]} : vector<2x128xf32> to vector<2x96xf32>
    %320 = arith.negf %319 : vector<2x96xf32>
    %321 = math.exp %320 : vector<2x96xf32>
    %cst_207 = arith.constant 1.000000e+00 : f32
    %322 = vector.broadcast %cst_207 : f32 to vector<2x96xf32>
    %323 = arith.addf %322, %321 : vector<2x96xf32>
    %324 = arith.divf %322, %323 : vector<2x96xf32>
    %325 = vector.extract_strided_slice %324 {offsets = [0, 0], sizes = [2, 32], strides = [1, 1]} : vector<2x96xf32> to vector<2x32xf32>
    %326 = vector.extract_strided_slice %324 {offsets = [0, 32], sizes = [2, 32], strides = [1, 1]} : vector<2x96xf32> to vector<2x32xf32>
    %327 = vector.extract_strided_slice %324 {offsets = [0, 64], sizes = [2, 32], strides = [1, 1]} : vector<2x96xf32> to vector<2x32xf32>
    %328 = vector.extract_strided_slice %318 {offsets = [0, 96], sizes = [2, 32], strides = [1, 1]} : vector<2x128xf32> to vector<2x32xf32>
    %329 = math.tanh %328 : vector<2x32xf32>
    %c0_208 = arith.constant 0 : index
    %c0_209 = arith.constant 0 : index
    %330 = vector.load %arg20[%c0_208, %c0_209] : memref<2x32xf32, #tpu.memory_space<vmem>>, vector<2x32xf32>
    %331 = arith.mulf %326, %330 : vector<2x32xf32>
    %332 = arith.mulf %325, %329 : vector<2x32xf32>
    %333 = arith.addf %331, %332 : vector<2x32xf32>
    %334 = math.tanh %333 : vector<2x32xf32>
    %335 = arith.mulf %327, %334 : vector<2x32xf32>
    %c0_210 = arith.constant 0 : index
    %c0_211 = arith.constant 0 : index
    %336 = vector.load %arg20[%c0_210, %c0_211] : memref<2x32xf32, #tpu.memory_space<vmem>>, vector<2x32xf32>
    tpu.vector_store %arg20[%c0_210, %c0_211], %333 {strides = array<i32>} : memref<2x32xf32, #tpu.memory_space<vmem>>, vector<2x32xf32>,
    %c0_212 = arith.constant 0 : index
    %c0_213 = arith.constant 0 : index
    %337 = vector.load %arg19[%c0_212, %c0_213] : memref<2x32xf32, #tpu.memory_space<vmem>>, vector<2x32xf32>
    tpu.vector_store %arg19[%c0_212, %c0_213], %335 {strides = array<i32>} : memref<2x32xf32, #tpu.memory_space<vmem>>, vector<2x32xf32>,
    %338 = arith.index_cast %c7_i32_199 : i32 to index
    %c0_214 = arith.constant 0 : index
    %c0_215 = arith.constant 0 : index
    %339 = vector.load %arg17[%338, %c0_214, %c0_215] : memref<8x2x32xf32, #tpu.memory_space<vmem>>, vector<1x2x32xf32>
    %340 = vector.shape_cast %339 : vector<1x2x32xf32> to vector<2x32xf32>
    %341 = vector.shape_cast %335 : vector<2x32xf32> to vector<1x2x32xf32>
    tpu.vector_store %arg17[%338, %c0_214, %c0_215], %341 {strides = array<i32>} : memref<8x2x32xf32, #tpu.memory_space<vmem>>, vector<1x2x32xf32>,
    %c8_i32_216 = arith.constant 8 : i32
    %c0_217 = arith.constant 0 : index
    %c0_218 = arith.constant 0 : index
    %342 = vector.load %arg19[%c0_217, %c0_218] : memref<2x32xf32, #tpu.memory_space<vmem>>, vector<2x32xf32>
    %c0_219 = arith.constant 0 : index
    %c0_220 = arith.constant 0 : index
    %c0_221 = arith.constant 0 : index
    %343 = vector.load %arg15[%c0_219, %c0_220, %c0_221] : memref<2x2x32xf32, #tpu.memory_space<vmem>>, vector<1x2x32xf32>
    %344 = vector.shape_cast %343 : vector<1x2x32xf32> to vector<2x32xf32>
    %345 = vector.shape_cast %342 : vector<2x32xf32> to vector<1x2x32xf32>
    tpu.vector_store %arg15[%c0_219, %c0_220, %c0_221], %345 {strides = array<i32>} : memref<2x2x32xf32, #tpu.memory_space<vmem>>, vector<1x2x32xf32>,
    %c0_222 = arith.constant 0 : index
    %c0_223 = arith.constant 0 : index
    %346 = vector.load %arg20[%c0_222, %c0_223] : memref<2x32xf32, #tpu.memory_space<vmem>>, vector<2x32xf32>
    %c0_224 = arith.constant 0 : index
    %c0_225 = arith.constant 0 : index
    %c0_226 = arith.constant 0 : index
    %347 = vector.load %arg16[%c0_224, %c0_225, %c0_226] : memref<2x2x32xf32, #tpu.memory_space<vmem>>, vector<1x2x32xf32>
    %348 = vector.shape_cast %347 : vector<1x2x32xf32> to vector<2x32xf32>
    %349 = vector.shape_cast %346 : vector<2x32xf32> to vector<1x2x32xf32>
    tpu.vector_store %arg16[%c0_224, %c0_225, %c0_226], %349 {strides = array<i32>} : memref<2x2x32xf32, #tpu.memory_space<vmem>>, vector<1x2x32xf32>,
    %c0_i32_227 = arith.constant 0 : i32
    %350 = arith.index_cast %c0_i32_227 : i32 to index
    %c0_228 = arith.constant 0 : index
    %c0_229 = arith.constant 0 : index
    %351 = vector.load %arg17[%350, %c0_228, %c0_229] : memref<8x2x32xf32, #tpu.memory_space<vmem>>, vector<1x2x32xf32>
    %352 = vector.shape_cast %351 : vector<1x2x32xf32> to vector<2x32xf32>
    %c0_230 = arith.constant 0 : index
    %c0_231 = arith.constant 0 : index
    %353 = vector.load %arg7[%c0_230, %c0_231] : memref<32x128xf32, #tpu.memory_space<vmem>>, vector<32x128xf32>
    %cst_232 = arith.constant dense<0.000000e+00> : vector<2x128xf32>
    %354 = tpu.matmul %352, %353, %cst_232 {dimension_numbers = #tpu.dot_dimension_numbers<[1], [0], [0], [1], [0, 0, 1, 1], [], []>} : vector<2x32xf32>, vector<32x128xf32>, vector<2x128xf32> -> vector<2x128xf32>
    %c0_233 = arith.constant 0 : index
    %c0_234 = arith.constant 0 : index
    %355 = vector.load %arg9[%c0_233, %c0_234] : memref<1x128xf32, #tpu.memory_space<vmem>>, vector<1x128xf32>
    %356 = vector.broadcast %355 : vector<1x128xf32> to vector<2x128xf32>
    %357 = arith.addf %354, %356 : vector<2x128xf32>
    %358 = arith.index_cast %c0_i32_227 : i32 to index
    %c0_235 = arith.constant 0 : index
    %c0_236 = arith.constant 0 : index
    %359 = vector.load %arg18[%358, %c0_235, %c0_236] : memref<8x2x128xf32, #tpu.memory_space<vmem>>, vector<1x2x128xf32>
    %360 = vector.shape_cast %359 : vector<1x2x128xf32> to vector<2x128xf32>
    %361 = vector.shape_cast %357 : vector<2x128xf32> to vector<1x2x128xf32>
    tpu.vector_store %arg18[%358, %c0_235, %c0_236], %361 {strides = array<i32>} : memref<8x2x128xf32, #tpu.memory_space<vmem>>, vector<1x2x128xf32>,
    %c1_i32_237 = arith.constant 1 : i32
    %362 = arith.index_cast %c1_i32_237 : i32 to index
    %c0_238 = arith.constant 0 : index
    %c0_239 = arith.constant 0 : index
    %363 = vector.load %arg17[%362, %c0_238, %c0_239] : memref<8x2x32xf32, #tpu.memory_space<vmem>>, vector<1x2x32xf32>
    %364 = vector.shape_cast %363 : vector<1x2x32xf32> to vector<2x32xf32>
    %c0_240 = arith.constant 0 : index
    %c0_241 = arith.constant 0 : index
    %365 = vector.load %arg7[%c0_240, %c0_241] : memref<32x128xf32, #tpu.memory_space<vmem>>, vector<32x128xf32>
    %cst_242 = arith.constant dense<0.000000e+00> : vector<2x128xf32>
    %366 = tpu.matmul %364, %365, %cst_242 {dimension_numbers = #tpu.dot_dimension_numbers<[1], [0], [0], [1], [0, 0, 1, 1], [], []>} : vector<2x32xf32>, vector<32x128xf32>, vector<2x128xf32> -> vector<2x128xf32>
    %c0_243 = arith.constant 0 : index
    %c0_244 = arith.constant 0 : index
    %367 = vector.load %arg9[%c0_243, %c0_244] : memref<1x128xf32, #tpu.memory_space<vmem>>, vector<1x128xf32>
    %368 = vector.broadcast %367 : vector<1x128xf32> to vector<2x128xf32>
    %369 = arith.addf %366, %368 : vector<2x128xf32>
    %370 = arith.index_cast %c1_i32_237 : i32 to index
    %c0_245 = arith.constant 0 : index
    %c0_246 = arith.constant 0 : index
    %371 = vector.load %arg18[%370, %c0_245, %c0_246] : memref<8x2x128xf32, #tpu.memory_space<vmem>>, vector<1x2x128xf32>
    %372 = vector.shape_cast %371 : vector<1x2x128xf32> to vector<2x128xf32>
    %373 = vector.shape_cast %369 : vector<2x128xf32> to vector<1x2x128xf32>
    tpu.vector_store %arg18[%370, %c0_245, %c0_246], %373 {strides = array<i32>} : memref<8x2x128xf32, #tpu.memory_space<vmem>>, vector<1x2x128xf32>,
    %c2_i32_247 = arith.constant 2 : i32
    %374 = arith.index_cast %c2_i32_247 : i32 to index
    %c0_248 = arith.constant 0 : index
    %c0_249 = arith.constant 0 : index
    %375 = vector.load %arg17[%374, %c0_248, %c0_249] : memref<8x2x32xf32, #tpu.memory_space<vmem>>, vector<1x2x32xf32>
    %376 = vector.shape_cast %375 : vector<1x2x32xf32> to vector<2x32xf32>
    %c0_250 = arith.constant 0 : index
    %c0_251 = arith.constant 0 : index
    %377 = vector.load %arg7[%c0_250, %c0_251] : memref<32x128xf32, #tpu.memory_space<vmem>>, vector<32x128xf32>
    %cst_252 = arith.constant dense<0.000000e+00> : vector<2x128xf32>
    %378 = tpu.matmul %376, %377, %cst_252 {dimension_numbers = #tpu.dot_dimension_numbers<[1], [0], [0], [1], [0, 0, 1, 1], [], []>} : vector<2x32xf32>, vector<32x128xf32>, vector<2x128xf32> -> vector<2x128xf32>
    %c0_253 = arith.constant 0 : index
    %c0_254 = arith.constant 0 : index
    %379 = vector.load %arg9[%c0_253, %c0_254] : memref<1x128xf32, #tpu.memory_space<vmem>>, vector<1x128xf32>
    %380 = vector.broadcast %379 : vector<1x128xf32> to vector<2x128xf32>
    %381 = arith.addf %378, %380 : vector<2x128xf32>
    %382 = arith.index_cast %c2_i32_247 : i32 to index
    %c0_255 = arith.constant 0 : index
    %c0_256 = arith.constant 0 : index
    %383 = vector.load %arg18[%382, %c0_255, %c0_256] : memref<8x2x128xf32, #tpu.memory_space<vmem>>, vector<1x2x128xf32>
    %384 = vector.shape_cast %383 : vector<1x2x128xf32> to vector<2x128xf32>
    %385 = vector.shape_cast %381 : vector<2x128xf32> to vector<1x2x128xf32>
    tpu.vector_store %arg18[%382, %c0_255, %c0_256], %385 {strides = array<i32>} : memref<8x2x128xf32, #tpu.memory_space<vmem>>, vector<1x2x128xf32>,
    %c3_i32_257 = arith.constant 3 : i32
    %386 = arith.index_cast %c3_i32_257 : i32 to index
    %c0_258 = arith.constant 0 : index
    %c0_259 = arith.constant 0 : index
    %387 = vector.load %arg17[%386, %c0_258, %c0_259] : memref<8x2x32xf32, #tpu.memory_space<vmem>>, vector<1x2x32xf32>
    %388 = vector.shape_cast %387 : vector<1x2x32xf32> to vector<2x32xf32>
    %c0_260 = arith.constant 0 : index
    %c0_261 = arith.constant 0 : index
    %389 = vector.load %arg7[%c0_260, %c0_261] : memref<32x128xf32, #tpu.memory_space<vmem>>, vector<32x128xf32>
    %cst_262 = arith.constant dense<0.000000e+00> : vector<2x128xf32>
    %390 = tpu.matmul %388, %389, %cst_262 {dimension_numbers = #tpu.dot_dimension_numbers<[1], [0], [0], [1], [0, 0, 1, 1], [], []>} : vector<2x32xf32>, vector<32x128xf32>, vector<2x128xf32> -> vector<2x128xf32>
    %c0_263 = arith.constant 0 : index
    %c0_264 = arith.constant 0 : index
    %391 = vector.load %arg9[%c0_263, %c0_264] : memref<1x128xf32, #tpu.memory_space<vmem>>, vector<1x128xf32>
    %392 = vector.broadcast %391 : vector<1x128xf32> to vector<2x128xf32>
    %393 = arith.addf %390, %392 : vector<2x128xf32>
    %394 = arith.index_cast %c3_i32_257 : i32 to index
    %c0_265 = arith.constant 0 : index
    %c0_266 = arith.constant 0 : index
    %395 = vector.load %arg18[%394, %c0_265, %c0_266] : memref<8x2x128xf32, #tpu.memory_space<vmem>>, vector<1x2x128xf32>
    %396 = vector.shape_cast %395 : vector<1x2x128xf32> to vector<2x128xf32>
    %397 = vector.shape_cast %393 : vector<2x128xf32> to vector<1x2x128xf32>
    tpu.vector_store %arg18[%394, %c0_265, %c0_266], %397 {strides = array<i32>} : memref<8x2x128xf32, #tpu.memory_space<vmem>>, vector<1x2x128xf32>,
    %c4_i32_267 = arith.constant 4 : i32
    %398 = arith.index_cast %c4_i32_267 : i32 to index
    %c0_268 = arith.constant 0 : index
    %c0_269 = arith.constant 0 : index
    %399 = vector.load %arg17[%398, %c0_268, %c0_269] : memref<8x2x32xf32, #tpu.memory_space<vmem>>, vector<1x2x32xf32>
    %400 = vector.shape_cast %399 : vector<1x2x32xf32> to vector<2x32xf32>
    %c0_270 = arith.constant 0 : index
    %c0_271 = arith.constant 0 : index
    %401 = vector.load %arg7[%c0_270, %c0_271] : memref<32x128xf32, #tpu.memory_space<vmem>>, vector<32x128xf32>
    %cst_272 = arith.constant dense<0.000000e+00> : vector<2x128xf32>
    %402 = tpu.matmul %400, %401, %cst_272 {dimension_numbers = #tpu.dot_dimension_numbers<[1], [0], [0], [1], [0, 0, 1, 1], [], []>} : vector<2x32xf32>, vector<32x128xf32>, vector<2x128xf32> -> vector<2x128xf32>
    %c0_273 = arith.constant 0 : index
    %c0_274 = arith.constant 0 : index
    %403 = vector.load %arg9[%c0_273, %c0_274] : memref<1x128xf32, #tpu.memory_space<vmem>>, vector<1x128xf32>
    %404 = vector.broadcast %403 : vector<1x128xf32> to vector<2x128xf32>
    %405 = arith.addf %402, %404 : vector<2x128xf32>
    %406 = arith.index_cast %c4_i32_267 : i32 to index
    %c0_275 = arith.constant 0 : index
    %c0_276 = arith.constant 0 : index
    %407 = vector.load %arg18[%406, %c0_275, %c0_276] : memref<8x2x128xf32, #tpu.memory_space<vmem>>, vector<1x2x128xf32>
    %408 = vector.shape_cast %407 : vector<1x2x128xf32> to vector<2x128xf32>
    %409 = vector.shape_cast %405 : vector<2x128xf32> to vector<1x2x128xf32>
    tpu.vector_store %arg18[%406, %c0_275, %c0_276], %409 {strides = array<i32>} : memref<8x2x128xf32, #tpu.memory_space<vmem>>, vector<1x2x128xf32>,
    %c5_i32_277 = arith.constant 5 : i32
    %410 = arith.index_cast %c5_i32_277 : i32 to index
    %c0_278 = arith.constant 0 : index
    %c0_279 = arith.constant 0 : index
    %411 = vector.load %arg17[%410, %c0_278, %c0_279] : memref<8x2x32xf32, #tpu.memory_space<vmem>>, vector<1x2x32xf32>
    %412 = vector.shape_cast %411 : vector<1x2x32xf32> to vector<2x32xf32>
    %c0_280 = arith.constant 0 : index
    %c0_281 = arith.constant 0 : index
    %413 = vector.load %arg7[%c0_280, %c0_281] : memref<32x128xf32, #tpu.memory_space<vmem>>, vector<32x128xf32>
    %cst_282 = arith.constant dense<0.000000e+00> : vector<2x128xf32>
    %414 = tpu.matmul %412, %413, %cst_282 {dimension_numbers = #tpu.dot_dimension_numbers<[1], [0], [0], [1], [0, 0, 1, 1], [], []>} : vector<2x32xf32>, vector<32x128xf32>, vector<2x128xf32> -> vector<2x128xf32>
    %c0_283 = arith.constant 0 : index
    %c0_284 = arith.constant 0 : index
    %415 = vector.load %arg9[%c0_283, %c0_284] : memref<1x128xf32, #tpu.memory_space<vmem>>, vector<1x128xf32>
    %416 = vector.broadcast %415 : vector<1x128xf32> to vector<2x128xf32>
    %417 = arith.addf %414, %416 : vector<2x128xf32>
    %418 = arith.index_cast %c5_i32_277 : i32 to index
    %c0_285 = arith.constant 0 : index
    %c0_286 = arith.constant 0 : index
    %419 = vector.load %arg18[%418, %c0_285, %c0_286] : memref<8x2x128xf32, #tpu.memory_space<vmem>>, vector<1x2x128xf32>
    %420 = vector.shape_cast %419 : vector<1x2x128xf32> to vector<2x128xf32>
    %421 = vector.shape_cast %417 : vector<2x128xf32> to vector<1x2x128xf32>
    tpu.vector_store %arg18[%418, %c0_285, %c0_286], %421 {strides = array<i32>} : memref<8x2x128xf32, #tpu.memory_space<vmem>>, vector<1x2x128xf32>,
    %c6_i32_287 = arith.constant 6 : i32
    %422 = arith.index_cast %c6_i32_287 : i32 to index
    %c0_288 = arith.constant 0 : index
    %c0_289 = arith.constant 0 : index
    %423 = vector.load %arg17[%422, %c0_288, %c0_289] : memref<8x2x32xf32, #tpu.memory_space<vmem>>, vector<1x2x32xf32>
    %424 = vector.shape_cast %423 : vector<1x2x32xf32> to vector<2x32xf32>
    %c0_290 = arith.constant 0 : index
    %c0_291 = arith.constant 0 : index
    %425 = vector.load %arg7[%c0_290, %c0_291] : memref<32x128xf32, #tpu.memory_space<vmem>>, vector<32x128xf32>
    %cst_292 = arith.constant dense<0.000000e+00> : vector<2x128xf32>
    %426 = tpu.matmul %424, %425, %cst_292 {dimension_numbers = #tpu.dot_dimension_numbers<[1], [0], [0], [1], [0, 0, 1, 1], [], []>} : vector<2x32xf32>, vector<32x128xf32>, vector<2x128xf32> -> vector<2x128xf32>
    %c0_293 = arith.constant 0 : index
    %c0_294 = arith.constant 0 : index
    %427 = vector.load %arg9[%c0_293, %c0_294] : memref<1x128xf32, #tpu.memory_space<vmem>>, vector<1x128xf32>
    %428 = vector.broadcast %427 : vector<1x128xf32> to vector<2x128xf32>
    %429 = arith.addf %426, %428 : vector<2x128xf32>
    %430 = arith.index_cast %c6_i32_287 : i32 to index
    %c0_295 = arith.constant 0 : index
    %c0_296 = arith.constant 0 : index
    %431 = vector.load %arg18[%430, %c0_295, %c0_296] : memref<8x2x128xf32, #tpu.memory_space<vmem>>, vector<1x2x128xf32>
    %432 = vector.shape_cast %431 : vector<1x2x128xf32> to vector<2x128xf32>
    %433 = vector.shape_cast %429 : vector<2x128xf32> to vector<1x2x128xf32>
    tpu.vector_store %arg18[%430, %c0_295, %c0_296], %433 {strides = array<i32>} : memref<8x2x128xf32, #tpu.memory_space<vmem>>, vector<1x2x128xf32>,
    %c7_i32_297 = arith.constant 7 : i32
    %434 = arith.index_cast %c7_i32_297 : i32 to index
    %c0_298 = arith.constant 0 : index
    %c0_299 = arith.constant 0 : index
    %435 = vector.load %arg17[%434, %c0_298, %c0_299] : memref<8x2x32xf32, #tpu.memory_space<vmem>>, vector<1x2x32xf32>
    %436 = vector.shape_cast %435 : vector<1x2x32xf32> to vector<2x32xf32>
    %c0_300 = arith.constant 0 : index
    %c0_301 = arith.constant 0 : index
    %437 = vector.load %arg7[%c0_300, %c0_301] : memref<32x128xf32, #tpu.memory_space<vmem>>, vector<32x128xf32>
    %cst_302 = arith.constant dense<0.000000e+00> : vector<2x128xf32>
    %438 = tpu.matmul %436, %437, %cst_302 {dimension_numbers = #tpu.dot_dimension_numbers<[1], [0], [0], [1], [0, 0, 1, 1], [], []>} : vector<2x32xf32>, vector<32x128xf32>, vector<2x128xf32> -> vector<2x128xf32>
    %c0_303 = arith.constant 0 : index
    %c0_304 = arith.constant 0 : index
    %439 = vector.load %arg9[%c0_303, %c0_304] : memref<1x128xf32, #tpu.memory_space<vmem>>, vector<1x128xf32>
    %440 = vector.broadcast %439 : vector<1x128xf32> to vector<2x128xf32>
    %441 = arith.addf %438, %440 : vector<2x128xf32>
    %442 = arith.index_cast %c7_i32_297 : i32 to index
    %c0_305 = arith.constant 0 : index
    %c0_306 = arith.constant 0 : index
    %443 = vector.load %arg18[%442, %c0_305, %c0_306] : memref<8x2x128xf32, #tpu.memory_space<vmem>>, vector<1x2x128xf32>
    %444 = vector.shape_cast %443 : vector<1x2x128xf32> to vector<2x128xf32>
    %445 = vector.shape_cast %441 : vector<2x128xf32> to vector<1x2x128xf32>
    tpu.vector_store %arg18[%442, %c0_305, %c0_306], %445 {strides = array<i32>} : memref<8x2x128xf32, #tpu.memory_space<vmem>>, vector<1x2x128xf32>,
    %c8_i32_307 = arith.constant 8 : i32
    %c1 = arith.constant 1 : index
    %c0_308 = arith.constant 0 : index
    %c0_309 = arith.constant 0 : index
    %446 = vector.load %arg2[%c1, %c0_308, %c0_309] : memref<2x2x32xf32, #tpu.memory_space<vmem>>, vector<1x2x32xf32>
    %447 = vector.shape_cast %446 : vector<1x2x32xf32> to vector<2x32xf32>
    %c0_310 = arith.constant 0 : index
    %c0_311 = arith.constant 0 : index
    %448 = vector.load %arg19[%c0_310, %c0_311] : memref<2x32xf32, #tpu.memory_space<vmem>>, vector<2x32xf32>
    tpu.vector_store %arg19[%c0_310, %c0_311], %447 {strides = array<i32>} : memref<2x32xf32, #tpu.memory_space<vmem>>, vector<2x32xf32>,
    %c1_312 = arith.constant 1 : index
    %c0_313 = arith.constant 0 : index
    %c0_314 = arith.constant 0 : index
    %449 = vector.load %arg3[%c1_312, %c0_313, %c0_314] : memref<2x2x32xf32, #tpu.memory_space<vmem>>, vector<1x2x32xf32>
    %450 = vector.shape_cast %449 : vector<1x2x32xf32> to vector<2x32xf32>
    %c0_315 = arith.constant 0 : index
    %c0_316 = arith.constant 0 : index
    %451 = vector.load %arg20[%c0_315, %c0_316] : memref<2x32xf32, #tpu.memory_space<vmem>>, vector<2x32xf32>
    tpu.vector_store %arg20[%c0_315, %c0_316], %450 {strides = array<i32>} : memref<2x32xf32, #tpu.memory_space<vmem>>, vector<2x32xf32>,
    %c0_i32_317 = arith.constant 0 : i32
    %452 = arith.index_cast %c0_i32_317 : i32 to index
    %c0_318 = arith.constant 0 : index
    %c0_319 = arith.constant 0 : index
    %453 = vector.load %arg18[%452, %c0_318, %c0_319] : memref<8x2x128xf32, #tpu.memory_space<vmem>>, vector<1x2x128xf32>
    %454 = vector.shape_cast %453 : vector<1x2x128xf32> to vector<2x128xf32>
    %c0_320 = arith.constant 0 : index
    %c0_321 = arith.constant 0 : index
    %455 = vector.load %arg19[%c0_320, %c0_321] : memref<2x32xf32, #tpu.memory_space<vmem>>, vector<2x32xf32>
    %c0_322 = arith.constant 0 : index
    %c0_323 = arith.constant 0 : index
    %456 = vector.load %arg8[%c0_322, %c0_323] : memref<32x128xf32, #tpu.memory_space<vmem>>, vector<32x128xf32>
    %cst_324 = arith.constant dense<0.000000e+00> : vector<2x128xf32>
    %457 = tpu.matmul %455, %456, %cst_324 {dimension_numbers = #tpu.dot_dimension_numbers<[1], [0], [0], [1], [0, 0, 1, 1], [], []>} : vector<2x32xf32>, vector<32x128xf32>, vector<2x128xf32> -> vector<2x128xf32>
    %458 = arith.addf %454, %457 : vector<2x128xf32>
    %459 = vector.extract_strided_slice %458 {offsets = [0, 0], sizes = [2, 96], strides = [1, 1]} : vector<2x128xf32> to vector<2x96xf32>
    %460 = arith.negf %459 : vector<2x96xf32>
    %461 = math.exp %460 : vector<2x96xf32>
    %cst_325 = arith.constant 1.000000e+00 : f32
    %462 = vector.broadcast %cst_325 : f32 to vector<2x96xf32>
    %463 = arith.addf %462, %461 : vector<2x96xf32>
    %464 = arith.divf %462, %463 : vector<2x96xf32>
    %465 = vector.extract_strided_slice %464 {offsets = [0, 0], sizes = [2, 32], strides = [1, 1]} : vector<2x96xf32> to vector<2x32xf32>
    %466 = vector.extract_strided_slice %464 {offsets = [0, 32], sizes = [2, 32], strides = [1, 1]} : vector<2x96xf32> to vector<2x32xf32>
    %467 = vector.extract_strided_slice %464 {offsets = [0, 64], sizes = [2, 32], strides = [1, 1]} : vector<2x96xf32> to vector<2x32xf32>
    %468 = vector.extract_strided_slice %458 {offsets = [0, 96], sizes = [2, 32], strides = [1, 1]} : vector<2x128xf32> to vector<2x32xf32>
    %469 = math.tanh %468 : vector<2x32xf32>
    %c0_326 = arith.constant 0 : index
    %c0_327 = arith.constant 0 : index
    %470 = vector.load %arg20[%c0_326, %c0_327] : memref<2x32xf32, #tpu.memory_space<vmem>>, vector<2x32xf32>
    %471 = arith.mulf %466, %470 : vector<2x32xf32>
    %472 = arith.mulf %465, %469 : vector<2x32xf32>
    %473 = arith.addf %471, %472 : vector<2x32xf32>
    %474 = math.tanh %473 : vector<2x32xf32>
    %475 = arith.mulf %467, %474 : vector<2x32xf32>
    %c0_328 = arith.constant 0 : index
    %c0_329 = arith.constant 0 : index
    %476 = vector.load %arg20[%c0_328, %c0_329] : memref<2x32xf32, #tpu.memory_space<vmem>>, vector<2x32xf32>
    tpu.vector_store %arg20[%c0_328, %c0_329], %473 {strides = array<i32>} : memref<2x32xf32, #tpu.memory_space<vmem>>, vector<2x32xf32>,
    %c0_330 = arith.constant 0 : index
    %c0_331 = arith.constant 0 : index
    %477 = vector.load %arg19[%c0_330, %c0_331] : memref<2x32xf32, #tpu.memory_space<vmem>>, vector<2x32xf32>
    tpu.vector_store %arg19[%c0_330, %c0_331], %475 {strides = array<i32>} : memref<2x32xf32, #tpu.memory_space<vmem>>, vector<2x32xf32>,
    %c1_i32_332 = arith.constant 1 : i32
    %478 = arith.index_cast %c1_i32_332 : i32 to index
    %c0_333 = arith.constant 0 : index
    %c0_334 = arith.constant 0 : index
    %479 = vector.load %arg18[%478, %c0_333, %c0_334] : memref<8x2x128xf32, #tpu.memory_space<vmem>>, vector<1x2x128xf32>
    %480 = vector.shape_cast %479 : vector<1x2x128xf32> to vector<2x128xf32>
    %c0_335 = arith.constant 0 : index
    %c0_336 = arith.constant 0 : index
    %481 = vector.load %arg19[%c0_335, %c0_336] : memref<2x32xf32, #tpu.memory_space<vmem>>, vector<2x32xf32>
    %c0_337 = arith.constant 0 : index
    %c0_338 = arith.constant 0 : index
    %482 = vector.load %arg8[%c0_337, %c0_338] : memref<32x128xf32, #tpu.memory_space<vmem>>, vector<32x128xf32>
    %cst_339 = arith.constant dense<0.000000e+00> : vector<2x128xf32>
    %483 = tpu.matmul %481, %482, %cst_339 {dimension_numbers = #tpu.dot_dimension_numbers<[1], [0], [0], [1], [0, 0, 1, 1], [], []>} : vector<2x32xf32>, vector<32x128xf32>, vector<2x128xf32> -> vector<2x128xf32>
    %484 = arith.addf %480, %483 : vector<2x128xf32>
    %485 = vector.extract_strided_slice %484 {offsets = [0, 0], sizes = [2, 96], strides = [1, 1]} : vector<2x128xf32> to vector<2x96xf32>
    %486 = arith.negf %485 : vector<2x96xf32>
    %487 = math.exp %486 : vector<2x96xf32>
    %cst_340 = arith.constant 1.000000e+00 : f32
    %488 = vector.broadcast %cst_340 : f32 to vector<2x96xf32>
    %489 = arith.addf %488, %487 : vector<2x96xf32>
    %490 = arith.divf %488, %489 : vector<2x96xf32>
    %491 = vector.extract_strided_slice %490 {offsets = [0, 0], sizes = [2, 32], strides = [1, 1]} : vector<2x96xf32> to vector<2x32xf32>
    %492 = vector.extract_strided_slice %490 {offsets = [0, 32], sizes = [2, 32], strides = [1, 1]} : vector<2x96xf32> to vector<2x32xf32>
    %493 = vector.extract_strided_slice %490 {offsets = [0, 64], sizes = [2, 32], strides = [1, 1]} : vector<2x96xf32> to vector<2x32xf32>
    %494 = vector.extract_strided_slice %484 {offsets = [0, 96], sizes = [2, 32], strides = [1, 1]} : vector<2x128xf32> to vector<2x32xf32>
    %495 = math.tanh %494 : vector<2x32xf32>
    %c0_341 = arith.constant 0 : index
    %c0_342 = arith.constant 0 : index
    %496 = vector.load %arg20[%c0_341, %c0_342] : memref<2x32xf32, #tpu.memory_space<vmem>>, vector<2x32xf32>
    %497 = arith.mulf %492, %496 : vector<2x32xf32>
    %498 = arith.mulf %491, %495 : vector<2x32xf32>
    %499 = arith.addf %497, %498 : vector<2x32xf32>
    %500 = math.tanh %499 : vector<2x32xf32>
    %501 = arith.mulf %493, %500 : vector<2x32xf32>
    %c0_343 = arith.constant 0 : index
    %c0_344 = arith.constant 0 : index
    %502 = vector.load %arg20[%c0_343, %c0_344] : memref<2x32xf32, #tpu.memory_space<vmem>>, vector<2x32xf32>
    tpu.vector_store %arg20[%c0_343, %c0_344], %499 {strides = array<i32>} : memref<2x32xf32, #tpu.memory_space<vmem>>, vector<2x32xf32>,
    %c0_345 = arith.constant 0 : index
    %c0_346 = arith.constant 0 : index
    %503 = vector.load %arg19[%c0_345, %c0_346] : memref<2x32xf32, #tpu.memory_space<vmem>>, vector<2x32xf32>
    tpu.vector_store %arg19[%c0_345, %c0_346], %501 {strides = array<i32>} : memref<2x32xf32, #tpu.memory_space<vmem>>, vector<2x32xf32>,
    %c2_i32_347 = arith.constant 2 : i32
    %504 = arith.index_cast %c2_i32_347 : i32 to index
    %c0_348 = arith.constant 0 : index
    %c0_349 = arith.constant 0 : index
    %505 = vector.load %arg18[%504, %c0_348, %c0_349] : memref<8x2x128xf32, #tpu.memory_space<vmem>>, vector<1x2x128xf32>
    %506 = vector.shape_cast %505 : vector<1x2x128xf32> to vector<2x128xf32>
    %c0_350 = arith.constant 0 : index
    %c0_351 = arith.constant 0 : index
    %507 = vector.load %arg19[%c0_350, %c0_351] : memref<2x32xf32, #tpu.memory_space<vmem>>, vector<2x32xf32>
    %c0_352 = arith.constant 0 : index
    %c0_353 = arith.constant 0 : index
    %508 = vector.load %arg8[%c0_352, %c0_353] : memref<32x128xf32, #tpu.memory_space<vmem>>, vector<32x128xf32>
    %cst_354 = arith.constant dense<0.000000e+00> : vector<2x128xf32>
    %509 = tpu.matmul %507, %508, %cst_354 {dimension_numbers = #tpu.dot_dimension_numbers<[1], [0], [0], [1], [0, 0, 1, 1], [], []>} : vector<2x32xf32>, vector<32x128xf32>, vector<2x128xf32> -> vector<2x128xf32>
    %510 = arith.addf %506, %509 : vector<2x128xf32>
    %511 = vector.extract_strided_slice %510 {offsets = [0, 0], sizes = [2, 96], strides = [1, 1]} : vector<2x128xf32> to vector<2x96xf32>
    %512 = arith.negf %511 : vector<2x96xf32>
    %513 = math.exp %512 : vector<2x96xf32>
    %cst_355 = arith.constant 1.000000e+00 : f32
    %514 = vector.broadcast %cst_355 : f32 to vector<2x96xf32>
    %515 = arith.addf %514, %513 : vector<2x96xf32>
    %516 = arith.divf %514, %515 : vector<2x96xf32>
    %517 = vector.extract_strided_slice %516 {offsets = [0, 0], sizes = [2, 32], strides = [1, 1]} : vector<2x96xf32> to vector<2x32xf32>
    %518 = vector.extract_strided_slice %516 {offsets = [0, 32], sizes = [2, 32], strides = [1, 1]} : vector<2x96xf32> to vector<2x32xf32>
    %519 = vector.extract_strided_slice %516 {offsets = [0, 64], sizes = [2, 32], strides = [1, 1]} : vector<2x96xf32> to vector<2x32xf32>
    %520 = vector.extract_strided_slice %510 {offsets = [0, 96], sizes = [2, 32], strides = [1, 1]} : vector<2x128xf32> to vector<2x32xf32>
    %521 = math.tanh %520 : vector<2x32xf32>
    %c0_356 = arith.constant 0 : index
    %c0_357 = arith.constant 0 : index
    %522 = vector.load %arg20[%c0_356, %c0_357] : memref<2x32xf32, #tpu.memory_space<vmem>>, vector<2x32xf32>
    %523 = arith.mulf %518, %522 : vector<2x32xf32>
    %524 = arith.mulf %517, %521 : vector<2x32xf32>
    %525 = arith.addf %523, %524 : vector<2x32xf32>
    %526 = math.tanh %525 : vector<2x32xf32>
    %527 = arith.mulf %519, %526 : vector<2x32xf32>
    %c0_358 = arith.constant 0 : index
    %c0_359 = arith.constant 0 : index
    %528 = vector.load %arg20[%c0_358, %c0_359] : memref<2x32xf32, #tpu.memory_space<vmem>>, vector<2x32xf32>
    tpu.vector_store %arg20[%c0_358, %c0_359], %525 {strides = array<i32>} : memref<2x32xf32, #tpu.memory_space<vmem>>, vector<2x32xf32>,
    %c0_360 = arith.constant 0 : index
    %c0_361 = arith.constant 0 : index
    %529 = vector.load %arg19[%c0_360, %c0_361] : memref<2x32xf32, #tpu.memory_space<vmem>>, vector<2x32xf32>
    tpu.vector_store %arg19[%c0_360, %c0_361], %527 {strides = array<i32>} : memref<2x32xf32, #tpu.memory_space<vmem>>, vector<2x32xf32>,
    %c3_i32_362 = arith.constant 3 : i32
    %530 = arith.index_cast %c3_i32_362 : i32 to index
    %c0_363 = arith.constant 0 : index
    %c0_364 = arith.constant 0 : index
    %531 = vector.load %arg18[%530, %c0_363, %c0_364] : memref<8x2x128xf32, #tpu.memory_space<vmem>>, vector<1x2x128xf32>
    %532 = vector.shape_cast %531 : vector<1x2x128xf32> to vector<2x128xf32>
    %c0_365 = arith.constant 0 : index
    %c0_366 = arith.constant 0 : index
    %533 = vector.load %arg19[%c0_365, %c0_366] : memref<2x32xf32, #tpu.memory_space<vmem>>, vector<2x32xf32>
    %c0_367 = arith.constant 0 : index
    %c0_368 = arith.constant 0 : index
    %534 = vector.load %arg8[%c0_367, %c0_368] : memref<32x128xf32, #tpu.memory_space<vmem>>, vector<32x128xf32>
    %cst_369 = arith.constant dense<0.000000e+00> : vector<2x128xf32>
    %535 = tpu.matmul %533, %534, %cst_369 {dimension_numbers = #tpu.dot_dimension_numbers<[1], [0], [0], [1], [0, 0, 1, 1], [], []>} : vector<2x32xf32>, vector<32x128xf32>, vector<2x128xf32> -> vector<2x128xf32>
    %536 = arith.addf %532, %535 : vector<2x128xf32>
    %537 = vector.extract_strided_slice %536 {offsets = [0, 0], sizes = [2, 96], strides = [1, 1]} : vector<2x128xf32> to vector<2x96xf32>
    %538 = arith.negf %537 : vector<2x96xf32>
    %539 = math.exp %538 : vector<2x96xf32>
    %cst_370 = arith.constant 1.000000e+00 : f32
    %540 = vector.broadcast %cst_370 : f32 to vector<2x96xf32>
    %541 = arith.addf %540, %539 : vector<2x96xf32>
    %542 = arith.divf %540, %541 : vector<2x96xf32>
    %543 = vector.extract_strided_slice %542 {offsets = [0, 0], sizes = [2, 32], strides = [1, 1]} : vector<2x96xf32> to vector<2x32xf32>
    %544 = vector.extract_strided_slice %542 {offsets = [0, 32], sizes = [2, 32], strides = [1, 1]} : vector<2x96xf32> to vector<2x32xf32>
    %545 = vector.extract_strided_slice %542 {offsets = [0, 64], sizes = [2, 32], strides = [1, 1]} : vector<2x96xf32> to vector<2x32xf32>
    %546 = vector.extract_strided_slice %536 {offsets = [0, 96], sizes = [2, 32], strides = [1, 1]} : vector<2x128xf32> to vector<2x32xf32>
    %547 = math.tanh %546 : vector<2x32xf32>
    %c0_371 = arith.constant 0 : index
    %c0_372 = arith.constant 0 : index
    %548 = vector.load %arg20[%c0_371, %c0_372] : memref<2x32xf32, #tpu.memory_space<vmem>>, vector<2x32xf32>
    %549 = arith.mulf %544, %548 : vector<2x32xf32>
    %550 = arith.mulf %543, %547 : vector<2x32xf32>
    %551 = arith.addf %549, %550 : vector<2x32xf32>
    %552 = math.tanh %551 : vector<2x32xf32>
    %553 = arith.mulf %545, %552 : vector<2x32xf32>
    %c0_373 = arith.constant 0 : index
    %c0_374 = arith.constant 0 : index
    %554 = vector.load %arg20[%c0_373, %c0_374] : memref<2x32xf32, #tpu.memory_space<vmem>>, vector<2x32xf32>
    tpu.vector_store %arg20[%c0_373, %c0_374], %551 {strides = array<i32>} : memref<2x32xf32, #tpu.memory_space<vmem>>, vector<2x32xf32>,
    %c0_375 = arith.constant 0 : index
    %c0_376 = arith.constant 0 : index
    %555 = vector.load %arg19[%c0_375, %c0_376] : memref<2x32xf32, #tpu.memory_space<vmem>>, vector<2x32xf32>
    tpu.vector_store %arg19[%c0_375, %c0_376], %553 {strides = array<i32>} : memref<2x32xf32, #tpu.memory_space<vmem>>, vector<2x32xf32>,
    %c4_i32_377 = arith.constant 4 : i32
    %556 = arith.index_cast %c4_i32_377 : i32 to index
    %c0_378 = arith.constant 0 : index
    %c0_379 = arith.constant 0 : index
    %557 = vector.load %arg18[%556, %c0_378, %c0_379] : memref<8x2x128xf32, #tpu.memory_space<vmem>>, vector<1x2x128xf32>
    %558 = vector.shape_cast %557 : vector<1x2x128xf32> to vector<2x128xf32>
    %c0_380 = arith.constant 0 : index
    %c0_381 = arith.constant 0 : index
    %559 = vector.load %arg19[%c0_380, %c0_381] : memref<2x32xf32, #tpu.memory_space<vmem>>, vector<2x32xf32>
    %c0_382 = arith.constant 0 : index
    %c0_383 = arith.constant 0 : index
    %560 = vector.load %arg8[%c0_382, %c0_383] : memref<32x128xf32, #tpu.memory_space<vmem>>, vector<32x128xf32>
    %cst_384 = arith.constant dense<0.000000e+00> : vector<2x128xf32>
    %561 = tpu.matmul %559, %560, %cst_384 {dimension_numbers = #tpu.dot_dimension_numbers<[1], [0], [0], [1], [0, 0, 1, 1], [], []>} : vector<2x32xf32>, vector<32x128xf32>, vector<2x128xf32> -> vector<2x128xf32>
    %562 = arith.addf %558, %561 : vector<2x128xf32>
    %563 = vector.extract_strided_slice %562 {offsets = [0, 0], sizes = [2, 96], strides = [1, 1]} : vector<2x128xf32> to vector<2x96xf32>
    %564 = arith.negf %563 : vector<2x96xf32>
    %565 = math.exp %564 : vector<2x96xf32>
    %cst_385 = arith.constant 1.000000e+00 : f32
    %566 = vector.broadcast %cst_385 : f32 to vector<2x96xf32>
    %567 = arith.addf %566, %565 : vector<2x96xf32>
    %568 = arith.divf %566, %567 : vector<2x96xf32>
    %569 = vector.extract_strided_slice %568 {offsets = [0, 0], sizes = [2, 32], strides = [1, 1]} : vector<2x96xf32> to vector<2x32xf32>
    %570 = vector.extract_strided_slice %568 {offsets = [0, 32], sizes = [2, 32], strides = [1, 1]} : vector<2x96xf32> to vector<2x32xf32>
    %571 = vector.extract_strided_slice %568 {offsets = [0, 64], sizes = [2, 32], strides = [1, 1]} : vector<2x96xf32> to vector<2x32xf32>
    %572 = vector.extract_strided_slice %562 {offsets = [0, 96], sizes = [2, 32], strides = [1, 1]} : vector<2x128xf32> to vector<2x32xf32>
    %573 = math.tanh %572 : vector<2x32xf32>
    %c0_386 = arith.constant 0 : index
    %c0_387 = arith.constant 0 : index
    %574 = vector.load %arg20[%c0_386, %c0_387] : memref<2x32xf32, #tpu.memory_space<vmem>>, vector<2x32xf32>
    %575 = arith.mulf %570, %574 : vector<2x32xf32>
    %576 = arith.mulf %569, %573 : vector<2x32xf32>
    %577 = arith.addf %575, %576 : vector<2x32xf32>
    %578 = math.tanh %577 : vector<2x32xf32>
    %579 = arith.mulf %571, %578 : vector<2x32xf32>
    %c0_388 = arith.constant 0 : index
    %c0_389 = arith.constant 0 : index
    %580 = vector.load %arg20[%c0_388, %c0_389] : memref<2x32xf32, #tpu.memory_space<vmem>>, vector<2x32xf32>
    tpu.vector_store %arg20[%c0_388, %c0_389], %577 {strides = array<i32>} : memref<2x32xf32, #tpu.memory_space<vmem>>, vector<2x32xf32>,
    %c0_390 = arith.constant 0 : index
    %c0_391 = arith.constant 0 : index
    %581 = vector.load %arg19[%c0_390, %c0_391] : memref<2x32xf32, #tpu.memory_space<vmem>>, vector<2x32xf32>
    tpu.vector_store %arg19[%c0_390, %c0_391], %579 {strides = array<i32>} : memref<2x32xf32, #tpu.memory_space<vmem>>, vector<2x32xf32>,
    %c5_i32_392 = arith.constant 5 : i32
    %582 = arith.index_cast %c5_i32_392 : i32 to index
    %c0_393 = arith.constant 0 : index
    %c0_394 = arith.constant 0 : index
    %583 = vector.load %arg18[%582, %c0_393, %c0_394] : memref<8x2x128xf32, #tpu.memory_space<vmem>>, vector<1x2x128xf32>
    %584 = vector.shape_cast %583 : vector<1x2x128xf32> to vector<2x128xf32>
    %c0_395 = arith.constant 0 : index
    %c0_396 = arith.constant 0 : index
    %585 = vector.load %arg19[%c0_395, %c0_396] : memref<2x32xf32, #tpu.memory_space<vmem>>, vector<2x32xf32>
    %c0_397 = arith.constant 0 : index
    %c0_398 = arith.constant 0 : index
    %586 = vector.load %arg8[%c0_397, %c0_398] : memref<32x128xf32, #tpu.memory_space<vmem>>, vector<32x128xf32>
    %cst_399 = arith.constant dense<0.000000e+00> : vector<2x128xf32>
    %587 = tpu.matmul %585, %586, %cst_399 {dimension_numbers = #tpu.dot_dimension_numbers<[1], [0], [0], [1], [0, 0, 1, 1], [], []>} : vector<2x32xf32>, vector<32x128xf32>, vector<2x128xf32> -> vector<2x128xf32>
    %588 = arith.addf %584, %587 : vector<2x128xf32>
    %589 = vector.extract_strided_slice %588 {offsets = [0, 0], sizes = [2, 96], strides = [1, 1]} : vector<2x128xf32> to vector<2x96xf32>
    %590 = arith.negf %589 : vector<2x96xf32>
    %591 = math.exp %590 : vector<2x96xf32>
    %cst_400 = arith.constant 1.000000e+00 : f32
    %592 = vector.broadcast %cst_400 : f32 to vector<2x96xf32>
    %593 = arith.addf %592, %591 : vector<2x96xf32>
    %594 = arith.divf %592, %593 : vector<2x96xf32>
    %595 = vector.extract_strided_slice %594 {offsets = [0, 0], sizes = [2, 32], strides = [1, 1]} : vector<2x96xf32> to vector<2x32xf32>
    %596 = vector.extract_strided_slice %594 {offsets = [0, 32], sizes = [2, 32], strides = [1, 1]} : vector<2x96xf32> to vector<2x32xf32>
    %597 = vector.extract_strided_slice %594 {offsets = [0, 64], sizes = [2, 32], strides = [1, 1]} : vector<2x96xf32> to vector<2x32xf32>
    %598 = vector.extract_strided_slice %588 {offsets = [0, 96], sizes = [2, 32], strides = [1, 1]} : vector<2x128xf32> to vector<2x32xf32>
    %599 = math.tanh %598 : vector<2x32xf32>
    %c0_401 = arith.constant 0 : index
    %c0_402 = arith.constant 0 : index
    %600 = vector.load %arg20[%c0_401, %c0_402] : memref<2x32xf32, #tpu.memory_space<vmem>>, vector<2x32xf32>
    %601 = arith.mulf %596, %600 : vector<2x32xf32>
    %602 = arith.mulf %595, %599 : vector<2x32xf32>
    %603 = arith.addf %601, %602 : vector<2x32xf32>
    %604 = math.tanh %603 : vector<2x32xf32>
    %605 = arith.mulf %597, %604 : vector<2x32xf32>
    %c0_403 = arith.constant 0 : index
    %c0_404 = arith.constant 0 : index
    %606 = vector.load %arg20[%c0_403, %c0_404] : memref<2x32xf32, #tpu.memory_space<vmem>>, vector<2x32xf32>
    tpu.vector_store %arg20[%c0_403, %c0_404], %603 {strides = array<i32>} : memref<2x32xf32, #tpu.memory_space<vmem>>, vector<2x32xf32>,
    %c0_405 = arith.constant 0 : index
    %c0_406 = arith.constant 0 : index
    %607 = vector.load %arg19[%c0_405, %c0_406] : memref<2x32xf32, #tpu.memory_space<vmem>>, vector<2x32xf32>
    tpu.vector_store %arg19[%c0_405, %c0_406], %605 {strides = array<i32>} : memref<2x32xf32, #tpu.memory_space<vmem>>, vector<2x32xf32>,
    %c6_i32_407 = arith.constant 6 : i32
    %608 = arith.index_cast %c6_i32_407 : i32 to index
    %c0_408 = arith.constant 0 : index
    %c0_409 = arith.constant 0 : index
    %609 = vector.load %arg18[%608, %c0_408, %c0_409] : memref<8x2x128xf32, #tpu.memory_space<vmem>>, vector<1x2x128xf32>
    %610 = vector.shape_cast %609 : vector<1x2x128xf32> to vector<2x128xf32>
    %c0_410 = arith.constant 0 : index
    %c0_411 = arith.constant 0 : index
    %611 = vector.load %arg19[%c0_410, %c0_411] : memref<2x32xf32, #tpu.memory_space<vmem>>, vector<2x32xf32>
    %c0_412 = arith.constant 0 : index
    %c0_413 = arith.constant 0 : index
    %612 = vector.load %arg8[%c0_412, %c0_413] : memref<32x128xf32, #tpu.memory_space<vmem>>, vector<32x128xf32>
    %cst_414 = arith.constant dense<0.000000e+00> : vector<2x128xf32>
    %613 = tpu.matmul %611, %612, %cst_414 {dimension_numbers = #tpu.dot_dimension_numbers<[1], [0], [0], [1], [0, 0, 1, 1], [], []>} : vector<2x32xf32>, vector<32x128xf32>, vector<2x128xf32> -> vector<2x128xf32>
    %614 = arith.addf %610, %613 : vector<2x128xf32>
    %615 = vector.extract_strided_slice %614 {offsets = [0, 0], sizes = [2, 96], strides = [1, 1]} : vector<2x128xf32> to vector<2x96xf32>
    %616 = arith.negf %615 : vector<2x96xf32>
    %617 = math.exp %616 : vector<2x96xf32>
    %cst_415 = arith.constant 1.000000e+00 : f32
    %618 = vector.broadcast %cst_415 : f32 to vector<2x96xf32>
    %619 = arith.addf %618, %617 : vector<2x96xf32>
    %620 = arith.divf %618, %619 : vector<2x96xf32>
    %621 = vector.extract_strided_slice %620 {offsets = [0, 0], sizes = [2, 32], strides = [1, 1]} : vector<2x96xf32> to vector<2x32xf32>
    %622 = vector.extract_strided_slice %620 {offsets = [0, 32], sizes = [2, 32], strides = [1, 1]} : vector<2x96xf32> to vector<2x32xf32>
    %623 = vector.extract_strided_slice %620 {offsets = [0, 64], sizes = [2, 32], strides = [1, 1]} : vector<2x96xf32> to vector<2x32xf32>
    %624 = vector.extract_strided_slice %614 {offsets = [0, 96], sizes = [2, 32], strides = [1, 1]} : vector<2x128xf32> to vector<2x32xf32>
    %625 = math.tanh %624 : vector<2x32xf32>
    %c0_416 = arith.constant 0 : index
    %c0_417 = arith.constant 0 : index
    %626 = vector.load %arg20[%c0_416, %c0_417] : memref<2x32xf32, #tpu.memory_space<vmem>>, vector<2x32xf32>
    %627 = arith.mulf %622, %626 : vector<2x32xf32>
    %628 = arith.mulf %621, %625 : vector<2x32xf32>
    %629 = arith.addf %627, %628 : vector<2x32xf32>
    %630 = math.tanh %629 : vector<2x32xf32>
    %631 = arith.mulf %623, %630 : vector<2x32xf32>
    %c0_418 = arith.constant 0 : index
    %c0_419 = arith.constant 0 : index
    %632 = vector.load %arg20[%c0_418, %c0_419] : memref<2x32xf32, #tpu.memory_space<vmem>>, vector<2x32xf32>
    tpu.vector_store %arg20[%c0_418, %c0_419], %629 {strides = array<i32>} : memref<2x32xf32, #tpu.memory_space<vmem>>, vector<2x32xf32>,
    %c0_420 = arith.constant 0 : index
    %c0_421 = arith.constant 0 : index
    %633 = vector.load %arg19[%c0_420, %c0_421] : memref<2x32xf32, #tpu.memory_space<vmem>>, vector<2x32xf32>
    tpu.vector_store %arg19[%c0_420, %c0_421], %631 {strides = array<i32>} : memref<2x32xf32, #tpu.memory_space<vmem>>, vector<2x32xf32>,
    %c7_i32_422 = arith.constant 7 : i32
    %634 = arith.index_cast %c7_i32_422 : i32 to index
    %c0_423 = arith.constant 0 : index
    %c0_424 = arith.constant 0 : index
    %635 = vector.load %arg18[%634, %c0_423, %c0_424] : memref<8x2x128xf32, #tpu.memory_space<vmem>>, vector<1x2x128xf32>
    %636 = vector.shape_cast %635 : vector<1x2x128xf32> to vector<2x128xf32>
    %c0_425 = arith.constant 0 : index
    %c0_426 = arith.constant 0 : index
    %637 = vector.load %arg19[%c0_425, %c0_426] : memref<2x32xf32, #tpu.memory_space<vmem>>, vector<2x32xf32>
    %c0_427 = arith.constant 0 : index
    %c0_428 = arith.constant 0 : index
    %638 = vector.load %arg8[%c0_427, %c0_428] : memref<32x128xf32, #tpu.memory_space<vmem>>, vector<32x128xf32>
    %cst_429 = arith.constant dense<0.000000e+00> : vector<2x128xf32>
    %639 = tpu.matmul %637, %638, %cst_429 {dimension_numbers = #tpu.dot_dimension_numbers<[1], [0], [0], [1], [0, 0, 1, 1], [], []>} : vector<2x32xf32>, vector<32x128xf32>, vector<2x128xf32> -> vector<2x128xf32>
    %640 = arith.addf %636, %639 : vector<2x128xf32>
    %641 = vector.extract_strided_slice %640 {offsets = [0, 0], sizes = [2, 96], strides = [1, 1]} : vector<2x128xf32> to vector<2x96xf32>
    %642 = arith.negf %641 : vector<2x96xf32>
    %643 = math.exp %642 : vector<2x96xf32>
    %cst_430 = arith.constant 1.000000e+00 : f32
    %644 = vector.broadcast %cst_430 : f32 to vector<2x96xf32>
    %645 = arith.addf %644, %643 : vector<2x96xf32>
    %646 = arith.divf %644, %645 : vector<2x96xf32>
    %647 = vector.extract_strided_slice %646 {offsets = [0, 0], sizes = [2, 32], strides = [1, 1]} : vector<2x96xf32> to vector<2x32xf32>
    %648 = vector.extract_strided_slice %646 {offsets = [0, 32], sizes = [2, 32], strides = [1, 1]} : vector<2x96xf32> to vector<2x32xf32>
    %649 = vector.extract_strided_slice %646 {offsets = [0, 64], sizes = [2, 32], strides = [1, 1]} : vector<2x96xf32> to vector<2x32xf32>
    %650 = vector.extract_strided_slice %640 {offsets = [0, 96], sizes = [2, 32], strides = [1, 1]} : vector<2x128xf32> to vector<2x32xf32>
    %651 = math.tanh %650 : vector<2x32xf32>
    %c0_431 = arith.constant 0 : index
    %c0_432 = arith.constant 0 : index
    %652 = vector.load %arg20[%c0_431, %c0_432] : memref<2x32xf32, #tpu.memory_space<vmem>>, vector<2x32xf32>
    %653 = arith.mulf %648, %652 : vector<2x32xf32>
    %654 = arith.mulf %647, %651 : vector<2x32xf32>
    %655 = arith.addf %653, %654 : vector<2x32xf32>
    %656 = math.tanh %655 : vector<2x32xf32>
    %657 = arith.mulf %649, %656 : vector<2x32xf32>
    %c0_433 = arith.constant 0 : index
    %c0_434 = arith.constant 0 : index
    %658 = vector.load %arg20[%c0_433, %c0_434] : memref<2x32xf32, #tpu.memory_space<vmem>>, vector<2x32xf32>
    tpu.vector_store %arg20[%c0_433, %c0_434], %655 {strides = array<i32>} : memref<2x32xf32, #tpu.memory_space<vmem>>, vector<2x32xf32>,
    %c0_435 = arith.constant 0 : index
    %c0_436 = arith.constant 0 : index
    %659 = vector.load %arg19[%c0_435, %c0_436] : memref<2x32xf32, #tpu.memory_space<vmem>>, vector<2x32xf32>
    tpu.vector_store %arg19[%c0_435, %c0_436], %657 {strides = array<i32>} : memref<2x32xf32, #tpu.memory_space<vmem>>, vector<2x32xf32>,
    %c8_i32_437 = arith.constant 8 : i32
    %c0_438 = arith.constant 0 : index
    %c0_439 = arith.constant 0 : index
    %660 = vector.load %arg19[%c0_438, %c0_439] : memref<2x32xf32, #tpu.memory_space<vmem>>, vector<2x32xf32>
    %c1_440 = arith.constant 1 : index
    %c0_441 = arith.constant 0 : index
    %c0_442 = arith.constant 0 : index
    %661 = vector.load %arg15[%c1_440, %c0_441, %c0_442] : memref<2x2x32xf32, #tpu.memory_space<vmem>>, vector<1x2x32xf32>
    %662 = vector.shape_cast %661 : vector<1x2x32xf32> to vector<2x32xf32>
    %663 = vector.shape_cast %660 : vector<2x32xf32> to vector<1x2x32xf32>
    tpu.vector_store %arg15[%c1_440, %c0_441, %c0_442], %663 {strides = array<i32>} : memref<2x2x32xf32, #tpu.memory_space<vmem>>, vector<1x2x32xf32>,
    %c0_443 = arith.constant 0 : index
    %c0_444 = arith.constant 0 : index
    %664 = vector.load %arg20[%c0_443, %c0_444] : memref<2x32xf32, #tpu.memory_space<vmem>>, vector<2x32xf32>
    %c1_445 = arith.constant 1 : index
    %c0_446 = arith.constant 0 : index
    %c0_447 = arith.constant 0 : index
    %665 = vector.load %arg16[%c1_445, %c0_446, %c0_447] : memref<2x2x32xf32, #tpu.memory_space<vmem>>, vector<1x2x32xf32>
    %666 = vector.shape_cast %665 : vector<1x2x32xf32> to vector<2x32xf32>
    %667 = vector.shape_cast %664 : vector<2x32xf32> to vector<1x2x32xf32>
    tpu.vector_store %arg16[%c1_445, %c0_446, %c0_447], %667 {strides = array<i32>} : memref<2x2x32xf32, #tpu.memory_space<vmem>>, vector<1x2x32xf32>,
    %c0_448 = arith.constant 0 : index
    %c0_449 = arith.constant 0 : index
    %668 = vector.load %arg19[%c0_448, %c0_449] : memref<2x32xf32, #tpu.memory_space<vmem>>, vector<2x32xf32>
    %c0_450 = arith.constant 0 : index
    %c0_451 = arith.constant 0 : index
    %669 = vector.load %arg10[%c0_450, %c0_451] : memref<32x64xf32, #tpu.memory_space<vmem>>, vector<32x64xf32>
    %cst_452 = arith.constant dense<0.000000e+00> : vector<2x64xf32>
    %670 = tpu.matmul %668, %669, %cst_452 {dimension_numbers = #tpu.dot_dimension_numbers<[1], [0], [0], [1], [0, 0, 1, 1], [], []>} : vector<2x32xf32>, vector<32x64xf32>, vector<2x64xf32> -> vector<2x64xf32>
    %c0_453 = arith.constant 0 : index
    %c0_454 = arith.constant 0 : index
    %671 = vector.load %arg11[%c0_453, %c0_454] : memref<1x64xf32, #tpu.memory_space<vmem>>, vector<1x64xf32>
    %672 = vector.broadcast %671 : vector<1x64xf32> to vector<2x64xf32>
    %673 = arith.addf %670, %672 : vector<2x64xf32>
    %cst_455 = arith.constant 0.000000e+00 : f32
    %674 = vector.broadcast %cst_455 : f32 to vector<2x64xf32>
    %675 = arith.maximumf %673, %674 : vector<2x64xf32>
    %c0_456 = arith.constant 0 : index
    %c0_457 = arith.constant 0 : index
    %676 = vector.load %arg12[%c0_456, %c0_457] : memref<64x8xf32, #tpu.memory_space<vmem>>, vector<64x8xf32>
    %cst_458 = arith.constant dense<0.000000e+00> : vector<2x8xf32>
    %677 = tpu.matmul %675, %676, %cst_458 {dimension_numbers = #tpu.dot_dimension_numbers<[1], [0], [0], [1], [0, 0, 1, 1], [], []>} : vector<2x64xf32>, vector<64x8xf32>, vector<2x8xf32> -> vector<2x8xf32>
    %c0_459 = arith.constant 0 : index
    %c0_460 = arith.constant 0 : index
    %678 = vector.load %arg13[%c0_459, %c0_460] : memref<1x8xf32, #tpu.memory_space<vmem>>, vector<1x8xf32>
    %679 = vector.broadcast %678 : vector<1x8xf32> to vector<2x8xf32>
    %680 = arith.addf %677, %679 : vector<2x8xf32>
    %c0_461 = arith.constant 0 : index
    %c0_462 = arith.constant 0 : index
    %681 = vector.load %arg14[%c0_461, %c0_462] : memref<2x8xf32, #tpu.memory_space<vmem>>, vector<2x8xf32>
    tpu.vector_store %arg14[%c0_461, %c0_462], %680 {strides = array<i32>} : memref<2x8xf32, #tpu.memory_space<vmem>>, vector<2x8xf32>,
    return
  }
  func.func @transform_0(%arg0: i32) -> (i32, i32, i32) {
    %c0_i32 = arith.constant 0 : i32
    %c0_i32_0 = arith.constant 0 : i32
    %c0_i32_1 = arith.constant 0 : i32
    return %c0_i32, %arg0, %c0_i32_0 : i32, i32, i32
  }
  func.func @transform_1(%arg0: i32) -> (i32, i32, i32) {
    %c0_i32 = arith.constant 0 : i32
    %c0_i32_0 = arith.constant 0 : i32
    %c0_i32_1 = arith.constant 0 : i32
    return %c0_i32, %arg0, %c0_i32_0 : i32, i32, i32
  }
  func.func @transform_2(%arg0: i32) -> (i32, i32, i32) {
    %c0_i32 = arith.constant 0 : i32
    %c0_i32_0 = arith.constant 0 : i32
    %c0_i32_1 = arith.constant 0 : i32
    return %c0_i32, %arg0, %c0_i32_0 : i32, i32, i32
  }
  func.func @transform_3(%arg0: i32) -> (i32, i32) {
    %c0_i32 = arith.constant 0 : i32
    %c0_i32_0 = arith.constant 0 : i32
    %c0_i32_1 = arith.constant 0 : i32
    return %c0_i32, %c0_i32_0 : i32, i32
  }
  func.func @transform_4(%arg0: i32) -> (i32, i32) {
    %c0_i32 = arith.constant 0 : i32
    %c0_i32_0 = arith.constant 0 : i32
    %c0_i32_1 = arith.constant 0 : i32
    return %c0_i32, %c0_i32_0 : i32, i32
  }
  func.func @transform_5(%arg0: i32) -> (i32, i32) {
    %c0_i32 = arith.constant 0 : i32
    %c0_i32_0 = arith.constant 0 : i32
    %c0_i32_1 = arith.constant 0 : i32
    return %c0_i32, %c0_i32_0 : i32, i32
  }
  func.func @transform_6(%arg0: i32) -> (i32, i32) {
    %c0_i32 = arith.constant 0 : i32
    %c0_i32_0 = arith.constant 0 : i32
    %c0_i32_1 = arith.constant 0 : i32
    return %c0_i32, %c0_i32_0 : i32, i32
  }
  func.func @transform_7(%arg0: i32) -> (i32, i32) {
    %c0_i32 = arith.constant 0 : i32
    %c0_i32_0 = arith.constant 0 : i32
    %c0_i32_1 = arith.constant 0 : i32
    return %c0_i32, %c0_i32_0 : i32, i32
  }
  func.func @transform_8(%arg0: i32) -> (i32, i32) {
    %c0_i32 = arith.constant 0 : i32
    %c0_i32_0 = arith.constant 0 : i32
    %c0_i32_1 = arith.constant 0 : i32
    return %c0_i32, %c0_i32_0 : i32, i32
  }
  func.func @transform_9(%arg0: i32) -> (i32, i32) {
    %c0_i32 = arith.constant 0 : i32
    %c0_i32_0 = arith.constant 0 : i32
    %c0_i32_1 = arith.constant 0 : i32
    return %c0_i32, %c0_i32_0 : i32, i32
  }
  func.func @transform_10(%arg0: i32) -> (i32, i32) {
    %c0_i32 = arith.constant 0 : i32
    %c0_i32_0 = arith.constant 0 : i32
    %c0_i32_1 = arith.constant 0 : i32
    return %c0_i32, %c0_i32_0 : i32, i32
  }
  func.func @transform_11(%arg0: i32) -> (i32, i32) {
    %c0_i32 = arith.constant 0 : i32
    %c0_i32_0 = arith.constant 0 : i32
    %c0_i32_1 = arith.constant 0 : i32
    return %c0_i32, %c0_i32_0 : i32, i32
  }
  func.func @transform_12(%arg0: i32) -> (i32, i32) {
    %c0_i32 = arith.constant 0 : i32
    %c0_i32_0 = arith.constant 0 : i32
    %c0_i32_1 = arith.constant 0 : i32
    return %c0_i32, %c0_i32_0 : i32, i32
  }
  func.func @transform_13(%arg0: i32) -> (i32, i32) {
    %c0_i32 = arith.constant 0 : i32
    %c0_i32_0 = arith.constant 0 : i32
    return %arg0, %c0_i32 : i32, i32
  }
  func.func @transform_14(%arg0: i32) -> (i32, i32, i32) {
    %c0_i32 = arith.constant 0 : i32
    %c0_i32_0 = arith.constant 0 : i32
    %c0_i32_1 = arith.constant 0 : i32
    return %c0_i32, %arg0, %c0_i32_0 : i32, i32, i32
  }
  func.func @transform_15(%arg0: i32) -> (i32, i32, i32) {
    %c0_i32 = arith.constant 0 : i32
    %c0_i32_0 = arith.constant 0 : i32
    %c0_i32_1 = arith.constant 0 : i32
    return %c0_i32, %arg0, %c0_i32_0 : i32, i32, i32
  }
}

</mosaic_0001>

<llo_original>
// kernel: tpu_custom_call.1
$region0: #{tpu_custom_call.1}
  #allocation0 [shape = 'u32[]', space=smem, size = 0x4, offset = 0x4, fixed_abs, tag = 'smem constant byte address 0x4 - core index']
  #allocation1 [shape = 'u32[144,128]{1,0:T(1,128)}', space=vmem, size = 0x12000, scoped, tag = 'internal scratch']
  #allocation2 [shape = 'f32[8,2,32]{2,1,0:T(2,128)}', space=vmem, size = 0x2000, scoped, tag = 'scratch operand']
  #allocation3 [shape = 'f32[8,2,128]{2,1,0:T(2,128)}', space=vmem, size = 0x2000, scoped, tag = 'scratch operand']
  #allocation4 [shape = 'f32[2,32]{1,0:T(2,128)}', space=vmem, size = 0x400, scoped, tag = 'scratch operand']
  #allocation5 [shape = 'f32[2,32]{1,0:T(2,128)}', space=vmem, size = 0x400, scoped, tag = 'scratch operand']
  %s0 = inlined_call_operand.hbm [shape: f32[8,2,16], index: 0, kind: input, shape index: {}]
  %s1 = inlined_call_operand.hbm [shape: f32[2,2,32], index: 1, kind: input, shape index: {}]
  %s2 = inlined_call_operand.hbm [shape: f32[2,2,32], index: 2, kind: input, shape index: {}]
  %s3 = inlined_call_operand.hbm [shape: f32[16,128], index: 3, kind: input, shape index: {}]
  %s4 = inlined_call_operand.vmem [shape: f32[32,128], index: 4, kind: input, shape index: {}]
  %s5 = inlined_call_operand.vmem [shape: f32[1,128], index: 5, kind: input, shape index: {}]
  %s6 = inlined_call_operand.vmem [shape: f32[32,128], index: 6, kind: input, shape index: {}]
  %s7 = inlined_call_operand.vmem [shape: f32[32,128], index: 7, kind: input, shape index: {}]
  %s8 = inlined_call_operand.vmem [shape: f32[1,128], index: 8, kind: input, shape index: {}]
  %s9 = inlined_call_operand.hbm [shape: f32[32,64], index: 9, kind: input, shape index: {}]
  %s10 = inlined_call_operand.vmem [shape: f32[1,64], index: 10, kind: input, shape index: {}]
  %s11 = inlined_call_operand.vmem [shape: f32[64,8], index: 11, kind: input, shape index: {}]
  %s12 = inlined_call_operand.vmem [shape: f32[1,8], index: 12, kind: input, shape index: {}]
  %s13 = inlined_call_operand.hbm [shape: f32[2,8], index: 13, kind: output, shape index: {0}]
  %s14 = inlined_call_operand.hbm [shape: f32[2,2,32], index: 14, kind: output, shape index: {1}]
  %s15 = inlined_call_operand.hbm [shape: f32[2,2,32], index: 15, kind: output, shape index: {2}]
  %16 = xla_tuple %s13, %s14, %s15
  %s17 = sld [smem:[#allocation0]]
  $region98: #{tpu_custom_call.1} parent=0
    _
  %s19 = ssub.s32 1, %s17
  %s20 = scalar_select 0, %s19, %s17
  $region1: #{tpu_custom_call.1} parent=0
    #allocation6 [shape = 'u8[8192]{0}', space=vmem, size = 0x2000, scoped, tag = 'input window, operand 0, single buffered']
    #allocation7 [shape = 's32[1]{0}', space=sflag, size = 0x4, scoped, tag = 'scoped memory for tpu_custom_call.1']
    #allocation8 [shape = 's32[1]{0}', space=sflag, size = 0x4, scoped, tag = 'scoped memory for tpu_custom_call.1']
    #allocation9 [shape = 'u8[2048]{0}', space=vmem, size = 0x800, scoped, tag = 'input window, operand 1, single buffered']
    #allocation10 [shape = 's32[1]{0}', space=sflag, size = 0x4, scoped, tag = 'scoped memory for tpu_custom_call.1']
    #allocation11 [shape = 'u8[2048]{0}', space=vmem, size = 0x800, scoped, tag = 'input window, operand 2, single buffered']
    #allocation12 [shape = 'u8[8192]{0}', space=vmem, size = 0x2000, scoped, tag = 'input window, operand 3, single buffered']
    #allocation13 [shape = 's32[1]{0}', space=sflag, size = 0x4, scoped, tag = 'scoped memory for tpu_custom_call.1']
    #allocation14 [shape = 'u8[16384]{0}', space=vmem, size = 0x4000, scoped, tag = 'input window, operand 9, single buffered']
    #allocation15 [shape = 'u8[1024]{0}', space=vmem, size = 0x400, scoped, tag = 'output window, operand 0, single buffered']
    #allocation16 [shape = 'u8[2048]{0}', space=vmem, size = 0x800, scoped, tag = 'output window, operand 1, single buffered']
    #allocation17 [shape = 's32[1]{0}', space=sflag, size = 0x4, scoped, tag = 'scoped memory for tpu_custom_call.1']
    #allocation18 [shape = 'u8[2048]{0}', space=vmem, size = 0x800, scoped, tag = 'output window, operand 2, single buffered']
    %21 = vsyncpa [#allocation7], 0
    %22 = vsyncpa [#allocation10], 0
    %23 = vsyncpa [#allocation13], 0
    %24 = vsyncpa [#allocation8], 0
    %25 = vsyncpa [#allocation17], 0
    // Predicated region
    $region2: #{tpu_custom_call.1} parent=1 // pred_check
      _
    $region3: #{tpu_custom_call.1} parent=1 // pred_check_branch
      %27 = sbr.rel (0) target = $region5
    $region4: #{tpu_custom_call.1} parent=1 // pred_region
      %s29 = ssub.s32 256, 256
      %30 = vsyncadd [#allocation7], %s29
      %s31 = sshll.u32 [#allocation6], 4
      %s32 = int_to_ptr.vmem [resolvable:$true] %s31
      %37 = dma.hbm_to_vmem [thread:$0]  %s0, 256, %s32, [#allocation7], 32, 32, 2
    $region5: #{tpu_custom_call.1} parent=1 // pred_fallthru
      _
    // Predicated region
    $region6: #{tpu_custom_call.1} parent=1 // pred_check
      _
    $region7: #{tpu_custom_call.1} parent=1 // pred_check_branch
      %39 = sbr.rel (0) target = $region9
    $region8: #{tpu_custom_call.1} parent=1 // pred_region
      %s41 = ssub.s32 64, 64
      %42 = vsyncadd [#allocation10], %s41
      %s43 = sshll.u32 [#allocation9], 4
      %s44 = int_to_ptr.vmem [resolvable:$true] %s43
      %49 = dma.hbm_to_vmem [thread:$0]  %s1, 64, %s44, [#allocation10], 32, 32, 2
    $region9: #{tpu_custom_call.1} parent=1 // pred_fallthru
      _
    // Predicated region
    $region10: #{tpu_custom_call.1} parent=1 // pred_check
      _
    $region11: #{tpu_custom_call.1} parent=1 // pred_check_branch
      %51 = sbr.rel (0) target = $region13
    $region12: #{tpu_custom_call.1} parent=1 // pred_region
      %s53 = ssub.s32 64, 64
      %54 = vsyncadd [#allocation10], %s53
      %s55 = sshll.u32 [#allocation11], 4
      %s56 = int_to_ptr.vmem [resolvable:$true] %s55
      %61 = dma.hbm_to_vmem [thread:$0]  %s2, 64, %s56, [#allocation10], 32, 32, 2
    $region13: #{tpu_custom_call.1} parent=1 // pred_fallthru
      _
    // Predicated region
    $region14: #{tpu_custom_call.1} parent=1 // pred_check
      _
    $region15: #{tpu_custom_call.1} parent=1 // pred_check_branch
      %63 = sbr.rel (0) target = $region17
    $region16: #{tpu_custom_call.1} parent=1 // pred_region
      %s65 = ssub.s32 256, 256
      %66 = vsyncadd [#allocation13], %s65
      %s67 = sshll.u32 [#allocation12], 4
      %s68 = int_to_ptr.vmem [resolvable:$true] %s67
      %73 = dma.hbm_to_vmem [thread:$0]  %s3, 256, %s68, [#allocation13], 128, 128, 8
    $region17: #{tpu_custom_call.1} parent=1 // pred_fallthru
      _
    // Predicated region
    $region18: #{tpu_custom_call.1} parent=1 // pred_check
      _
    $region19: #{tpu_custom_call.1} parent=1 // pred_check_branch
      %75 = sbr.rel (0) target = $region21
    $region20: #{tpu_custom_call.1} parent=1 // pred_region
      _
    $region21: #{tpu_custom_call.1} parent=1 // pred_fallthru
      _
    // Predicated region
    $region22: #{tpu_custom_call.1} parent=1 // pred_check
      _
    $region23: #{tpu_custom_call.1} parent=1 // pred_check_branch
      %77 = sbr.rel (0) target = $region25
    $region24: #{tpu_custom_call.1} parent=1 // pred_region
      _
    $region25: #{tpu_custom_call.1} parent=1 // pred_fallthru
      _
    // Predicated region
    $region26: #{tpu_custom_call.1} parent=1 // pred_check
      _
    $region27: #{tpu_custom_call.1} parent=1 // pred_check_branch
      %79 = sbr.rel (0) target = $region29
    $region28: #{tpu_custom_call.1} parent=1 // pred_region
      _
    $region29: #{tpu_custom_call.1} parent=1 // pred_fallthru
      _
    // Predicated region
    $region30: #{tpu_custom_call.1} parent=1 // pred_check
      _
    $region31: #{tpu_custom_call.1} parent=1 // pred_check_branch
      %81 = sbr.rel (0) target = $region33
    $region32: #{tpu_custom_call.1} parent=1 // pred_region
      _
    $region33: #{tpu_custom_call.1} parent=1 // pred_fallthru
      _
    // Predicated region
    $region34: #{tpu_custom_call.1} parent=1 // pred_check
      _
    $region35: #{tpu_custom_call.1} parent=1 // pred_check_branch
      %83 = sbr.rel (0) target = $region37
    $region36: #{tpu_custom_call.1} parent=1 // pred_region
      _
    $region37: #{tpu_custom_call.1} parent=1 // pred_fallthru
      _
    // Predicated region
    $region38: #{tpu_custom_call.1} parent=1 // pred_check
      _
    $region39: #{tpu_custom_call.1} parent=1 // pred_check_branch
      %85 = sbr.rel (0) target = $region41
    $region40: #{tpu_custom_call.1} parent=1 // pred_region
      %s87 = ssub.s32 512, 512
      %88 = vsyncadd [#allocation13], %s87
      %s89 = sshll.u32 [#allocation14], 4
      %s90 = int_to_ptr.vmem [resolvable:$true] %s89
      %95 = dma.hbm_to_vmem [thread:$0]  %s9, 512, %s90, [#allocation13], 128, 128, 8
    $region41: #{tpu_custom_call.1} parent=1 // pred_fallthru
      _
    // Predicated region
    $region42: #{tpu_custom_call.1} parent=1 // pred_check
      _
    $region43: #{tpu_custom_call.1} parent=1 // pred_check_branch
      %97 = sbr.rel (0) target = $region45
    $region44: #{tpu_custom_call.1} parent=1 // pred_region
      _
    $region45: #{tpu_custom_call.1} parent=1 // pred_fallthru
      _
    // Predicated region
    $region46: #{tpu_custom_call.1} parent=1 // pred_check
      _
    $region47: #{tpu_custom_call.1} parent=1 // pred_check_branch
      %99 = sbr.rel (0) target = $region49
    $region48: #{tpu_custom_call.1} parent=1 // pred_region
      _
    $region49: #{tpu_custom_call.1} parent=1 // pred_fallthru
      _
    // Predicated region
    $region50: #{tpu_custom_call.1} parent=1 // pred_check
      _
    $region51: #{tpu_custom_call.1} parent=1 // pred_check_branch
      %101 = sbr.rel (0) target = $region53
    $region52: #{tpu_custom_call.1} parent=1 // pred_region
      _
    $region53: #{tpu_custom_call.1} parent=1 // pred_fallthru
      _
    // Predicated region
    $region54: #{tpu_custom_call.1} parent=1 // pred_check
      _
    $region55: #{tpu_custom_call.1} parent=1 // pred_check_branch
      %103 = sbr.rel (0) target = $region57
    $region56: #{tpu_custom_call.1} parent=1 // pred_region
      %104 = dma.done [#allocation7], 256
    $region57: #{tpu_custom_call.1} parent=1 // pred_fallthru
      _
    // Predicated region
    $region58: #{tpu_custom_call.1} parent=1 // pred_check
      _
    $region59: #{tpu_custom_call.1} parent=1 // pred_check_branch
      %106 = sbr.rel (0) target = $region61
    $region60: #{tpu_custom_call.1} parent=1 // pred_region
      %107 = dma.done [#allocation10], 64
    $region61: #{tpu_custom_call.1} parent=1 // pred_fallthru
      _
    // Predicated region
    $region62: #{tpu_custom_call.1} parent=1 // pred_check
      _
    $region63: #{tpu_custom_call.1} parent=1 // pred_check_branch
      %109 = sbr.rel (0) target = $region65
    $region64: #{tpu_custom_call.1} parent=1 // pred_region
      %110 = dma.done [#allocation10], 64
    $region65: #{tpu_custom_call.1} parent=1 // pred_fallthru
      _
    // Predicated region
    $region66: #{tpu_custom_call.1} parent=1 // pred_check
      _
    $region67: #{tpu_custom_call.1} parent=1 // pred_check_branch
      %112 = sbr.rel (0) target = $region69
    $region68: #{tpu_custom_call.1} parent=1 // pred_region
      %113 = dma.done [#allocation13], 256
    $region69: #{tpu_custom_call.1} parent=1 // pred_fallthru
      _
    // Predicated region
    $region70: #{tpu_custom_call.1} parent=1 // pred_check
      _
    $region71: #{tpu_custom_call.1} parent=1 // pred_check_branch
      %115 = sbr.rel (0) target = $region73
    $region72: #{tpu_custom_call.1} parent=1 // pred_region
      %116 = dma.done [#allocation13], 512
    $region73: #{tpu_custom_call.1} parent=1 // pred_fallthru
      _
    %v117 = vld [vmem:[#allocation6] sm:$0x3]
    %v118 = vld [vmem:[#allocation12] sm:$0xff]
    %v119 = vld [vmem:[#allocation12 + $0x8] sm:$0xff]
    %v120 = vld [vmem:[%s5] sm:$0x1]
    %v122 = vlaneseq
    %v123 = vshrl.u32 %v122, 7
    %v124 = vsub.s32 0, %v123
    %v125 = vrot.slane %v120, %v124
    %vm127 = vcmask 130048
    %v129 = vsel %vm127, %v117, 0
    %131 = vmatprep.subr.mxu0 0.0
    %132 = vmatpush1.msra.mxu0 %v118
    %133 = vmatprep.subr.mxu0 0.0
    %134 = vmatpush1.msra.mxu0 %v119
    %135 = vmatprep.subr.mxu0 0.0
    %136 = vmatpush1.msra.mxu0 0.0
    %137 = vmatprep.subr.mxu0 0.0
    %138 = vmatpush1.msra.mxu0 0.0
    %139 = vmatprep.subr.mxu0 0.0
    %140 = vmatpush1.msra.mxu0 0.0
    %141 = vmatprep.subr.mxu0 0.0
    %142 = vmatpush1.msra.mxu0 0.0
    %143 = vmatprep.subr.mxu0 0.0
    %144 = vmatpush1.msra.mxu0 0.0
    %145 = vmatprep.subr.mxu0 0.0
    %146 = vmatpush1.msra.mxu0 0.0
    %147 = vmatprep.subr.mxu0 0.0
    %148 = vmatpush1.msra.mxu0 0.0
    %149 = vmatprep.subr.mxu0 0.0
    %150 = vmatpush1.msra.mxu0 0.0
    %151 = vmatprep.subr.mxu0 0.0
    %152 = vmatpush1.msra.mxu0 0.0
    %153 = vmatprep.subr.mxu0 0.0
    %154 = vmatpush1.msra.mxu0 0.0
    %155 = vmatprep.subr.mxu0 0.0
    %156 = vmatpush1.msra.mxu0 0.0
    %157 = vmatprep.subr.mxu0 0.0
    %158 = vmatpush1.msra.mxu0 0.0
    %159 = vmatprep.subr.mxu0 0.0
    %160 = vmatpush1.msra.mxu0 0.0
    %161 = vmatprep.subr.mxu0 0.0
    %162 = vmatpush1.msra.mxu0 0.0
    %163 = vmatprep.subr.mxu0 0.0
    %164 = vmatpush1.msra.mxu0 0.0
    %165 = vmatprep.subr.mxu0 0.0
    %166 = vmatpush1.msra.mxu0 0.0
    %167 = vmatprep.subr.mxu0 0.0
    %168 = vmatpush1.msra.mxu0 0.0
    %169 = vmatprep.subr.mxu0 0.0
    %170 = vmatpush1.msra.mxu0 0.0
    %171 = vmatprep.subr.mxu0 0.0
    %172 = vmatpush1.msra.mxu0 0.0
    %173 = vmatprep.subr.mxu0 0.0
    %174 = vmatpush1.msra.mxu0 0.0
    %175 = vmatprep.subr.mxu0 0.0
    %176 = vmatpush1.msra.mxu0 0.0
    %177 = vmatprep.subr.mxu0 0.0
    %178 = vmatpush1.msra.mxu0 0.0
    %179 = vmatprep.subr.mxu0 0.0
    %180 = vmatpush1.msra.mxu0 0.0
    %181 = vmatprep.subr.mxu0 0.0
    %182 = vmatpush1.msra.mxu0 0.0
    %183 = vmatprep.subr.mxu0 0.0
    %184 = vmatpush1.msra.mxu0 0.0
    %185 = vmatprep.subr.mxu0 0.0
    %186 = vmatpush1.msra.mxu0 0.0
    %187 = vmatprep.subr.mxu0 0.0
    %188 = vmatpush1.msra.mxu0 0.0
    %189 = vmatprep.subr.mxu0 0.0
    %190 = vmatpush1.msra.mxu0 0.0
    %191 = vmatprep.subr.mxu0 0.0
    %192 = vmatpush1.msra.mxu0 0.0
    %193 = vmatprep.subr.mxu0 0.0
    %194 = vmatpush1.msra.mxu0 0.0
    %195 = vmatprep.mubr.f32.mxu0 0.0
    %196 = vmatmul.mubr.f32.gmra.mrb[0].mxu0 %v129
    %v197 = vpop.f32.mrb[0].mxu0
    %v198 = vadd.f32 %v125, %v197
    %v199 = vpop.f32.mrb[0].mxu0
    %200 = vdwg.mxu0
    %201 = vst [vmem:[#allocation3] sm:$0x3] %v198
    %s202 = scalar_lea.vmem [#allocation6], 2
    %v203 = vld [vmem:[%s202] sm:$0x3]
    %v204 = vld [vmem:[#allocation12] sm:$0xff]
    %v205 = vld [vmem:[#allocation12 + $0x8] sm:$0xff]
    %v206 = vld [vmem:[%s5] sm:$0x1]
    %v208 = vlaneseq
    %v209 = vshrl.u32 %v208, 7
    %v210 = vsub.s32 0, %v209
    %v211 = vrot.slane %v206, %v210
    %v214 = vsel %vm127, %v203, 0
    %216 = vmatprep.subr.mxu0 0.0
    %217 = vmatpush1.msra.mxu0 %v204
    %218 = vmatprep.subr.mxu0 0.0
    %219 = vmatpush1.msra.mxu0 %v205
    %220 = vmatprep.subr.mxu0 0.0
    %221 = vmatpush1.msra.mxu0 0.0
    %222 = vmatprep.subr.mxu0 0.0
    %223 = vmatpush1.msra.mxu0 0.0
    %224 = vmatprep.subr.mxu0 0.0
    %225 = vmatpush1.msra.mxu0 0.0
    %226 = vmatprep.subr.mxu0 0.0
    %227 = vmatpush1.msra.mxu0 0.0
    %228 = vmatprep.subr.mxu0 0.0
    %229 = vmatpush1.msra.mxu0 0.0
    %230 = vmatprep.subr.mxu0 0.0
    %231 = vmatpush1.msra.mxu0 0.0
    %232 = vmatprep.subr.mxu0 0.0
    %233 = vmatpush1.msra.mxu0 0.0
    %234 = vmatprep.subr.mxu0 0.0
    %235 = vmatpush1.msra.mxu0 0.0
    %236 = vmatprep.subr.mxu0 0.0
    %237 = vmatpush1.msra.mxu0 0.0
    %238 = vmatprep.subr.mxu0 0.0
    %239 = vmatpush1.msra.mxu0 0.0
    %240 = vmatprep.subr.mxu0 0.0
    %241 = vmatpush1.msra.mxu0 0.0
    %242 = vmatprep.subr.mxu0 0.0
    %243 = vmatpush1.msra.mxu0 0.0
    %244 = vmatprep.subr.mxu0 0.0
    %245 = vmatpush1.msra.mxu0 0.0
    %246 = vmatprep.subr.mxu0 0.0
    %247 = vmatpush1.msra.mxu0 0.0
    %248 = vmatprep.subr.mxu0 0.0
    %249 = vmatpush1.msra.mxu0 0.0
    %250 = vmatprep.subr.mxu0 0.0
    %251 = vmatpush1.msra.mxu0 0.0
    %252 = vmatprep.subr.mxu0 0.0
    %253 = vmatpush1.msra.mxu0 0.0
    %254 = vmatprep.subr.mxu0 0.0
    %255 = vmatpush1.msra.mxu0 0.0
    %256 = vmatprep.subr.mxu0 0.0
    %257 = vmatpush1.msra.mxu0 0.0
    %258 = vmatprep.subr.mxu0 0.0
    %259 = vmatpush1.msra.mxu0 0.0
    %260 = vmatprep.subr.mxu0 0.0
    %261 = vmatpush1.msra.mxu0 0.0
    %262 = vmatprep.subr.mxu0 0.0
    %263 = vmatpush1.msra.mxu0 0.0
    %264 = vmatprep.subr.mxu0 0.0
    %265 = vmatpush1.msra.mxu0 0.0
    %266 = vmatprep.subr.mxu0 0.0
    %267 = vmatpush1.msra.mxu0 0.0
    %268 = vmatprep.subr.mxu0 0.0
    %269 = vmatpush1.msra.mxu0 0.0
    %270 = vmatprep.subr.mxu0 0.0
    %271 = vmatpush1.msra.mxu0 0.0
    %272 = vmatprep.subr.mxu0 0.0
    %273 = vmatpush1.msra.mxu0 0.0
    %274 = vmatprep.subr.mxu0 0.0
    %275 = vmatpush1.msra.mxu0 0.0
    %276 = vmatprep.subr.mxu0 0.0
    %277 = vmatpush1.msra.mxu0 0.0
    %278 = vmatprep.subr.mxu0 0.0
    %279 = vmatpush1.msra.mxu0 0.0
    %280 = vmatprep.mubr.f32.mxu0 0.0
    %281 = vmatmul.mubr.f32.gmra.mrb[0].mxu0 %v214
    %v282 = vpop.f32.mrb[0].mxu0
    %v283 = vadd.f32 %v211, %v282
    %v284 = vpop.f32.mrb[0].mxu0
    %285 = vdwg.mxu0
    %s286 = scalar_lea.vmem [#allocation3], 2
    %287 = vst [vmem:[%s286] sm:$0x3] %v283
    %s288 = scalar_lea.vmem [#allocation6], 4
    %v289 = vld [vmem:[%s288] sm:$0x3]
    %v290 = vld [vmem:[#allocation12] sm:$0xff]
    %v291 = vld [vmem:[#allocation12 + $0x8] sm:$0xff]
    %v292 = vld [vmem:[%s5] sm:$0x1]
    %v294 = vlaneseq
    %v295 = vshrl.u32 %v294, 7
    %v296 = vsub.s32 0, %v295
    %v297 = vrot.slane %v292, %v296
    %v300 = vsel %vm127, %v289, 0
    %302 = vmatprep.subr.mxu0 0.0
    %303 = vmatpush1.msra.mxu0 %v290
    %304 = vmatprep.subr.mxu0 0.0
    %305 = vmatpush1.msra.mxu0 %v291
    %306 = vmatprep.subr.mxu0 0.0
    %307 = vmatpush1.msra.mxu0 0.0
    %308 = vmatprep.subr.mxu0 0.0
    %309 = vmatpush1.msra.mxu0 0.0
    %310 = vmatprep.subr.mxu0 0.0
    %311 = vmatpush1.msra.mxu0 0.0
    %312 = vmatprep.subr.mxu0 0.0
    %313 = vmatpush1.msra.mxu0 0.0
    %314 = vmatprep.subr.mxu0 0.0
    %315 = vmatpush1.msra.mxu0 0.0
    %316 = vmatprep.subr.mxu0 0.0
    %317 = vmatpush1.msra.mxu0 0.0
    %318 = vmatprep.subr.mxu0 0.0
    %319 = vmatpush1.msra.mxu0 0.0
    %320 = vmatprep.subr.mxu0 0.0
    %321 = vmatpush1.msra.mxu0 0.0
    %322 = vmatprep.subr.mxu0 0.0
    %323 = vmatpush1.msra.mxu0 0.0
    %324 = vmatprep.subr.mxu0 0.0
    %325 = vmatpush1.msra.mxu0 0.0
    %326 = vmatprep.subr.mxu0 0.0
    %327 = vmatpush1.msra.mxu0 0.0
    %328 = vmatprep.subr.mxu0 0.0
    %329 = vmatpush1.msra.mxu0 0.0
    %330 = vmatprep.subr.mxu0 0.0
    %331 = vmatpush1.msra.mxu0 0.0
    %332 = vmatprep.subr.mxu0 0.0
    %333 = vmatpush1.msra.mxu0 0.0
    %334 = vmatprep.subr.mxu0 0.0
    %335 = vmatpush1.msra.mxu0 0.0
    %336 = vmatprep.subr.mxu0 0.0
    %337 = vmatpush1.msra.mxu0 0.0
    %338 = vmatprep.subr.mxu0 0.0
    %339 = vmatpush1.msra.mxu0 0.0
    %340 = vmatprep.subr.mxu0 0.0
    %341 = vmatpush1.msra.mxu0 0.0
    %342 = vmatprep.subr.mxu0 0.0
    %343 = vmatpush1.msra.mxu0 0.0
    %344 = vmatprep.subr.mxu0 0.0
    %345 = vmatpush1.msra.mxu0 0.0
    %346 = vmatprep.subr.mxu0 0.0
    %347 = vmatpush1.msra.mxu0 0.0
    %348 = vmatprep.subr.mxu0 0.0
    %349 = vmatpush1.msra.mxu0 0.0
    %350 = vmatprep.subr.mxu0 0.0
    %351 = vmatpush1.msra.mxu0 0.0
    %352 = vmatprep.subr.mxu0 0.0
    %353 = vmatpush1.msra.mxu0 0.0
    %354 = vmatprep.subr.mxu0 0.0
    %355 = vmatpush1.msra.mxu0 0.0
    %356 = vmatprep.subr.mxu0 0.0
    %357 = vmatpush1.msra.mxu0 0.0
    %358 = vmatprep.subr.mxu0 0.0
    %359 = vmatpush1.msra.mxu0 0.0
    %360 = vmatprep.subr.mxu0 0.0
    %361 = vmatpush1.msra.mxu0 0.0
    %362 = vmatprep.subr.mxu0 0.0
    %363 = vmatpush1.msra.mxu0 0.0
    %364 = vmatprep.subr.mxu0 0.0
    %365 = vmatpush1.msra.mxu0 0.0
    %366 = vmatprep.mubr.f32.mxu0 0.0
    %367 = vmatmul.mubr.f32.gmra.mrb[0].mxu0 %v300
    %v368 = vpop.f32.mrb[0].mxu0
    %v369 = vadd.f32 %v297, %v368
    %v370 = vpop.f32.mrb[0].mxu0
    %371 = vdwg.mxu0
    %s372 = scalar_lea.vmem [#allocation3], 4
    %373 = vst [vmem:[%s372] sm:$0x3] %v369
    %s374 = scalar_lea.vmem [#allocation6], 6
    %v375 = vld [vmem:[%s374] sm:$0x3]
    %v376 = vld [vmem:[#allocation12] sm:$0xff]
    %v377 = vld [vmem:[#allocation12 + $0x8] sm:$0xff]
    %v378 = vld [vmem:[%s5] sm:$0x1]
    %v380 = vlaneseq
    %v381 = vshrl.u32 %v380, 7
    %v382 = vsub.s32 0, %v381
    %v383 = vrot.slane %v378, %v382
    %v386 = vsel %vm127, %v375, 0
    %388 = vmatprep.subr.mxu0 0.0
    %389 = vmatpush1.msra.mxu0 %v376
    %390 = vmatprep.subr.mxu0 0.0
    %391 = vmatpush1.msra.mxu0 %v377
    %392 = vmatprep.subr.mxu0 0.0
    %393 = vmatpush1.msra.mxu0 0.0
    %394 = vmatprep.subr.mxu0 0.0
    %395 = vmatpush1.msra.mxu0 0.0
    %396 = vmatprep.subr.mxu0 0.0
    %397 = vmatpush1.msra.mxu0 0.0
    %398 = vmatprep.subr.mxu0 0.0
    %399 = vmatpush1.msra.mxu0 0.0
    %400 = vmatprep.subr.mxu0 0.0
    %401 = vmatpush1.msra.mxu0 0.0
    %402 = vmatprep.subr.mxu0 0.0
    %403 = vmatpush1.msra.mxu0 0.0
    %404 = vmatprep.subr.mxu0 0.0
    %405 = vmatpush1.msra.mxu0 0.0
    %406 = vmatprep.subr.mxu0 0.0
    %407 = vmatpush1.msra.mxu0 0.0
    %408 = vmatprep.subr.mxu0 0.0
    %409 = vmatpush1.msra.mxu0 0.0
    %410 = vmatprep.subr.mxu0 0.0
    %411 = vmatpush1.msra.mxu0 0.0
    %412 = vmatprep.subr.mxu0 0.0
    %413 = vmatpush1.msra.mxu0 0.0
    %414 = vmatprep.subr.mxu0 0.0
    %415 = vmatpush1.msra.mxu0 0.0
    %416 = vmatprep.subr.mxu0 0.0
    %417 = vmatpush1.msra.mxu0 0.0
    %418 = vmatprep.subr.mxu0 0.0
    %419 = vmatpush1.msra.mxu0 0.0
    %420 = vmatprep.subr.mxu0 0.0
    %421 = vmatpush1.msra.mxu0 0.0
    %422 = vmatprep.subr.mxu0 0.0
    %423 = vmatpush1.msra.mxu0 0.0
    %424 = vmatprep.subr.mxu0 0.0
    %425 = vmatpush1.msra.mxu0 0.0
    %426 = vmatprep.subr.mxu0 0.0
    %427 = vmatpush1.msra.mxu0 0.0
    %428 = vmatprep.subr.mxu0 0.0
    %429 = vmatpush1.msra.mxu0 0.0
    %430 = vmatprep.subr.mxu0 0.0
    %431 = vmatpush1.msra.mxu0 0.0
    %432 = vmatprep.subr.mxu0 0.0
    %433 = vmatpush1.msra.mxu0 0.0
    %434 = vmatprep.subr.mxu0 0.0
    %435 = vmatpush1.msra.mxu0 0.0
    %436 = vmatprep.subr.mxu0 0.0
    %437 = vmatpush1.msra.mxu0 0.0
    %438 = vmatprep.subr.mxu0 0.0
    %439 = vmatpush1.msra.mxu0 0.0
    %440 = vmatprep.subr.mxu0 0.0
    %441 = vmatpush1.msra.mxu0 0.0
    %442 = vmatprep.subr.mxu0 0.0
    %443 = vmatpush1.msra.mxu0 0.0
    %444 = vmatprep.subr.mxu0 0.0
    %445 = vmatpush1.msra.mxu0 0.0
    %446 = vmatprep.subr.mxu0 0.0
    %447 = vmatpush1.msra.mxu0 0.0
    %448 = vmatprep.subr.mxu0 0.0
    %449 = vmatpush1.msra.mxu0 0.0
    %450 = vmatprep.subr.mxu0 0.0
    %451 = vmatpush1.msra.mxu0 0.0
    %452 = vmatprep.mubr.f32.mxu0 0.0
    %453 = vmatmul.mubr.f32.gmra.mrb[0].mxu0 %v386
    %v454 = vpop.f32.mrb[0].mxu0
    %v455 = vadd.f32 %v383, %v454
    %v456 = vpop.f32.mrb[0].mxu0
    %457 = vdwg.mxu0
    %s458 = scalar_lea.vmem [#allocation3], 6
    %459 = vst [vmem:[%s458] sm:$0x3] %v455
    %s460 = scalar_lea.vmem [#allocation6], 8
    %v461 = vld [vmem:[%s460] sm:$0x3]
    %v462 = vld [vmem:[#allocation12] sm:$0xff]
    %v463 = vld [vmem:[#allocation12 + $0x8] sm:$0xff]
    %v464 = vld [vmem:[%s5] sm:$0x1]
    %v466 = vlaneseq
    %v467 = vshrl.u32 %v466, 7
    %v468 = vsub.s32 0, %v467
    %v469 = vrot.slane %v464, %v468
    %v472 = vsel %vm127, %v461, 0
    %474 = vmatprep.subr.mxu0 0.0
    %475 = vmatpush1.msra.mxu0 %v462
    %476 = vmatprep.subr.mxu0 0.0
    %477 = vmatpush1.msra.mxu0 %v463
    %478 = vmatprep.subr.mxu0 0.0
    %479 = vmatpush1.msra.mxu0 0.0
    %480 = vmatprep.subr.mxu0 0.0
    %481 = vmatpush1.msra.mxu0 0.0
    %482 = vmatprep.subr.mxu0 0.0
    %483 = vmatpush1.msra.mxu0 0.0
    %484 = vmatprep.subr.mxu0 0.0
    %485 = vmatpush1.msra.mxu0 0.0
    %486 = vmatprep.subr.mxu0 0.0
    %487 = vmatpush1.msra.mxu0 0.0
    %488 = vmatprep.subr.mxu0 0.0
    %489 = vmatpush1.msra.mxu0 0.0
    %490 = vmatprep.subr.mxu0 0.0
    %491 = vmatpush1.msra.mxu0 0.0
    %492 = vmatprep.subr.mxu0 0.0
    %493 = vmatpush1.msra.mxu0 0.0
    %494 = vmatprep.subr.mxu0 0.0
    %495 = vmatpush1.msra.mxu0 0.0
    %496 = vmatprep.subr.mxu0 0.0
    %497 = vmatpush1.msra.mxu0 0.0
    %498 = vmatprep.subr.mxu0 0.0
    %499 = vmatpush1.msra.mxu0 0.0
    %500 = vmatprep.subr.mxu0 0.0
    %501 = vmatpush1.msra.mxu0 0.0
    %502 = vmatprep.subr.mxu0 0.0
    %503 = vmatpush1.msra.mxu0 0.0
    %504 = vmatprep.subr.mxu0 0.0
    %505 = vmatpush1.msra.mxu0 0.0
    %506 = vmatprep.subr.mxu0 0.0
    %507 = vmatpush1.msra.mxu0 0.0
    %508 = vmatprep.subr.mxu0 0.0
    %509 = vmatpush1.msra.mxu0 0.0
    %510 = vmatprep.subr.mxu0 0.0
    %511 = vmatpush1.msra.mxu0 0.0
    %512 = vmatprep.subr.mxu0 0.0
    %513 = vmatpush1.msra.mxu0 0.0
    %514 = vmatprep.subr.mxu0 0.0
    %515 = vmatpush1.msra.mxu0 0.0
    %516 = vmatprep.subr.mxu0 0.0
    %517 = vmatpush1.msra.mxu0 0.0
    %518 = vmatprep.subr.mxu0 0.0
    %519 = vmatpush1.msra.mxu0 0.0
    %520 = vmatprep.subr.mxu0 0.0
    %521 = vmatpush1.msra.mxu0 0.0
    %522 = vmatprep.subr.mxu0 0.0
    %523 = vmatpush1.msra.mxu0 0.0
    %524 = vmatprep.subr.mxu0 0.0
    %525 = vmatpush1.msra.mxu0 0.0
    %526 = vmatprep.subr.mxu0 0.0
    %527 = vmatpush1.msra.mxu0 0.0
    %528 = vmatprep.subr.mxu0 0.0
    %529 = vmatpush1.msra.mxu0 0.0
    %530 = vmatprep.subr.mxu0 0.0
    %531 = vmatpush1.msra.mxu0 0.0
    %532 = vmatprep.subr.mxu0 0.0
    %533 = vmatpush1.msra.mxu0 0.0
    %534 = vmatprep.subr.mxu0 0.0
    %535 = vmatpush1.msra.mxu0 0.0
    %536 = vmatprep.subr.mxu0 0.0
    %537 = vmatpush1.msra.mxu0 0.0
    %538 = vmatprep.mubr.f32.mxu0 0.0
    %539 = vmatmul.mubr.f32.gmra.mrb[0].mxu0 %v472
    %v540 = vpop.f32.mrb[0].mxu0
    %v541 = vadd.f32 %v469, %v540
    %v542 = vpop.f32.mrb[0].mxu0
    %543 = vdwg.mxu0
    %s544 = scalar_lea.vmem [#allocation3], 8
    %545 = vst [vmem:[%s544] sm:$0x3] %v541
    %s546 = scalar_lea.vmem [#allocation6], 10
    %v547 = vld [vmem:[%s546] sm:$0x3]
    %v548 = vld [vmem:[#allocation12] sm:$0xff]
    %v549 = vld [vmem:[#allocation12 + $0x8] sm:$0xff]
    %v550 = vld [vmem:[%s5] sm:$0x1]
    %v552 = vlaneseq
    %v553 = vshrl.u32 %v552, 7
    %v554 = vsub.s32 0, %v553
    %v555 = vrot.slane %v550, %v554
    %v558 = vsel %vm127, %v547, 0
    %560 = vmatprep.subr.mxu0 0.0
    %561 = vmatpush1.msra.mxu0 %v548
    %562 = vmatprep.subr.mxu0 0.0
    %563 = vmatpush1.msra.mxu0 %v549
    %564 = vmatprep.subr.mxu0 0.0
    %565 = vmatpush1.msra.mxu0 0.0
    %566 = vmatprep.subr.mxu0 0.0
    %567 = vmatpush1.msra.mxu0 0.0
    %568 = vmatprep.subr.mxu0 0.0
    %569 = vmatpush1.msra.mxu0 0.0
    %570 = vmatprep.subr.mxu0 0.0
    %571 = vmatpush1.msra.mxu0 0.0
    %572 = vmatprep.subr.mxu0 0.0
    %573 = vmatpush1.msra.mxu0 0.0
    %574 = vmatprep.subr.mxu0 0.0
    %575 = vmatpush1.msra.mxu0 0.0
    %576 = vmatprep.subr.mxu0 0.0
    %577 = vmatpush1.msra.mxu0 0.0
    %578 = vmatprep.subr.mxu0 0.0
    %579 = vmatpush1.msra.mxu0 0.0
    %580 = vmatprep.subr.mxu0 0.0
    %581 = vmatpush1.msra.mxu0 0.0
    %582 = vmatprep.subr.mxu0 0.0
    %583 = vmatpush1.msra.mxu0 0.0
    %584 = vmatprep.subr.mxu0 0.0
    %585 = vmatpush1.msra.mxu0 0.0
    %586 = vmatprep.subr.mxu0 0.0
    %587 = vmatpush1.msra.mxu0 0.0
    %588 = vmatprep.subr.mxu0 0.0
    %589 = vmatpush1.msra.mxu0 0.0
    %590 = vmatprep.subr.mxu0 0.0
    %591 = vmatpush1.msra.mxu0 0.0
    %592 = vmatprep.subr.mxu0 0.0
    %593 = vmatpush1.msra.mxu0 0.0
    %594 = vmatprep.subr.mxu0 0.0
    %595 = vmatpush1.msra.mxu0 0.0
    %596 = vmatprep.subr.mxu0 0.0
    %597 = vmatpush1.msra.mxu0 0.0
    %598 = vmatprep.subr.mxu0 0.0
    %599 = vmatpush1.msra.mxu0 0.0
    %600 = vmatprep.subr.mxu0 0.0
    %601 = vmatpush1.msra.mxu0 0.0
    %602 = vmatprep.subr.mxu0 0.0
    %603 = vmatpush1.msra.mxu0 0.0
    %604 = vmatprep.subr.mxu0 0.0
    %605 = vmatpush1.msra.mxu0 0.0
    %606 = vmatprep.subr.mxu0 0.0
    %607 = vmatpush1.msra.mxu0 0.0
    %608 = vmatprep.subr.mxu0 0.0
    %609 = vmatpush1.msra.mxu0 0.0
    %610 = vmatprep.subr.mxu0 0.0
    %611 = vmatpush1.msra.mxu0 0.0
    %612 = vmatprep.subr.mxu0 0.0
    %613 = vmatpush1.msra.mxu0 0.0
    %614 = vmatprep.subr.mxu0 0.0
    %615 = vmatpush1.msra.mxu0 0.0
    %616 = vmatprep.subr.mxu0 0.0
    %617 = vmatpush1.msra.mxu0 0.0
    %618 = vmatprep.subr.mxu0 0.0
    %619 = vmatpush1.msra.mxu0 0.0
    %620 = vmatprep.subr.mxu0 0.0
    %621 = vmatpush1.msra.mxu0 0.0
    %622 = vmatprep.subr.mxu0 0.0
    %623 = vmatpush1.msra.mxu0 0.0
    %624 = vmatprep.mubr.f32.mxu0 0.0
    %625 = vmatmul.mubr.f32.gmra.mrb[0].mxu0 %v558
    %v626 = vpop.f32.mrb[0].mxu0
    %v627 = vadd.f32 %v555, %v626
    %v628 = vpop.f32.mrb[0].mxu0
    %629 = vdwg.mxu0
    %s630 = scalar_lea.vmem [#allocation3], 10
    %631 = vst [vmem:[%s630] sm:$0x3] %v627
    %s632 = scalar_lea.vmem [#allocation6], 12
    %v633 = vld [vmem:[%s632] sm:$0x3]
    %v634 = vld [vmem:[#allocation12] sm:$0xff]
    %v635 = vld [vmem:[#allocation12 + $0x8] sm:$0xff]
    %v636 = vld [vmem:[%s5] sm:$0x1]
    %v638 = vlaneseq
    %v639 = vshrl.u32 %v638, 7
    %v640 = vsub.s32 0, %v639
    %v641 = vrot.slane %v636, %v640
    %v644 = vsel %vm127, %v633, 0
    %646 = vmatprep.subr.mxu0 0.0
    %647 = vmatpush1.msra.mxu0 %v634
    %648 = vmatprep.subr.mxu0 0.0
    %649 = vmatpush1.msra.mxu0 %v635
    %650 = vmatprep.subr.mxu0 0.0
    %651 = vmatpush1.msra.mxu0 0.0
    %652 = vmatprep.subr.mxu0 0.0
    %653 = vmatpush1.msra.mxu0 0.0
    %654 = vmatprep.subr.mxu0 0.0
    %655 = vmatpush1.msra.mxu0 0.0
    %656 = vmatprep.subr.mxu0 0.0
    %657 = vmatpush1.msra.mxu0 0.0
    %658 = vmatprep.subr.mxu0 0.0
    %659 = vmatpush1.msra.mxu0 0.0
    %660 = vmatprep.subr.mxu0 0.0
    %661 = vmatpush1.msra.mxu0 0.0
    %662 = vmatprep.subr.mxu0 0.0
    %663 = vmatpush1.msra.mxu0 0.0
    %664 = vmatprep.subr.mxu0 0.0
    %665 = vmatpush1.msra.mxu0 0.0
    %666 = vmatprep.subr.mxu0 0.0
    %667 = vmatpush1.msra.mxu0 0.0
    %668 = vmatprep.subr.mxu0 0.0
    %669 = vmatpush1.msra.mxu0 0.0
    %670 = vmatprep.subr.mxu0 0.0
    %671 = vmatpush1.msra.mxu0 0.0
    %672 = vmatprep.subr.mxu0 0.0
    %673 = vmatpush1.msra.mxu0 0.0
    %674 = vmatprep.subr.mxu0 0.0
    %675 = vmatpush1.msra.mxu0 0.0
    %676 = vmatprep.subr.mxu0 0.0
    %677 = vmatpush1.msra.mxu0 0.0
    %678 = vmatprep.subr.mxu0 0.0
    %679 = vmatpush1.msra.mxu0 0.0
    %680 = vmatprep.subr.mxu0 0.0
    %681 = vmatpush1.msra.mxu0 0.0
    %682 = vmatprep.subr.mxu0 0.0
    %683 = vmatpush1.msra.mxu0 0.0
    %684 = vmatprep.subr.mxu0 0.0
    %685 = vmatpush1.msra.mxu0 0.0
    %686 = vmatprep.subr.mxu0 0.0
    %687 = vmatpush1.msra.mxu0 0.0
    %688 = vmatprep.subr.mxu0 0.0
    %689 = vmatpush1.msra.mxu0 0.0
    %690 = vmatprep.subr.mxu0 0.0
    %691 = vmatpush1.msra.mxu0 0.0
    %692 = vmatprep.subr.mxu0 0.0
    %693 = vmatpush1.msra.mxu0 0.0
    %694 = vmatprep.subr.mxu0 0.0
    %695 = vmatpush1.msra.mxu0 0.0
    %696 = vmatprep.subr.mxu0 0.0
    %697 = vmatpush1.msra.mxu0 0.0
    %698 = vmatprep.subr.mxu0 0.0
    %699 = vmatpush1.msra.mxu0 0.0
    %700 = vmatprep.subr.mxu0 0.0
    %701 = vmatpush1.msra.mxu0 0.0
    %702 = vmatprep.subr.mxu0 0.0
    %703 = vmatpush1.msra.mxu0 0.0
    %704 = vmatprep.subr.mxu0 0.0
    %705 = vmatpush1.msra.mxu0 0.0
    %706 = vmatprep.subr.mxu0 0.0
    %707 = vmatpush1.msra.mxu0 0.0
    %708 = vmatprep.subr.mxu0 0.0
    %709 = vmatpush1.msra.mxu0 0.0
    %710 = vmatprep.mubr.f32.mxu0 0.0
    %711 = vmatmul.mubr.f32.gmra.mrb[0].mxu0 %v644
    %v712 = vpop.f32.mrb[0].mxu0
    %v713 = vadd.f32 %v641, %v712
    %v714 = vpop.f32.mrb[0].mxu0
    %715 = vdwg.mxu0
    %s716 = scalar_lea.vmem [#allocation3], 12
    %717 = vst [vmem:[%s716] sm:$0x3] %v713
    %s718 = scalar_lea.vmem [#allocation6], 14
    %v719 = vld [vmem:[%s718] sm:$0x3]
    %v720 = vld [vmem:[#allocation12] sm:$0xff]
    %v721 = vld [vmem:[#allocation12 + $0x8] sm:$0xff]
    %v722 = vld [vmem:[%s5] sm:$0x1]
    %v724 = vlaneseq
    %v725 = vshrl.u32 %v724, 7
    %v726 = vsub.s32 0, %v725
    %v727 = vrot.slane %v722, %v726
    %v730 = vsel %vm127, %v719, 0
    %732 = vmatprep.subr.mxu0 0.0
    %733 = vmatpush1.msra.mxu0 %v720
    %734 = vmatprep.subr.mxu0 0.0
    %735 = vmatpush1.msra.mxu0 %v721
    %736 = vmatprep.subr.mxu0 0.0
    %737 = vmatpush1.msra.mxu0 0.0
    %738 = vmatprep.subr.mxu0 0.0
    %739 = vmatpush1.msra.mxu0 0.0
    %740 = vmatprep.subr.mxu0 0.0
    %741 = vmatpush1.msra.mxu0 0.0
    %742 = vmatprep.subr.mxu0 0.0
    %743 = vmatpush1.msra.mxu0 0.0
    %744 = vmatprep.subr.mxu0 0.0
    %745 = vmatpush1.msra.mxu0 0.0
    %746 = vmatprep.subr.mxu0 0.0
    %747 = vmatpush1.msra.mxu0 0.0
    %748 = vmatprep.subr.mxu0 0.0
    %749 = vmatpush1.msra.mxu0 0.0
    %750 = vmatprep.subr.mxu0 0.0
    %751 = vmatpush1.msra.mxu0 0.0
    %752 = vmatprep.subr.mxu0 0.0
    %753 = vmatpush1.msra.mxu0 0.0
    %754 = vmatprep.subr.mxu0 0.0
    %755 = vmatpush1.msra.mxu0 0.0
    %756 = vmatprep.subr.mxu0 0.0
    %757 = vmatpush1.msra.mxu0 0.0
    %758 = vmatprep.subr.mxu0 0.0
    %759 = vmatpush1.msra.mxu0 0.0
    %760 = vmatprep.subr.mxu0 0.0
    %761 = vmatpush1.msra.mxu0 0.0
    %762 = vmatprep.subr.mxu0 0.0
    %763 = vmatpush1.msra.mxu0 0.0
    %764 = vmatprep.subr.mxu0 0.0
    %765 = vmatpush1.msra.mxu0 0.0
    %766 = vmatprep.subr.mxu0 0.0
    %767 = vmatpush1.msra.mxu0 0.0
    %768 = vmatprep.subr.mxu0 0.0
    %769 = vmatpush1.msra.mxu0 0.0
    %770 = vmatprep.subr.mxu0 0.0
    %771 = vmatpush1.msra.mxu0 0.0
    %772 = vmatprep.subr.mxu0 0.0
    %773 = vmatpush1.msra.mxu0 0.0
    %774 = vmatprep.subr.mxu0 0.0
    %775 = vmatpush1.msra.mxu0 0.0
    %776 = vmatprep.subr.mxu0 0.0
    %777 = vmatpush1.msra.mxu0 0.0
    %778 = vmatprep.subr.mxu0 0.0
    %779 = vmatpush1.msra.mxu0 0.0
    %780 = vmatprep.subr.mxu0 0.0
    %781 = vmatpush1.msra.mxu0 0.0
    %782 = vmatprep.subr.mxu0 0.0
    %783 = vmatpush1.msra.mxu0 0.0
    %784 = vmatprep.subr.mxu0 0.0
    %785 = vmatpush1.msra.mxu0 0.0
    %786 = vmatprep.subr.mxu0 0.0
    %787 = vmatpush1.msra.mxu0 0.0
    %788 = vmatprep.subr.mxu0 0.0
    %789 = vmatpush1.msra.mxu0 0.0
    %790 = vmatprep.subr.mxu0 0.0
    %791 = vmatpush1.msra.mxu0 0.0
    %792 = vmatprep.subr.mxu0 0.0
    %793 = vmatpush1.msra.mxu0 0.0
    %794 = vmatprep.subr.mxu0 0.0
    %795 = vmatpush1.msra.mxu0 0.0
    %796 = vmatprep.mubr.f32.mxu0 0.0
    %797 = vmatmul.mubr.f32.gmra.mrb[0].mxu0 %v730
    %v798 = vpop.f32.mrb[0].mxu0
    %v799 = vadd.f32 %v727, %v798
    %v800 = vpop.f32.mrb[0].mxu0
    %801 = vdwg.mxu0
    %s802 = scalar_lea.vmem [#allocation3], 14
    %803 = vst [vmem:[%s802] sm:$0x3] %v799
    %v804 = vld [vmem:[#allocation9] sm:$0x3]
    %vm805 = vcmask 254976
    %806 = vst.msk [vmem:[#allocation4] sm:$0x3] %vm805, %v804
    %v807 = vld [vmem:[#allocation11] sm:$0x3]
    %808 = vst.msk [vmem:[#allocation5] sm:$0x3] %vm805, %v807
    %v809 = vld [vmem:[#allocation3] sm:$0x3]
    %v810 = vld [vmem:[#allocation4] sm:$0x3]
    %v811 = vld [vmem:[%s4] sm:$0xff]
    %v812 = vld [vmem:[%s4 + $0x8] sm:$0xff]
    %v813 = vld [vmem:[%s4 + $0x10] sm:$0xff]
    %v814 = vld [vmem:[%s4 + $0x18] sm:$0xff]
    %vm815 = vcmask 261120
    %v817 = vsel %vm815, %v810, 0
    %819 = vmatprep.subr.mxu0 0.0
    %820 = vmatpush1.msra.mxu0 %v811
    %821 = vmatprep.subr.mxu0 0.0
    %822 = vmatpush1.msra.mxu0 %v812
    %823 = vmatprep.subr.mxu0 0.0
    %824 = vmatpush1.msra.mxu0 %v813
    %825 = vmatprep.subr.mxu0 0.0
    %826 = vmatpush1.msra.mxu0 %v814
    %827 = vmatprep.subr.mxu0 0.0
    %828 = vmatpush1.msra.mxu0 0.0
    %829 = vmatprep.subr.mxu0 0.0
    %830 = vmatpush1.msra.mxu0 0.0
    %831 = vmatprep.subr.mxu0 0.0
    %832 = vmatpush1.msra.mxu0 0.0
    %833 = vmatprep.subr.mxu0 0.0
    %834 = vmatpush1.msra.mxu0 0.0
    %835 = vmatprep.subr.mxu0 0.0
    %836 = vmatpush1.msra.mxu0 0.0
    %837 = vmatprep.subr.mxu0 0.0
    %838 = vmatpush1.msra.mxu0 0.0
    %839 = vmatprep.subr.mxu0 0.0
    %840 = vmatpush1.msra.mxu0 0.0
    %841 = vmatprep.subr.mxu0 0.0
    %842 = vmatpush1.msra.mxu0 0.0
    %843 = vmatprep.subr.mxu0 0.0
    %844 = vmatpush1.msra.mxu0 0.0
    %845 = vmatprep.subr.mxu0 0.0
    %846 = vmatpush1.msra.mxu0 0.0
    %847 = vmatprep.subr.mxu0 0.0
    %848 = vmatpush1.msra.mxu0 0.0
    %849 = vmatprep.subr.mxu0 0.0
    %850 = vmatpush1.msra.mxu0 0.0
    %851 = vmatprep.subr.mxu0 0.0
    %852 = vmatpush1.msra.mxu0 0.0
    %853 = vmatprep.subr.mxu0 0.0
    %854 = vmatpush1.msra.mxu0 0.0
    %855 = vmatprep.subr.mxu0 0.0
    %856 = vmatpush1.msra.mxu0 0.0
    %857 = vmatprep.subr.mxu0 0.0
    %858 = vmatpush1.msra.mxu0 0.0
    %859 = vmatprep.subr.mxu0 0.0
    %860 = vmatpush1.msra.mxu0 0.0
    %861 = vmatprep.subr.mxu0 0.0
    %862 = vmatpush1.msra.mxu0 0.0
    %863 = vmatprep.subr.mxu0 0.0
    %864 = vmatpush1.msra.mxu0 0.0
    %865 = vmatprep.subr.mxu0 0.0
    %866 = vmatpush1.msra.mxu0 0.0
    %867 = vmatprep.subr.mxu0 0.0
    %868 = vmatpush1.msra.mxu0 0.0
    %869 = vmatprep.subr.mxu0 0.0
    %870 = vmatpush1.msra.mxu0 0.0
    %871 = vmatprep.subr.mxu0 0.0
    %872 = vmatpush1.msra.mxu0 0.0
    %873 = vmatprep.subr.mxu0 0.0
    %874 = vmatpush1.msra.mxu0 0.0
    %875 = vmatprep.subr.mxu0 0.0
    %876 = vmatpush1.msra.mxu0 0.0
    %877 = vmatprep.subr.mxu0 0.0
    %878 = vmatpush1.msra.mxu0 0.0
    %879 = vmatprep.subr.mxu0 0.0
    %880 = vmatpush1.msra.mxu0 0.0
    %881 = vmatprep.subr.mxu0 0.0
    %882 = vmatpush1.msra.mxu0 0.0
    %883 = vmatprep.mubr.f32.mxu0 0.0
    %884 = vmatmul.mubr.f32.gmra.mrb[0].mxu0 %v817
    %v885 = vpop.f32.mrb[0].mxu0
    %v886 = vadd.f32 0.0, %v885
    %v887 = vpop.f32.mrb[0].mxu0
    %888 = vdwg.mxu0
    %v889 = vadd.f32 %v809, %v886
    %v890 = vxor.u32 %v889, 2147483648
    %v891 = vmul.f32 %v890, 1.442695
    %v892 = vpow.pop %v891
    %v893 = vadd.f32 %v892, 1.0
    %v894 = vrcp.pop %v893
    %v895 = vmul.f32 1.0, %v894
    %v896 = vtanh.pop %v889
    %v897 = vld [vmem:[#allocation5] sm:$0x3]
    %899 = vrot.lane.b32.xlu0 %v897, 32
    %v900 = vpop.permute.xlu0 %899
    %v902 = vmul.f32 %v895, %v900
    %904 = vrot.lane.b32.xlu0 %v896, 32
    %v905 = vpop.permute.xlu0 %904
    %v907 = vmul.f32 %v895, %v905
    %909 = vrot.lane.b32.xlu0 %v907, 32
    %v910 = vpop.permute.xlu0 %909
    %v912 = vadd.f32 %v902, %v910
    %v913 = vtanh.pop %v912
    %915 = vrot.lane.b32.xlu0 %v913, 32
    %v916 = vpop.permute.xlu0 %915
    %v918 = vmul.f32 %v895, %v916
    %920 = vrot.lane.b32.xlu0 %v912, 96
    %v921 = vpop.permute.xlu0 %920
    %923 = vst.msk [vmem:[#allocation5] sm:$0x3] %vm805, %v921
    %925 = vrot.lane.b32.xlu0 %v918, 64
    %v926 = vpop.permute.xlu0 %925
    %928 = vst.msk [vmem:[#allocation4] sm:$0x3] %vm805, %v926
    %929 = vst.msk [vmem:[#allocation2] sm:$0x3] %vm805, %v926
    %v930 = vld [vmem:[%s286] sm:$0x3]
    %v931 = vld [vmem:[#allocation4] sm:$0x3]
    %v932 = vld [vmem:[%s4] sm:$0xff]
    %v933 = vld [vmem:[%s4 + $0x8] sm:$0xff]
    %v934 = vld [vmem:[%s4 + $0x10] sm:$0xff]
    %v935 = vld [vmem:[%s4 + $0x18] sm:$0xff]
    %v937 = vsel %vm815, %v931, 0
    %939 = vmatprep.subr.mxu0 0.0
    %940 = vmatpush1.msra.mxu0 %v932
    %941 = vmatprep.subr.mxu0 0.0
    %942 = vmatpush1.msra.mxu0 %v933
    %943 = vmatprep.subr.mxu0 0.0
    %944 = vmatpush1.msra.mxu0 %v934
    %945 = vmatprep.subr.mxu0 0.0
    %946 = vmatpush1.msra.mxu0 %v935
    %947 = vmatprep.subr.mxu0 0.0
    %948 = vmatpush1.msra.mxu0 0.0
    %949 = vmatprep.subr.mxu0 0.0
    %950 = vmatpush1.msra.mxu0 0.0
    %951 = vmatprep.subr.mxu0 0.0
    %952 = vmatpush1.msra.mxu0 0.0
    %953 = vmatprep.subr.mxu0 0.0
    %954 = vmatpush1.msra.mxu0 0.0
    %955 = vmatprep.subr.mxu0 0.0
    %956 = vmatpush1.msra.mxu0 0.0
    %957 = vmatprep.subr.mxu0 0.0
    %958 = vmatpush1.msra.mxu0 0.0
    %959 = vmatprep.subr.mxu0 0.0
    %960 = vmatpush1.msra.mxu0 0.0
    %961 = vmatprep.subr.mxu0 0.0
    %962 = vmatpush1.msra.mxu0 0.0
    %963 = vmatprep.subr.mxu0 0.0
    %964 = vmatpush1.msra.mxu0 0.0
    %965 = vmatprep.subr.mxu0 0.0
    %966 = vmatpush1.msra.mxu0 0.0
    %967 = vmatprep.subr.mxu0 0.0
    %968 = vmatpush1.msra.mxu0 0.0
    %969 = vmatprep.subr.mxu0 0.0
    %970 = vmatpush1.msra.mxu0 0.0
    %971 = vmatprep.subr.mxu0 0.0
    %972 = vmatpush1.msra.mxu0 0.0
    %973 = vmatprep.subr.mxu0 0.0
    %974 = vmatpush1.msra.mxu0 0.0
    %975 = vmatprep.subr.mxu0 0.0
    %976 = vmatpush1.msra.mxu0 0.0
    %977 = vmatprep.subr.mxu0 0.0
    %978 = vmatpush1.msra.mxu0 0.0
    %979 = vmatprep.subr.mxu0 0.0
    %980 = vmatpush1.msra.mxu0 0.0
    %981 = vmatprep.subr.mxu0 0.0
    %982 = vmatpush1.msra.mxu0 0.0
    %983 = vmatprep.subr.mxu0 0.0
    %984 = vmatpush1.msra.mxu0 0.0
    %985 = vmatprep.subr.mxu0 0.0
    %986 = vmatpush1.msra.mxu0 0.0
    %987 = vmatprep.subr.mxu0 0.0
    %988 = vmatpush1.msra.mxu0 0.0
    %989 = vmatprep.subr.mxu0 0.0
    %990 = vmatpush1.msra.mxu0 0.0
    %991 = vmatprep.subr.mxu0 0.0
    %992 = vmatpush1.msra.mxu0 0.0
    %993 = vmatprep.subr.mxu0 0.0
    %994 = vmatpush1.msra.mxu0 0.0
    %995 = vmatprep.subr.mxu0 0.0
    %996 = vmatpush1.msra.mxu0 0.0
    %997 = vmatprep.subr.mxu0 0.0
    %998 = vmatpush1.msra.mxu0 0.0
    %999 = vmatprep.subr.mxu0 0.0
    %1000 = vmatpush1.msra.mxu0 0.0
    %1001 = vmatprep.subr.mxu0 0.0
    %1002 = vmatpush1.msra.mxu0 0.0
    %1003 = vmatprep.mubr.f32.mxu0 0.0
    %1004 = vmatmul.mubr.f32.gmra.mrb[0].mxu0 %v937
    %v1005 = vpop.f32.mrb[0].mxu0
    %v1006 = vadd.f32 0.0, %v1005
    %v1007 = vpop.f32.mrb[0].mxu0
    %1008 = vdwg.mxu0
    %v1009 = vadd.f32 %v930, %v1006
    %v1010 = vxor.u32 %v1009, 2147483648
    %v1011 = vmul.f32 %v1010, 1.442695
    %v1012 = vpow.pop %v1011
    %v1013 = vadd.f32 %v1012, 1.0
    %v1014 = vrcp.pop %v1013
    %v1015 = vmul.f32 1.0, %v1014
    %v1016 = vtanh.pop %v1009
    %v1017 = vld [vmem:[#allocation5] sm:$0x3]
    %1019 = vrot.lane.b32.xlu0 %v1017, 32
    %v1020 = vpop.permute.xlu0 %1019
    %v1022 = vmul.f32 %v1015, %v1020
    %1024 = vrot.lane.b32.xlu0 %v1016, 32
    %v1025 = vpop.permute.xlu0 %1024
    %v1027 = vmul.f32 %v1015, %v1025
    %1029 = vrot.lane.b32.xlu0 %v1027, 32
    %v1030 = vpop.permute.xlu0 %1029
    %v1032 = vadd.f32 %v1022, %v1030
    %v1033 = vtanh.pop %v1032
    %1035 = vrot.lane.b32.xlu0 %v1033, 32
    %v1036 = vpop.permute.xlu0 %1035
    %v1038 = vmul.f32 %v1015, %v1036
    %1040 = vrot.lane.b32.xlu0 %v1032, 96
    %v1041 = vpop.permute.xlu0 %1040
    %1043 = vst.msk [vmem:[#allocation5] sm:$0x3] %vm805, %v1041
    %1045 = vrot.lane.b32.xlu0 %v1038, 64
    %v1046 = vpop.permute.xlu0 %1045
    %1048 = vst.msk [vmem:[#allocation4] sm:$0x3] %vm805, %v1046
    %s1049 = scalar_lea.vmem [#allocation2], 2
    %1050 = vst.msk [vmem:[%s1049] sm:$0x3] %vm805, %v1046
    %v1051 = vld [vmem:[%s372] sm:$0x3]
    %v1052 = vld [vmem:[#allocation4] sm:$0x3]
    %v1053 = vld [vmem:[%s4] sm:$0xff]
    %v1054 = vld [vmem:[%s4 + $0x8] sm:$0xff]
    %v1055 = vld [vmem:[%s4 + $0x10] sm:$0xff]
    %v1056 = vld [vmem:[%s4 + $0x18] sm:$0xff]
    %v1058 = vsel %vm815, %v1052, 0
    %1060 = vmatprep.subr.mxu0 0.0
    %1061 = vmatpush1.msra.mxu0 %v1053
    %1062 = vmatprep.subr.mxu0 0.0
    %1063 = vmatpush1.msra.mxu0 %v1054
    %1064 = vmatprep.subr.mxu0 0.0
    %1065 = vmatpush1.msra.mxu0 %v1055
    %1066 = vmatprep.subr.mxu0 0.0
    %1067 = vmatpush1.msra.mxu0 %v1056
    %1068 = vmatprep.subr.mxu0 0.0
    %1069 = vmatpush1.msra.mxu0 0.0
    %1070 = vmatprep.subr.mxu0 0.0
    %1071 = vmatpush1.msra.mxu0 0.0
    %1072 = vmatprep.subr.mxu0 0.0
    %1073 = vmatpush1.msra.mxu0 0.0
    %1074 = vmatprep.subr.mxu0 0.0
    %1075 = vmatpush1.msra.mxu0 0.0
    %1076 = vmatprep.subr.mxu0 0.0
    %1077 = vmatpush1.msra.mxu0 0.0
    %1078 = vmatprep.subr.mxu0 0.0
    %1079 = vmatpush1.msra.mxu0 0.0
    %1080 = vmatprep.subr.mxu0 0.0
    %1081 = vmatpush1.msra.mxu0 0.0
    %1082 = vmatprep.subr.mxu0 0.0
    %1083 = vmatpush1.msra.mxu0 0.0
    %1084 = vmatprep.subr.mxu0 0.0
    %1085 = vmatpush1.msra.mxu0 0.0
    %1086 = vmatprep.subr.mxu0 0.0
    %1087 = vmatpush1.msra.mxu0 0.0
    %1088 = vmatprep.subr.mxu0 0.0
    %1089 = vmatpush1.msra.mxu0 0.0
    %1090 = vmatprep.subr.mxu0 0.0
    %1091 = vmatpush1.msra.mxu0 0.0
    %1092 = vmatprep.subr.mxu0 0.0
    %1093 = vmatpush1.msra.mxu0 0.0
    %1094 = vmatprep.subr.mxu0 0.0
    %1095 = vmatpush1.msra.mxu0 0.0
    %1096 = vmatprep.subr.mxu0 0.0
    %1097 = vmatpush1.msra.mxu0 0.0
    %1098 = vmatprep.subr.mxu0 0.0
    %1099 = vmatpush1.msra.mxu0 0.0
    %1100 = vmatprep.subr.mxu0 0.0
    %1101 = vmatpush1.msra.mxu0 0.0
    %1102 = vmatprep.subr.mxu0 0.0
    %1103 = vmatpush1.msra.mxu0 0.0
    %1104 = vmatprep.subr.mxu0 0.0
    %1105 = vmatpush1.msra.mxu0 0.0
    %1106 = vmatprep.subr.mxu0 0.0
    %1107 = vmatpush1.msra.mxu0 0.0
    %1108 = vmatprep.subr.mxu0 0.0
    %1109 = vmatpush1.msra.mxu0 0.0
    %1110 = vmatprep.subr.mxu0 0.0
    %1111 = vmatpush1.msra.mxu0 0.0
    %1112 = vmatprep.subr.mxu0 0.0
    %1113 = vmatpush1.msra.mxu0 0.0
    %1114 = vmatprep.subr.mxu0 0.0
    %1115 = vmatpush1.msra.mxu0 0.0
    %1116 = vmatprep.subr.mxu0 0.0
    %1117 = vmatpush1.msra.mxu0 0.0
    %1118 = vmatprep.subr.mxu0 0.0
    %1119 = vmatpush1.msra.mxu0 0.0
    %1120 = vmatprep.subr.mxu0 0.0
    %1121 = vmatpush1.msra.mxu0 0.0
    %1122 = vmatprep.subr.mxu0 0.0
    %1123 = vmatpush1.msra.mxu0 0.0
    %1124 = vmatprep.mubr.f32.mxu0 0.0
    %1125 = vmatmul.mubr.f32.gmra.mrb[0].mxu0 %v1058
    %v1126 = vpop.f32.mrb[0].mxu0
    %v1127 = vadd.f32 0.0, %v1126
    %v1128 = vpop.f32.mrb[0].mxu0
    %1129 = vdwg.mxu0
    %v1130 = vadd.f32 %v1051, %v1127
    %v1131 = vxor.u32 %v1130, 2147483648
    %v1132 = vmul.f32 %v1131, 1.442695
    %v1133 = vpow.pop %v1132
    %v1134 = vadd.f32 %v1133, 1.0
    %v1135 = vrcp.pop %v1134
    %v1136 = vmul.f32 1.0, %v1135
    %v1137 = vtanh.pop %v1130
    %v1138 = vld [vmem:[#allocation5] sm:$0x3]
    %1140 = vrot.lane.b32.xlu0 %v1138, 32
    %v1141 = vpop.permute.xlu0 %1140
    %v1143 = vmul.f32 %v1136, %v1141
    %1145 = vrot.lane.b32.xlu0 %v1137, 32
    %v1146 = vpop.permute.xlu0 %1145
    %v1148 = vmul.f32 %v1136, %v1146
    %1150 = vrot.lane.b32.xlu0 %v1148, 32
    %v1151 = vpop.permute.xlu0 %1150
    %v1153 = vadd.f32 %v1143, %v1151
    %v1154 = vtanh.pop %v1153
    %1156 = vrot.lane.b32.xlu0 %v1154, 32
    %v1157 = vpop.permute.xlu0 %1156
    %v1159 = vmul.f32 %v1136, %v1157
    %1161 = vrot.lane.b32.xlu0 %v1153, 96
    %v1162 = vpop.permute.xlu0 %1161
    %1164 = vst.msk [vmem:[#allocation5] sm:$0x3] %vm805, %v1162
    %1166 = vrot.lane.b32.xlu0 %v1159, 64
    %v1167 = vpop.permute.xlu0 %1166
    %1169 = vst.msk [vmem:[#allocation4] sm:$0x3] %vm805, %v1167
    %s1170 = scalar_lea.vmem [#allocation2], 4
    %1171 = vst.msk [vmem:[%s1170] sm:$0x3] %vm805, %v1167
    %v1172 = vld [vmem:[%s458] sm:$0x3]
    %v1173 = vld [vmem:[#allocation4] sm:$0x3]
    %v1174 = vld [vmem:[%s4] sm:$0xff]
    %v1175 = vld [vmem:[%s4 + $0x8] sm:$0xff]
    %v1176 = vld [vmem:[%s4 + $0x10] sm:$0xff]
    %v1177 = vld [vmem:[%s4 + $0x18] sm:$0xff]
    %v1179 = vsel %vm815, %v1173, 0
    %1181 = vmatprep.subr.mxu0 0.0
    %1182 = vmatpush1.msra.mxu0 %v1174
    %1183 = vmatprep.subr.mxu0 0.0
    %1184 = vmatpush1.msra.mxu0 %v1175
    %1185 = vmatprep.subr.mxu0 0.0
    %1186 = vmatpush1.msra.mxu0 %v1176
    %1187 = vmatprep.subr.mxu0 0.0
    %1188 = vmatpush1.msra.mxu0 %v1177
    %1189 = vmatprep.subr.mxu0 0.0
    %1190 = vmatpush1.msra.mxu0 0.0
    %1191 = vmatprep.subr.mxu0 0.0
    %1192 = vmatpush1.msra.mxu0 0.0
    %1193 = vmatprep.subr.mxu0 0.0
    %1194 = vmatpush1.msra.mxu0 0.0
    %1195 = vmatprep.subr.mxu0 0.0
    %1196 = vmatpush1.msra.mxu0 0.0
    %1197 = vmatprep.subr.mxu0 0.0
    %1198 = vmatpush1.msra.mxu0 0.0
    %1199 = vmatprep.subr.mxu0 0.0
    %1200 = vmatpush1.msra.mxu0 0.0
    %1201 = vmatprep.subr.mxu0 0.0
    %1202 = vmatpush1.msra.mxu0 0.0
    %1203 = vmatprep.subr.mxu0 0.0
    %1204 = vmatpush1.msra.mxu0 0.0
    %1205 = vmatprep.subr.mxu0 0.0
    %1206 = vmatpush1.msra.mxu0 0.0
    %1207 = vmatprep.subr.mxu0 0.0
    %1208 = vmatpush1.msra.mxu0 0.0
    %1209 = vmatprep.subr.mxu0 0.0
    %1210 = vmatpush1.msra.mxu0 0.0
    %1211 = vmatprep.subr.mxu0 0.0
    %1212 = vmatpush1.msra.mxu0 0.0
    %1213 = vmatprep.subr.mxu0 0.0
    %1214 = vmatpush1.msra.mxu0 0.0
    %1215 = vmatprep.subr.mxu0 0.0
    %1216 = vmatpush1.msra.mxu0 0.0
    %1217 = vmatprep.subr.mxu0 0.0
    %1218 = vmatpush1.msra.mxu0 0.0
    %1219 = vmatprep.subr.mxu0 0.0
    %1220 = vmatpush1.msra.mxu0 0.0
    %1221 = vmatprep.subr.mxu0 0.0
    %1222 = vmatpush1.msra.mxu0 0.0
    %1223 = vmatprep.subr.mxu0 0.0
    %1224 = vmatpush1.msra.mxu0 0.0
    %1225 = vmatprep.subr.mxu0 0.0
    %1226 = vmatpush1.msra.mxu0 0.0
    %1227 = vmatprep.subr.mxu0 0.0
    %1228 = vmatpush1.msra.mxu0 0.0
    %1229 = vmatprep.subr.mxu0 0.0
    %1230 = vmatpush1.msra.mxu0 0.0
    %1231 = vmatprep.subr.mxu0 0.0
    %1232 = vmatpush1.msra.mxu0 0.0
    %1233 = vmatprep.subr.mxu0 0.0
    %1234 = vmatpush1.msra.mxu0 0.0
    %1235 = vmatprep.subr.mxu0 0.0
    %1236 = vmatpush1.msra.mxu0 0.0
    %1237 = vmatprep.subr.mxu0 0.0
    %1238 = vmatpush1.msra.mxu0 0.0
    %1239 = vmatprep.subr.mxu0 0.0
    %1240 = vmatpush1.msra.mxu0 0.0
    %1241 = vmatprep.subr.mxu0 0.0
    %1242 = vmatpush1.msra.mxu0 0.0
    %1243 = vmatprep.subr.mxu0 0.0
    %1244 = vmatpush1.msra.mxu0 0.0
    %1245 = vmatprep.mubr.f32.mxu0 0.0
    %1246 = vmatmul.mubr.f32.gmra.mrb[0].mxu0 %v1179
    %v1247 = vpop.f32.mrb[0].mxu0
    %v1248 = vadd.f32 0.0, %v1247
    %v1249 = vpop.f32.mrb[0].mxu0
    %1250 = vdwg.mxu0
    %v1251 = vadd.f32 %v1172, %v1248
    %v1252 = vxor.u32 %v1251, 2147483648
    %v1253 = vmul.f32 %v1252, 1.442695
    %v1254 = vpow.pop %v1253
    %v1255 = vadd.f32 %v1254, 1.0
    %v1256 = vrcp.pop %v1255
    %v1257 = vmul.f32 1.0, %v1256
    %v1258 = vtanh.pop %v1251
    %v1259 = vld [vmem:[#allocation5] sm:$0x3]
    %1261 = vrot.lane.b32.xlu0 %v1259, 32
    %v1262 = vpop.permute.xlu0 %1261
    %v1264 = vmul.f32 %v1257, %v1262
    %1266 = vrot.lane.b32.xlu0 %v1258, 32
    %v1267 = vpop.permute.xlu0 %1266
    %v1269 = vmul.f32 %v1257, %v1267
    %1271 = vrot.lane.b32.xlu0 %v1269, 32
    %v1272 = vpop.permute.xlu0 %1271
    %v1274 = vadd.f32 %v1264, %v1272
    %v1275 = vtanh.pop %v1274
    %1277 = vrot.lane.b32.xlu0 %v1275, 32
    %v1278 = vpop.permute.xlu0 %1277
    %v1280 = vmul.f32 %v1257, %v1278
    %1282 = vrot.lane.b32.xlu0 %v1274, 96
    %v1283 = vpop.permute.xlu0 %1282
    %1285 = vst.msk [vmem:[#allocation5] sm:$0x3] %vm805, %v1283
    %1287 = vrot.lane.b32.xlu0 %v1280, 64
    %v1288 = vpop.permute.xlu0 %1287
    %1290 = vst.msk [vmem:[#allocation4] sm:$0x3] %vm805, %v1288
    %s1291 = scalar_lea.vmem [#allocation2], 6
    %1292 = vst.msk [vmem:[%s1291] sm:$0x3] %vm805, %v1288
    %v1293 = vld [vmem:[%s544] sm:$0x3]
    %v1294 = vld [vmem:[#allocation4] sm:$0x3]
    %v1295 = vld [vmem:[%s4] sm:$0xff]
    %v1296 = vld [vmem:[%s4 + $0x8] sm:$0xff]
    %v1297 = vld [vmem:[%s4 + $0x10] sm:$0xff]
    %v1298 = vld [vmem:[%s4 + $0x18] sm:$0xff]
    %v1300 = vsel %vm815, %v1294, 0
    %1302 = vmatprep.subr.mxu0 0.0
    %1303 = vmatpush1.msra.mxu0 %v1295
    %1304 = vmatprep.subr.mxu0 0.0
    %1305 = vmatpush1.msra.mxu0 %v1296
    %1306 = vmatprep.subr.mxu0 0.0
    %1307 = vmatpush1.msra.mxu0 %v1297
    %1308 = vmatprep.subr.mxu0 0.0
    %1309 = vmatpush1.msra.mxu0 %v1298
    %1310 = vmatprep.subr.mxu0 0.0
    %1311 = vmatpush1.msra.mxu0 0.0
    %1312 = vmatprep.subr.mxu0 0.0
    %1313 = vmatpush1.msra.mxu0 0.0
    %1314 = vmatprep.subr.mxu0 0.0
    %1315 = vmatpush1.msra.mxu0 0.0
    %1316 = vmatprep.subr.mxu0 0.0
    %1317 = vmatpush1.msra.mxu0 0.0
    %1318 = vmatprep.subr.mxu0 0.0
    %1319 = vmatpush1.msra.mxu0 0.0
    %1320 = vmatprep.subr.mxu0 0.0
    %1321 = vmatpush1.msra.mxu0 0.0
    %1322 = vmatprep.subr.mxu0 0.0
    %1323 = vmatpush1.msra.mxu0 0.0
    %1324 = vmatprep.subr.mxu0 0.0
    %1325 = vmatpush1.msra.mxu0 0.0
    %1326 = vmatprep.subr.mxu0 0.0
    %1327 = vmatpush1.msra.mxu0 0.0
    %1328 = vmatprep.subr.mxu0 0.0
    %1329 = vmatpush1.msra.mxu0 0.0
    %1330 = vmatprep.subr.mxu0 0.0
    %1331 = vmatpush1.msra.mxu0 0.0
    %1332 = vmatprep.subr.mxu0 0.0
    %1333 = vmatpush1.msra.mxu0 0.0
    %1334 = vmatprep.subr.mxu0 0.0
    %1335 = vmatpush1.msra.mxu0 0.0
    %1336 = vmatprep.subr.mxu0 0.0
    %1337 = vmatpush1.msra.mxu0 0.0
    %1338 = vmatprep.subr.mxu0 0.0
    %1339 = vmatpush1.msra.mxu0 0.0
    %1340 = vmatprep.subr.mxu0 0.0
    %1341 = vmatpush1.msra.mxu0 0.0
    %1342 = vmatprep.subr.mxu0 0.0
    %1343 = vmatpush1.msra.mxu0 0.0
    %1344 = vmatprep.subr.mxu0 0.0
    %1345 = vmatpush1.msra.mxu0 0.0
    %1346 = vmatprep.subr.mxu0 0.0
    %1347 = vmatpush1.msra.mxu0 0.0
    %1348 = vmatprep.subr.mxu0 0.0
    %1349 = vmatpush1.msra.mxu0 0.0
    %1350 = vmatprep.subr.mxu0 0.0
    %1351 = vmatpush1.msra.mxu0 0.0
    %1352 = vmatprep.subr.mxu0 0.0
    %1353 = vmatpush1.msra.mxu0 0.0
    %1354 = vmatprep.subr.mxu0 0.0
    %1355 = vmatpush1.msra.mxu0 0.0
    %1356 = vmatprep.subr.mxu0 0.0
    %1357 = vmatpush1.msra.mxu0 0.0
    %1358 = vmatprep.subr.mxu0 0.0
    %1359 = vmatpush1.msra.mxu0 0.0
    %1360 = vmatprep.subr.mxu0 0.0
    %1361 = vmatpush1.msra.mxu0 0.0
    %1362 = vmatprep.subr.mxu0 0.0
    %1363 = vmatpush1.msra.mxu0 0.0
    %1364 = vmatprep.subr.mxu0 0.0
    %1365 = vmatpush1.msra.mxu0 0.0
    %1366 = vmatprep.mubr.f32.mxu0 0.0
    %1367 = vmatmul.mubr.f32.gmra.mrb[0].mxu0 %v1300
    %v1368 = vpop.f32.mrb[0].mxu0
    %v1369 = vadd.f32 0.0, %v1368
    %v1370 = vpop.f32.mrb[0].mxu0
    %1371 = vdwg.mxu0
    %v1372 = vadd.f32 %v1293, %v1369
    %v1373 = vxor.u32 %v1372, 2147483648
    %v1374 = vmul.f32 %v1373, 1.442695
    %v1375 = vpow.pop %v1374
    %v1376 = vadd.f32 %v1375, 1.0
    %v1377 = vrcp.pop %v1376
    %v1378 = vmul.f32 1.0, %v1377
    %v1379 = vtanh.pop %v1372
    %v1380 = vld [vmem:[#allocation5] sm:$0x3]
    %1382 = vrot.lane.b32.xlu0 %v1380, 32
    %v1383 = vpop.permute.xlu0 %1382
    %v1385 = vmul.f32 %v1378, %v1383
    %1387 = vrot.lane.b32.xlu0 %v1379, 32
    %v1388 = vpop.permute.xlu0 %1387
    %v1390 = vmul.f32 %v1378, %v1388
    %1392 = vrot.lane.b32.xlu0 %v1390, 32
    %v1393 = vpop.permute.xlu0 %1392
    %v1395 = vadd.f32 %v1385, %v1393
    %v1396 = vtanh.pop %v1395
    %1398 = vrot.lane.b32.xlu0 %v1396, 32
    %v1399 = vpop.permute.xlu0 %1398
    %v1401 = vmul.f32 %v1378, %v1399
    %1403 = vrot.lane.b32.xlu0 %v1395, 96
    %v1404 = vpop.permute.xlu0 %1403
    %1406 = vst.msk [vmem:[#allocation5] sm:$0x3] %vm805, %v1404
    %1408 = vrot.lane.b32.xlu0 %v1401, 64
    %v1409 = vpop.permute.xlu0 %1408
    %1411 = vst.msk [vmem:[#allocation4] sm:$0x3] %vm805, %v1409
    %s1412 = scalar_lea.vmem [#allocation2], 8
    %1413 = vst.msk [vmem:[%s1412] sm:$0x3] %vm805, %v1409
    %v1414 = vld [vmem:[%s630] sm:$0x3]
    %v1415 = vld [vmem:[#allocation4] sm:$0x3]
    %v1416 = vld [vmem:[%s4] sm:$0xff]
    %v1417 = vld [vmem:[%s4 + $0x8] sm:$0xff]
    %v1418 = vld [vmem:[%s4 + $0x10] sm:$0xff]
    %v1419 = vld [vmem:[%s4 + $0x18] sm:$0xff]
    %v1421 = vsel %vm815, %v1415, 0
    %1423 = vmatprep.subr.mxu0 0.0
    %1424 = vmatpush1.msra.mxu0 %v1416
    %1425 = vmatprep.subr.mxu0 0.0
    %1426 = vmatpush1.msra.mxu0 %v1417
    %1427 = vmatprep.subr.mxu0 0.0
    %1428 = vmatpush1.msra.mxu0 %v1418
    %1429 = vmatprep.subr.mxu0 0.0
    %1430 = vmatpush1.msra.mxu0 %v1419
    %1431 = vmatprep.subr.mxu0 0.0
    %1432 = vmatpush1.msra.mxu0 0.0
    %1433 = vmatprep.subr.mxu0 0.0
    %1434 = vmatpush1.msra.mxu0 0.0
    %1435 = vmatprep.subr.mxu0 0.0
    %1436 = vmatpush1.msra.mxu0 0.0
    %1437 = vmatprep.subr.mxu0 0.0
    %1438 = vmatpush1.msra.mxu0 0.0
    %1439 = vmatprep.subr.mxu0 0.0
    %1440 = vmatpush1.msra.mxu0 0.0
    %1441 = vmatprep.subr.mxu0 0.0
    %1442 = vmatpush1.msra.mxu0 0.0
    %1443 = vmatprep.subr.mxu0 0.0
    %1444 = vmatpush1.msra.mxu0 0.0
    %1445 = vmatprep.subr.mxu0 0.0
    %1446 = vmatpush1.msra.mxu0 0.0
    %1447 = vmatprep.subr.mxu0 0.0
    %1448 = vmatpush1.msra.mxu0 0.0
    %1449 = vmatprep.subr.mxu0 0.0
    %1450 = vmatpush1.msra.mxu0 0.0
    %1451 = vmatprep.subr.mxu0 0.0
    %1452 = vmatpush1.msra.mxu0 0.0
    %1453 = vmatprep.subr.mxu0 0.0
    %1454 = vmatpush1.msra.mxu0 0.0
    %1455 = vmatprep.subr.mxu0 0.0
    %1456 = vmatpush1.msra.mxu0 0.0
    %1457 = vmatprep.subr.mxu0 0.0
    %1458 = vmatpush1.msra.mxu0 0.0
    %1459 = vmatprep.subr.mxu0 0.0
    %1460 = vmatpush1.msra.mxu0 0.0
    %1461 = vmatprep.subr.mxu0 0.0
    %1462 = vmatpush1.msra.mxu0 0.0
    %1463 = vmatprep.subr.mxu0 0.0
    %1464 = vmatpush1.msra.mxu0 0.0
    %1465 = vmatprep.subr.mxu0 0.0
    %1466 = vmatpush1.msra.mxu0 0.0
    %1467 = vmatprep.subr.mxu0 0.0
    %1468 = vmatpush1.msra.mxu0 0.0
    %1469 = vmatprep.subr.mxu0 0.0
    %1470 = vmatpush1.msra.mxu0 0.0
    %1471 = vmatprep.subr.mxu0 0.0
    %1472 = vmatpush1.msra.mxu0 0.0
    %1473 = vmatprep.subr.mxu0 0.0
    %1474 = vmatpush1.msra.mxu0 0.0
    %1475 = vmatprep.subr.mxu0 0.0
    %1476 = vmatpush1.msra.mxu0 0.0
    %1477 = vmatprep.subr.mxu0 0.0
    %1478 = vmatpush1.msra.mxu0 0.0
    %1479 = vmatprep.subr.mxu0 0.0
    %1480 = vmatpush1.msra.mxu0 0.0
    %1481 = vmatprep.subr.mxu0 0.0
    %1482 = vmatpush1.msra.mxu0 0.0
    %1483 = vmatprep.subr.mxu0 0.0
    %1484 = vmatpush1.msra.mxu0 0.0
    %1485 = vmatprep.subr.mxu0 0.0
    %1486 = vmatpush1.msra.mxu0 0.0
    %1487 = vmatprep.mubr.f32.mxu0 0.0
    %1488 = vmatmul.mubr.f32.gmra.mrb[0].mxu0 %v1421
    %v1489 = vpop.f32.mrb[0].mxu0
    %v1490 = vadd.f32 0.0, %v1489
    %v1491 = vpop.f32.mrb[0].mxu0
    %1492 = vdwg.mxu0
    %v1493 = vadd.f32 %v1414, %v1490
    %v1494 = vxor.u32 %v1493, 2147483648
    %v1495 = vmul.f32 %v1494, 1.442695
    %v1496 = vpow.pop %v1495
    %v1497 = vadd.f32 %v1496, 1.0
    %v1498 = vrcp.pop %v1497
    %v1499 = vmul.f32 1.0, %v1498
    %v1500 = vtanh.pop %v1493
    %v1501 = vld [vmem:[#allocation5] sm:$0x3]
    %1503 = vrot.lane.b32.xlu0 %v1501, 32
    %v1504 = vpop.permute.xlu0 %1503
    %v1506 = vmul.f32 %v1499, %v1504
    %1508 = vrot.lane.b32.xlu0 %v1500, 32
    %v1509 = vpop.permute.xlu0 %1508
    %v1511 = vmul.f32 %v1499, %v1509
    %1513 = vrot.lane.b32.xlu0 %v1511, 32
    %v1514 = vpop.permute.xlu0 %1513
    %v1516 = vadd.f32 %v1506, %v1514
    %v1517 = vtanh.pop %v1516
    %1519 = vrot.lane.b32.xlu0 %v1517, 32
    %v1520 = vpop.permute.xlu0 %1519
    %v1522 = vmul.f32 %v1499, %v1520
    %1524 = vrot.lane.b32.xlu0 %v1516, 96
    %v1525 = vpop.permute.xlu0 %1524
    %1527 = vst.msk [vmem:[#allocation5] sm:$0x3] %vm805, %v1525
    %1529 = vrot.lane.b32.xlu0 %v1522, 64
    %v1530 = vpop.permute.xlu0 %1529
    %1532 = vst.msk [vmem:[#allocation4] sm:$0x3] %vm805, %v1530
    %s1533 = scalar_lea.vmem [#allocation2], 10
    %1534 = vst.msk [vmem:[%s1533] sm:$0x3] %vm805, %v1530
    %v1535 = vld [vmem:[%s716] sm:$0x3]
    %v1536 = vld [vmem:[#allocation4] sm:$0x3]
    %v1537 = vld [vmem:[%s4] sm:$0xff]
    %v1538 = vld [vmem:[%s4 + $0x8] sm:$0xff]
    %v1539 = vld [vmem:[%s4 + $0x10] sm:$0xff]
    %v1540 = vld [vmem:[%s4 + $0x18] sm:$0xff]
    %v1542 = vsel %vm815, %v1536, 0
    %1544 = vmatprep.subr.mxu0 0.0
    %1545 = vmatpush1.msra.mxu0 %v1537
    %1546 = vmatprep.subr.mxu0 0.0
    %1547 = vmatpush1.msra.mxu0 %v1538
    %1548 = vmatprep.subr.mxu0 0.0
    %1549 = vmatpush1.msra.mxu0 %v1539
    %1550 = vmatprep.subr.mxu0 0.0
    %1551 = vmatpush1.msra.mxu0 %v1540
    %1552 = vmatprep.subr.mxu0 0.0
    %1553 = vmatpush1.msra.mxu0 0.0
    %1554 = vmatprep.subr.mxu0 0.0
    %1555 = vmatpush1.msra.mxu0 0.0
    %1556 = vmatprep.subr.mxu0 0.0
    %1557 = vmatpush1.msra.mxu0 0.0
    %1558 = vmatprep.subr.mxu0 0.0
    %1559 = vmatpush1.msra.mxu0 0.0
    %1560 = vmatprep.subr.mxu0 0.0
    %1561 = vmatpush1.msra.mxu0 0.0
    %1562 = vmatprep.subr.mxu0 0.0
    %1563 = vmatpush1.msra.mxu0 0.0
    %1564 = vmatprep.subr.mxu0 0.0
    %1565 = vmatpush1.msra.mxu0 0.0
    %1566 = vmatprep.subr.mxu0 0.0
    %1567 = vmatpush1.msra.mxu0 0.0
    %1568 = vmatprep.subr.mxu0 0.0
    %1569 = vmatpush1.msra.mxu0 0.0
    %1570 = vmatprep.subr.mxu0 0.0
    %1571 = vmatpush1.msra.mxu0 0.0
    %1572 = vmatprep.subr.mxu0 0.0
    %1573 = vmatpush1.msra.mxu0 0.0
    %1574 = vmatprep.subr.mxu0 0.0
    %1575 = vmatpush1.msra.mxu0 0.0
    %1576 = vmatprep.subr.mxu0 0.0
    %1577 = vmatpush1.msra.mxu0 0.0
    %1578 = vmatprep.subr.mxu0 0.0
    %1579 = vmatpush1.msra.mxu0 0.0
    %1580 = vmatprep.subr.mxu0 0.0
    %1581 = vmatpush1.msra.mxu0 0.0
    %1582 = vmatprep.subr.mxu0 0.0
    %1583 = vmatpush1.msra.mxu0 0.0
    %1584 = vmatprep.subr.mxu0 0.0
    %1585 = vmatpush1.msra.mxu0 0.0
    %1586 = vmatprep.subr.mxu0 0.0
    %1587 = vmatpush1.msra.mxu0 0.0
    %1588 = vmatprep.subr.mxu0 0.0
    %1589 = vmatpush1.msra.mxu0 0.0
    %1590 = vmatprep.subr.mxu0 0.0
    %1591 = vmatpush1.msra.mxu0 0.0
    %1592 = vmatprep.subr.mxu0 0.0
    %1593 = vmatpush1.msra.mxu0 0.0
    %1594 = vmatprep.subr.mxu0 0.0
    %1595 = vmatpush1.msra.mxu0 0.0
    %1596 = vmatprep.subr.mxu0 0.0
    %1597 = vmatpush1.msra.mxu0 0.0
    %1598 = vmatprep.subr.mxu0 0.0
    %1599 = vmatpush1.msra.mxu0 0.0
    %1600 = vmatprep.subr.mxu0 0.0
    %1601 = vmatpush1.msra.mxu0 0.0
    %1602 = vmatprep.subr.mxu0 0.0
    %1603 = vmatpush1.msra.mxu0 0.0
    %1604 = vmatprep.subr.mxu0 0.0
    %1605 = vmatpush1.msra.mxu0 0.0
    %1606 = vmatprep.subr.mxu0 0.0
    %1607 = vmatpush1.msra.mxu0 0.0
    %1608 = vmatprep.mubr.f32.mxu0 0.0
    %1609 = vmatmul.mubr.f32.gmra.mrb[0].mxu0 %v1542
    %v1610 = vpop.f32.mrb[0].mxu0
    %v1611 = vadd.f32 0.0, %v1610
    %v1612 = vpop.f32.mrb[0].mxu0
    %1613 = vdwg.mxu0
    %v1614 = vadd.f32 %v1535, %v1611
    %v1615 = vxor.u32 %v1614, 2147483648
    %v1616 = vmul.f32 %v1615, 1.442695
    %v1617 = vpow.pop %v1616
    %v1618 = vadd.f32 %v1617, 1.0
    %v1619 = vrcp.pop %v1618
    %v1620 = vmul.f32 1.0, %v1619
    %v1621 = vtanh.pop %v1614
    %v1622 = vld [vmem:[#allocation5] sm:$0x3]
    %1624 = vrot.lane.b32.xlu0 %v1622, 32
    %v1625 = vpop.permute.xlu0 %1624
    %v1627 = vmul.f32 %v1620, %v1625
    %1629 = vrot.lane.b32.xlu0 %v1621, 32
    %v1630 = vpop.permute.xlu0 %1629
    %v1632 = vmul.f32 %v1620, %v1630
    %1634 = vrot.lane.b32.xlu0 %v1632, 32
    %v1635 = vpop.permute.xlu0 %1634
    %v1637 = vadd.f32 %v1627, %v1635
    %v1638 = vtanh.pop %v1637
    %1640 = vrot.lane.b32.xlu0 %v1638, 32
    %v1641 = vpop.permute.xlu0 %1640
    %v1643 = vmul.f32 %v1620, %v1641
    %1645 = vrot.lane.b32.xlu0 %v1637, 96
    %v1646 = vpop.permute.xlu0 %1645
    %1648 = vst.msk [vmem:[#allocation5] sm:$0x3] %vm805, %v1646
    %1650 = vrot.lane.b32.xlu0 %v1643, 64
    %v1651 = vpop.permute.xlu0 %1650
    %1653 = vst.msk [vmem:[#allocation4] sm:$0x3] %vm805, %v1651
    %s1654 = scalar_lea.vmem [#allocation2], 12
    %1655 = vst.msk [vmem:[%s1654] sm:$0x3] %vm805, %v1651
    %v1656 = vld [vmem:[%s802] sm:$0x3]
    %v1657 = vld [vmem:[#allocation4] sm:$0x3]
    %v1658 = vld [vmem:[%s4] sm:$0xff]
    %v1659 = vld [vmem:[%s4 + $0x8] sm:$0xff]
    %v1660 = vld [vmem:[%s4 + $0x10] sm:$0xff]
    %v1661 = vld [vmem:[%s4 + $0x18] sm:$0xff]
    %v1663 = vsel %vm815, %v1657, 0
    %1665 = vmatprep.subr.mxu0 0.0
    %1666 = vmatpush1.msra.mxu0 %v1658
    %1667 = vmatprep.subr.mxu0 0.0
    %1668 = vmatpush1.msra.mxu0 %v1659
    %1669 = vmatprep.subr.mxu0 0.0
    %1670 = vmatpush1.msra.mxu0 %v1660
    %1671 = vmatprep.subr.mxu0 0.0
    %1672 = vmatpush1.msra.mxu0 %v1661
    %1673 = vmatprep.subr.mxu0 0.0
    %1674 = vmatpush1.msra.mxu0 0.0
    %1675 = vmatprep.subr.mxu0 0.0
    %1676 = vmatpush1.msra.mxu0 0.0
    %1677 = vmatprep.subr.mxu0 0.0
    %1678 = vmatpush1.msra.mxu0 0.0
    %1679 = vmatprep.subr.mxu0 0.0
    %1680 = vmatpush1.msra.mxu0 0.0
    %1681 = vmatprep.subr.mxu0 0.0
    %1682 = vmatpush1.msra.mxu0 0.0
    %1683 = vmatprep.subr.mxu0 0.0
    %1684 = vmatpush1.msra.mxu0 0.0
    %1685 = vmatprep.subr.mxu0 0.0
    %1686 = vmatpush1.msra.mxu0 0.0
    %1687 = vmatprep.subr.mxu0 0.0
    %1688 = vmatpush1.msra.mxu0 0.0
    %1689 = vmatprep.subr.mxu0 0.0
    %1690 = vmatpush1.msra.mxu0 0.0
    %1691 = vmatprep.subr.mxu0 0.0
    %1692 = vmatpush1.msra.mxu0 0.0
    %1693 = vmatprep.subr.mxu0 0.0
    %1694 = vmatpush1.msra.mxu0 0.0
    %1695 = vmatprep.subr.mxu0 0.0
    %1696 = vmatpush1.msra.mxu0 0.0
    %1697 = vmatprep.subr.mxu0 0.0
    %1698 = vmatpush1.msra.mxu0 0.0
    %1699 = vmatprep.subr.mxu0 0.0
    %1700 = vmatpush1.msra.mxu0 0.0
    %1701 = vmatprep.subr.mxu0 0.0
    %1702 = vmatpush1.msra.mxu0 0.0
    %1703 = vmatprep.subr.mxu0 0.0
    %1704 = vmatpush1.msra.mxu0 0.0
    %1705 = vmatprep.subr.mxu0 0.0
    %1706 = vmatpush1.msra.mxu0 0.0
    %1707 = vmatprep.subr.mxu0 0.0
    %1708 = vmatpush1.msra.mxu0 0.0
    %1709 = vmatprep.subr.mxu0 0.0
    %1710 = vmatpush1.msra.mxu0 0.0
    %1711 = vmatprep.subr.mxu0 0.0
    %1712 = vmatpush1.msra.mxu0 0.0
    %1713 = vmatprep.subr.mxu0 0.0
    %1714 = vmatpush1.msra.mxu0 0.0
    %1715 = vmatprep.subr.mxu0 0.0
    %1716 = vmatpush1.msra.mxu0 0.0
    %1717 = vmatprep.subr.mxu0 0.0
    %1718 = vmatpush1.msra.mxu0 0.0
    %1719 = vmatprep.subr.mxu0 0.0
    %1720 = vmatpush1.msra.mxu0 0.0
    %1721 = vmatprep.subr.mxu0 0.0
    %1722 = vmatpush1.msra.mxu0 0.0
    %1723 = vmatprep.subr.mxu0 0.0
    %1724 = vmatpush1.msra.mxu0 0.0
    %1725 = vmatprep.subr.mxu0 0.0
    %1726 = vmatpush1.msra.mxu0 0.0
    %1727 = vmatprep.subr.mxu0 0.0
    %1728 = vmatpush1.msra.mxu0 0.0
    %1729 = vmatprep.mubr.f32.mxu0 0.0
    %1730 = vmatmul.mubr.f32.gmra.mrb[0].mxu0 %v1663
    %v1731 = vpop.f32.mrb[0].mxu0
    %v1732 = vadd.f32 0.0, %v1731
    %v1733 = vpop.f32.mrb[0].mxu0
    %1734 = vdwg.mxu0
    %v1735 = vadd.f32 %v1656, %v1732
    %v1736 = vxor.u32 %v1735, 2147483648
    %v1737 = vmul.f32 %v1736, 1.442695
    %v1738 = vpow.pop %v1737
    %v1739 = vadd.f32 %v1738, 1.0
    %v1740 = vrcp.pop %v1739
    %v1741 = vmul.f32 1.0, %v1740
    %v1742 = vtanh.pop %v1735
    %v1743 = vld [vmem:[#allocation5] sm:$0x3]
    %1745 = vrot.lane.b32.xlu0 %v1743, 32
    %v1746 = vpop.permute.xlu0 %1745
    %v1748 = vmul.f32 %v1741, %v1746
    %1750 = vrot.lane.b32.xlu0 %v1742, 32
    %v1751 = vpop.permute.xlu0 %1750
    %v1753 = vmul.f32 %v1741, %v1751
    %1755 = vrot.lane.b32.xlu0 %v1753, 32
    %v1756 = vpop.permute.xlu0 %1755
    %v1758 = vadd.f32 %v1748, %v1756
    %v1759 = vtanh.pop %v1758
    %1761 = vrot.lane.b32.xlu0 %v1759, 32
    %v1762 = vpop.permute.xlu0 %1761
    %v1764 = vmul.f32 %v1741, %v1762
    %1766 = vrot.lane.b32.xlu0 %v1758, 96
    %v1767 = vpop.permute.xlu0 %1766
    %1769 = vst.msk [vmem:[#allocation5] sm:$0x3] %vm805, %v1767
    %1771 = vrot.lane.b32.xlu0 %v1764, 64
    %v1772 = vpop.permute.xlu0 %1771
    %1774 = vst.msk [vmem:[#allocation4] sm:$0x3] %vm805, %v1772
    %s1775 = scalar_lea.vmem [#allocation2], 14
    %1776 = vst.msk [vmem:[%s1775] sm:$0x3] %vm805, %v1772
    %v1777 = vld [vmem:[#allocation4] sm:$0x3]
    %1778 = vst.msk [vmem:[#allocation16] sm:$0x3] %vm805, %v1777
    %v1779 = vld [vmem:[#allocation5] sm:$0x3]
    %1780 = vst.msk [vmem:[#allocation18] sm:$0x3] %vm805, %v1779
    %v1781 = vld [vmem:[#allocation2] sm:$0x3]
    %v1782 = vld [vmem:[%s6] sm:$0xff]
    %v1783 = vld [vmem:[%s6 + $0x8] sm:$0xff]
    %v1784 = vld [vmem:[%s6 + $0x10] sm:$0xff]
    %v1785 = vld [vmem:[%s6 + $0x18] sm:$0xff]
    %v1786 = vld [vmem:[%s8] sm:$0x1]
    %v1788 = vlaneseq
    %v1789 = vshrl.u32 %v1788, 7
    %v1790 = vsub.s32 0, %v1789
    %v1791 = vrot.slane %v1786, %v1790
    %v1794 = vsel %vm815, %v1781, 0
    %1796 = vmatprep.subr.mxu0 0.0
    %1797 = vmatpush1.msra.mxu0 %v1782
    %1798 = vmatprep.subr.mxu0 0.0
    %1799 = vmatpush1.msra.mxu0 %v1783
    %1800 = vmatprep.subr.mxu0 0.0
    %1801 = vmatpush1.msra.mxu0 %v1784
    %1802 = vmatprep.subr.mxu0 0.0
    %1803 = vmatpush1.msra.mxu0 %v1785
    %1804 = vmatprep.subr.mxu0 0.0
    %1805 = vmatpush1.msra.mxu0 0.0
    %1806 = vmatprep.subr.mxu0 0.0
    %1807 = vmatpush1.msra.mxu0 0.0
    %1808 = vmatprep.subr.mxu0 0.0
    %1809 = vmatpush1.msra.mxu0 0.0
    %1810 = vmatprep.subr.mxu0 0.0
    %1811 = vmatpush1.msra.mxu0 0.0
    %1812 = vmatprep.subr.mxu0 0.0
    %1813 = vmatpush1.msra.mxu0 0.0
    %1814 = vmatprep.subr.mxu0 0.0
    %1815 = vmatpush1.msra.mxu0 0.0
    %1816 = vmatprep.subr.mxu0 0.0
    %1817 = vmatpush1.msra.mxu0 0.0
    %1818 = vmatprep.subr.mxu0 0.0
    %1819 = vmatpush1.msra.mxu0 0.0
    %1820 = vmatprep.subr.mxu0 0.0
    %1821 = vmatpush1.msra.mxu0 0.0
    %1822 = vmatprep.subr.mxu0 0.0
    %1823 = vmatpush1.msra.mxu0 0.0
    %1824 = vmatprep.subr.mxu0 0.0
    %1825 = vmatpush1.msra.mxu0 0.0
    %1826 = vmatprep.subr.mxu0 0.0
    %1827 = vmatpush1.msra.mxu0 0.0
    %1828 = vmatprep.subr.mxu0 0.0
    %1829 = vmatpush1.msra.mxu0 0.0
    %1830 = vmatprep.subr.mxu0 0.0
    %1831 = vmatpush1.msra.mxu0 0.0
    %1832 = vmatprep.subr.mxu0 0.0
    %1833 = vmatpush1.msra.mxu0 0.0
    %1834 = vmatprep.subr.mxu0 0.0
    %1835 = vmatpush1.msra.mxu0 0.0
    %1836 = vmatprep.subr.mxu0 0.0
    %1837 = vmatpush1.msra.mxu0 0.0
    %1838 = vmatprep.subr.mxu0 0.0
    %1839 = vmatpush1.msra.mxu0 0.0
    %1840 = vmatprep.subr.mxu0 0.0
    %1841 = vmatpush1.msra.mxu0 0.0
    %1842 = vmatprep.subr.mxu0 0.0
    %1843 = vmatpush1.msra.mxu0 0.0
    %1844 = vmatprep.subr.mxu0 0.0
    %1845 = vmatpush1.msra.mxu0 0.0
    %1846 = vmatprep.subr.mxu0 0.0
    %1847 = vmatpush1.msra.mxu0 0.0
    %1848 = vmatprep.subr.mxu0 0.0
    %1849 = vmatpush1.msra.mxu0 0.0
    %1850 = vmatprep.subr.mxu0 0.0
    %1851 = vmatpush1.msra.mxu0 0.0
    %1852 = vmatprep.subr.mxu0 0.0
    %1853 = vmatpush1.msra.mxu0 0.0
    %1854 = vmatprep.subr.mxu0 0.0
    %1855 = vmatpush1.msra.mxu0 0.0
    %1856 = vmatprep.subr.mxu0 0.0
    %1857 = vmatpush1.msra.mxu0 0.0
    %1858 = vmatprep.subr.mxu0 0.0
    %1859 = vmatpush1.msra.mxu0 0.0
    %1860 = vmatprep.mubr.f32.mxu0 0.0
    %1861 = vmatmul.mubr.f32.gmra.mrb[0].mxu0 %v1794
    %v1862 = vpop.f32.mrb[0].mxu0
    %v1863 = vadd.f32 %v1791, %v1862
    %v1864 = vpop.f32.mrb[0].mxu0
    %1865 = vdwg.mxu0
    %1866 = vst [vmem:[#allocation3] sm:$0x3] %v1863
    %v1867 = vld [vmem:[%s1049] sm:$0x3]
    %v1868 = vld [vmem:[%s6] sm:$0xff]
    %v1869 = vld [vmem:[%s6 + $0x8] sm:$0xff]
    %v1870 = vld [vmem:[%s6 + $0x10] sm:$0xff]
    %v1871 = vld [vmem:[%s6 + $0x18] sm:$0xff]
    %v1872 = vld [vmem:[%s8] sm:$0x1]
    %v1874 = vlaneseq
    %v1875 = vshrl.u32 %v1874, 7
    %v1876 = vsub.s32 0, %v1875
    %v1877 = vrot.slane %v1872, %v1876
    %v1880 = vsel %vm815, %v1867, 0
    %1882 = vmatprep.subr.mxu0 0.0
    %1883 = vmatpush1.msra.mxu0 %v1868
    %1884 = vmatprep.subr.mxu0 0.0
    %1885 = vmatpush1.msra.mxu0 %v1869
    %1886 = vmatprep.subr.mxu0 0.0
    %1887 = vmatpush1.msra.mxu0 %v1870
    %1888 = vmatprep.subr.mxu0 0.0
    %1889 = vmatpush1.msra.mxu0 %v1871
    %1890 = vmatprep.subr.mxu0 0.0
    %1891 = vmatpush1.msra.mxu0 0.0
    %1892 = vmatprep.subr.mxu0 0.0
    %1893 = vmatpush1.msra.mxu0 0.0
    %1894 = vmatprep.subr.mxu0 0.0
    %1895 = vmatpush1.msra.mxu0 0.0
    %1896 = vmatprep.subr.mxu0 0.0
    %1897 = vmatpush1.msra.mxu0 0.0
    %1898 = vmatprep.subr.mxu0 0.0
    %1899 = vmatpush1.msra.mxu0 0.0
    %1900 = vmatprep.subr.mxu0 0.0
    %1901 = vmatpush1.msra.mxu0 0.0
    %1902 = vmatprep.subr.mxu0 0.0
    %1903 = vmatpush1.msra.mxu0 0.0
    %1904 = vmatprep.subr.mxu0 0.0
    %1905 = vmatpush1.msra.mxu0 0.0
    %1906 = vmatprep.subr.mxu0 0.0
    %1907 = vmatpush1.msra.mxu0 0.0
    %1908 = vmatprep.subr.mxu0 0.0
    %1909 = vmatpush1.msra.mxu0 0.0
    %1910 = vmatprep.subr.mxu0 0.0
    %1911 = vmatpush1.msra.mxu0 0.0
    %1912 = vmatprep.subr.mxu0 0.0
    %1913 = vmatpush1.msra.mxu0 0.0
    %1914 = vmatprep.subr.mxu0 0.0
    %1915 = vmatpush1.msra.mxu0 0.0
    %1916 = vmatprep.subr.mxu0 0.0
    %1917 = vmatpush1.msra.mxu0 0.0
    %1918 = vmatprep.subr.mxu0 0.0
    %1919 = vmatpush1.msra.mxu0 0.0
    %1920 = vmatprep.subr.mxu0 0.0
    %1921 = vmatpush1.msra.mxu0 0.0
    %1922 = vmatprep.subr.mxu0 0.0
    %1923 = vmatpush1.msra.mxu0 0.0
    %1924 = vmatprep.subr.mxu0 0.0
    %1925 = vmatpush1.msra.mxu0 0.0
    %1926 = vmatprep.subr.mxu0 0.0
    %1927 = vmatpush1.msra.mxu0 0.0
    %1928 = vmatprep.subr.mxu0 0.0
    %1929 = vmatpush1.msra.mxu0 0.0
    %1930 = vmatprep.subr.mxu0 0.0
    %1931 = vmatpush1.msra.mxu0 0.0
    %1932 = vmatprep.subr.mxu0 0.0
    %1933 = vmatpush1.msra.mxu0 0.0
    %1934 = vmatprep.subr.mxu0 0.0
    %1935 = vmatpush1.msra.mxu0 0.0
    %1936 = vmatprep.subr.mxu0 0.0
    %1937 = vmatpush1.msra.mxu0 0.0
    %1938 = vmatprep.subr.mxu0 0.0
    %1939 = vmatpush1.msra.mxu0 0.0
    %1940 = vmatprep.subr.mxu0 0.0
    %1941 = vmatpush1.msra.mxu0 0.0
    %1942 = vmatprep.subr.mxu0 0.0
    %1943 = vmatpush1.msra.mxu0 0.0
    %1944 = vmatprep.subr.mxu0 0.0
    %1945 = vmatpush1.msra.mxu0 0.0
    %1946 = vmatprep.mubr.f32.mxu0 0.0
    %1947 = vmatmul.mubr.f32.gmra.mrb[0].mxu0 %v1880
    %v1948 = vpop.f32.mrb[0].mxu0
    %v1949 = vadd.f32 %v1877, %v1948
    %v1950 = vpop.f32.mrb[0].mxu0
    %1951 = vdwg.mxu0
    %1952 = vst [vmem:[%s286] sm:$0x3] %v1949
    %v1953 = vld [vmem:[%s1170] sm:$0x3]
    %v1954 = vld [vmem:[%s6] sm:$0xff]
    %v1955 = vld [vmem:[%s6 + $0x8] sm:$0xff]
    %v1956 = vld [vmem:[%s6 + $0x10] sm:$0xff]
    %v1957 = vld [vmem:[%s6 + $0x18] sm:$0xff]
    %v1958 = vld [vmem:[%s8] sm:$0x1]
    %v1960 = vlaneseq
    %v1961 = vshrl.u32 %v1960, 7
    %v1962 = vsub.s32 0, %v1961
    %v1963 = vrot.slane %v1958, %v1962
    %v1966 = vsel %vm815, %v1953, 0
    %1968 = vmatprep.subr.mxu0 0.0
    %1969 = vmatpush1.msra.mxu0 %v1954
    %1970 = vmatprep.subr.mxu0 0.0
    %1971 = vmatpush1.msra.mxu0 %v1955
    %1972 = vmatprep.subr.mxu0 0.0
    %1973 = vmatpush1.msra.mxu0 %v1956
    %1974 = vmatprep.subr.mxu0 0.0
    %1975 = vmatpush1.msra.mxu0 %v1957
    %1976 = vmatprep.subr.mxu0 0.0
    %1977 = vmatpush1.msra.mxu0 0.0
    %1978 = vmatprep.subr.mxu0 0.0
    %1979 = vmatpush1.msra.mxu0 0.0
    %1980 = vmatprep.subr.mxu0 0.0
    %1981 = vmatpush1.msra.mxu0 0.0
    %1982 = vmatprep.subr.mxu0 0.0
    %1983 = vmatpush1.msra.mxu0 0.0
    %1984 = vmatprep.subr.mxu0 0.0
    %1985 = vmatpush1.msra.mxu0 0.0
    %1986 = vmatprep.subr.mxu0 0.0
    %1987 = vmatpush1.msra.mxu0 0.0
    %1988 = vmatprep.subr.mxu0 0.0
    %1989 = vmatpush1.msra.mxu0 0.0
    %1990 = vmatprep.subr.mxu0 0.0
    %1991 = vmatpush1.msra.mxu0 0.0
    %1992 = vmatprep.subr.mxu0 0.0
    %1993 = vmatpush1.msra.mxu0 0.0
    %1994 = vmatprep.subr.mxu0 0.0
    %1995 = vmatpush1.msra.mxu0 0.0
    %1996 = vmatprep.subr.mxu0 0.0
    %1997 = vmatpush1.msra.mxu0 0.0
    %1998 = vmatprep.subr.mxu0 0.0
    %1999 = vmatpush1.msra.mxu0 0.0
    %2000 = vmatprep.subr.mxu0 0.0
    %2001 = vmatpush1.msra.mxu0 0.0
    %2002 = vmatprep.subr.mxu0 0.0
    %2003 = vmatpush1.msra.mxu0 0.0
    %2004 = vmatprep.subr.mxu0 0.0
    %2005 = vmatpush1.msra.mxu0 0.0
    %2006 = vmatprep.subr.mxu0 0.0
    %2007 = vmatpush1.msra.mxu0 0.0
    %2008 = vmatprep.subr.mxu0 0.0
    %2009 = vmatpush1.msra.mxu0 0.0
    %2010 = vmatprep.subr.mxu0 0.0
    %2011 = vmatpush1.msra.mxu0 0.0
    %2012 = vmatprep.subr.mxu0 0.0
    %2013 = vmatpush1.msra.mxu0 0.0
    %2014 = vmatprep.subr.mxu0 0.0
    %2015 = vmatpush1.msra.mxu0 0.0
    %2016 = vmatprep.subr.mxu0 0.0
    %2017 = vmatpush1.msra.mxu0 0.0
    %2018 = vmatprep.subr.mxu0 0.0
    %2019 = vmatpush1.msra.mxu0 0.0
    %2020 = vmatprep.subr.mxu0 0.0
    %2021 = vmatpush1.msra.mxu0 0.0
    %2022 = vmatprep.subr.mxu0 0.0
    %2023 = vmatpush1.msra.mxu0 0.0
    %2024 = vmatprep.subr.mxu0 0.0
    %2025 = vmatpush1.msra.mxu0 0.0
    %2026 = vmatprep.subr.mxu0 0.0
    %2027 = vmatpush1.msra.mxu0 0.0
    %2028 = vmatprep.subr.mxu0 0.0
    %2029 = vmatpush1.msra.mxu0 0.0
    %2030 = vmatprep.subr.mxu0 0.0
    %2031 = vmatpush1.msra.mxu0 0.0
    %2032 = vmatprep.mubr.f32.mxu0 0.0
    %2033 = vmatmul.mubr.f32.gmra.mrb[0].mxu0 %v1966
    %v2034 = vpop.f32.mrb[0].mxu0
    %v2035 = vadd.f32 %v1963, %v2034
    %v2036 = vpop.f32.mrb[0].mxu0
    %2037 = vdwg.mxu0
    %2038 = vst [vmem:[%s372] sm:$0x3] %v2035
    %v2039 = vld [vmem:[%s1291] sm:$0x3]
    %v2040 = vld [vmem:[%s6] sm:$0xff]
    %v2041 = vld [vmem:[%s6 + $0x8] sm:$0xff]
    %v2042 = vld [vmem:[%s6 + $0x10] sm:$0xff]
    %v2043 = vld [vmem:[%s6 + $0x18] sm:$0xff]
    %v2044 = vld [vmem:[%s8] sm:$0x1]
    %v2046 = vlaneseq
    %v2047 = vshrl.u32 %v2046, 7
    %v2048 = vsub.s32 0, %v2047
    %v2049 = vrot.slane %v2044, %v2048
    %v2052 = vsel %vm815, %v2039, 0
    %2054 = vmatprep.subr.mxu0 0.0
    %2055 = vmatpush1.msra.mxu0 %v2040
    %2056 = vmatprep.subr.mxu0 0.0
    %2057 = vmatpush1.msra.mxu0 %v2041
    %2058 = vmatprep.subr.mxu0 0.0
    %2059 = vmatpush1.msra.mxu0 %v2042
    %2060 = vmatprep.subr.mxu0 0.0
    %2061 = vmatpush1.msra.mxu0 %v2043
    %2062 = vmatprep.subr.mxu0 0.0
    %2063 = vmatpush1.msra.mxu0 0.0
    %2064 = vmatprep.subr.mxu0 0.0
    %2065 = vmatpush1.msra.mxu0 0.0
    %2066 = vmatprep.subr.mxu0 0.0
    %2067 = vmatpush1.msra.mxu0 0.0
    %2068 = vmatprep.subr.mxu0 0.0
    %2069 = vmatpush1.msra.mxu0 0.0
    %2070 = vmatprep.subr.mxu0 0.0
    %2071 = vmatpush1.msra.mxu0 0.0
    %2072 = vmatprep.subr.mxu0 0.0
    %2073 = vmatpush1.msra.mxu0 0.0
    %2074 = vmatprep.subr.mxu0 0.0
    %2075 = vmatpush1.msra.mxu0 0.0
    %2076 = vmatprep.subr.mxu0 0.0
    %2077 = vmatpush1.msra.mxu0 0.0
    %2078 = vmatprep.subr.mxu0 0.0
    %2079 = vmatpush1.msra.mxu0 0.0
    %2080 = vmatprep.subr.mxu0 0.0
    %2081 = vmatpush1.msra.mxu0 0.0
    %2082 = vmatprep.subr.mxu0 0.0
    %2083 = vmatpush1.msra.mxu0 0.0
    %2084 = vmatprep.subr.mxu0 0.0
    %2085 = vmatpush1.msra.mxu0 0.0
    %2086 = vmatprep.subr.mxu0 0.0
    %2087 = vmatpush1.msra.mxu0 0.0
    %2088 = vmatprep.subr.mxu0 0.0
    %2089 = vmatpush1.msra.mxu0 0.0
    %2090 = vmatprep.subr.mxu0 0.0
    %2091 = vmatpush1.msra.mxu0 0.0
    %2092 = vmatprep.subr.mxu0 0.0
    %2093 = vmatpush1.msra.mxu0 0.0
    %2094 = vmatprep.subr.mxu0 0.0
    %2095 = vmatpush1.msra.mxu0 0.0
    %2096 = vmatprep.subr.mxu0 0.0
    %2097 = vmatpush1.msra.mxu0 0.0
    %2098 = vmatprep.subr.mxu0 0.0
    %2099 = vmatpush1.msra.mxu0 0.0
    %2100 = vmatprep.subr.mxu0 0.0
    %2101 = vmatpush1.msra.mxu0 0.0
    %2102 = vmatprep.subr.mxu0 0.0
    %2103 = vmatpush1.msra.mxu0 0.0
    %2104 = vmatprep.subr.mxu0 0.0
    %2105 = vmatpush1.msra.mxu0 0.0
    %2106 = vmatprep.subr.mxu0 0.0
    %2107 = vmatpush1.msra.mxu0 0.0
    %2108 = vmatprep.subr.mxu0 0.0
    %2109 = vmatpush1.msra.mxu0 0.0
    %2110 = vmatprep.subr.mxu0 0.0
    %2111 = vmatpush1.msra.mxu0 0.0
    %2112 = vmatprep.subr.mxu0 0.0
    %2113 = vmatpush1.msra.mxu0 0.0
    %2114 = vmatprep.subr.mxu0 0.0
    %2115 = vmatpush1.msra.mxu0 0.0
    %2116 = vmatprep.subr.mxu0 0.0
    %2117 = vmatpush1.msra.mxu0 0.0
    %2118 = vmatprep.mubr.f32.mxu0 0.0
    %2119 = vmatmul.mubr.f32.gmra.mrb[0].mxu0 %v2052
    %v2120 = vpop.f32.mrb[0].mxu0
    %v2121 = vadd.f32 %v2049, %v2120
    %v2122 = vpop.f32.mrb[0].mxu0
    %2123 = vdwg.mxu0
    %2124 = vst [vmem:[%s458] sm:$0x3] %v2121
    %v2125 = vld [vmem:[%s1412] sm:$0x3]
    %v2126 = vld [vmem:[%s6] sm:$0xff]
    %v2127 = vld [vmem:[%s6 + $0x8] sm:$0xff]
    %v2128 = vld [vmem:[%s6 + $0x10] sm:$0xff]
    %v2129 = vld [vmem:[%s6 + $0x18] sm:$0xff]
    %v2130 = vld [vmem:[%s8] sm:$0x1]
    %v2132 = vlaneseq
    %v2133 = vshrl.u32 %v2132, 7
    %v2134 = vsub.s32 0, %v2133
    %v2135 = vrot.slane %v2130, %v2134
    %v2138 = vsel %vm815, %v2125, 0
    %2140 = vmatprep.subr.mxu0 0.0
    %2141 = vmatpush1.msra.mxu0 %v2126
    %2142 = vmatprep.subr.mxu0 0.0
    %2143 = vmatpush1.msra.mxu0 %v2127
    %2144 = vmatprep.subr.mxu0 0.0
    %2145 = vmatpush1.msra.mxu0 %v2128
    %2146 = vmatprep.subr.mxu0 0.0
    %2147 = vmatpush1.msra.mxu0 %v2129
    %2148 = vmatprep.subr.mxu0 0.0
    %2149 = vmatpush1.msra.mxu0 0.0
    %2150 = vmatprep.subr.mxu0 0.0
    %2151 = vmatpush1.msra.mxu0 0.0
    %2152 = vmatprep.subr.mxu0 0.0
    %2153 = vmatpush1.msra.mxu0 0.0
    %2154 = vmatprep.subr.mxu0 0.0
    %2155 = vmatpush1.msra.mxu0 0.0
    %2156 = vmatprep.subr.mxu0 0.0
    %2157 = vmatpush1.msra.mxu0 0.0
    %2158 = vmatprep.subr.mxu0 0.0
    %2159 = vmatpush1.msra.mxu0 0.0
    %2160 = vmatprep.subr.mxu0 0.0
    %2161 = vmatpush1.msra.mxu0 0.0
    %2162 = vmatprep.subr.mxu0 0.0
    %2163 = vmatpush1.msra.mxu0 0.0
    %2164 = vmatprep.subr.mxu0 0.0
    %2165 = vmatpush1.msra.mxu0 0.0
    %2166 = vmatprep.subr.mxu0 0.0
    %2167 = vmatpush1.msra.mxu0 0.0
    %2168 = vmatprep.subr.mxu0 0.0
    %2169 = vmatpush1.msra.mxu0 0.0
    %2170 = vmatprep.subr.mxu0 0.0
    %2171 = vmatpush1.msra.mxu0 0.0
    %2172 = vmatprep.subr.mxu0 0.0
    %2173 = vmatpush1.msra.mxu0 0.0
    %2174 = vmatprep.subr.mxu0 0.0
    %2175 = vmatpush1.msra.mxu0 0.0
    %2176 = vmatprep.subr.mxu0 0.0
    %2177 = vmatpush1.msra.mxu0 0.0
    %2178 = vmatprep.subr.mxu0 0.0
    %2179 = vmatpush1.msra.mxu0 0.0
    %2180 = vmatprep.subr.mxu0 0.0
    %2181 = vmatpush1.msra.mxu0 0.0
    %2182 = vmatprep.subr.mxu0 0.0
    %2183 = vmatpush1.msra.mxu0 0.0
    %2184 = vmatprep.subr.mxu0 0.0
    %2185 = vmatpush1.msra.mxu0 0.0
    %2186 = vmatprep.subr.mxu0 0.0
    %2187 = vmatpush1.msra.mxu0 0.0
    %2188 = vmatprep.subr.mxu0 0.0
    %2189 = vmatpush1.msra.mxu0 0.0
    %2190 = vmatprep.subr.mxu0 0.0
    %2191 = vmatpush1.msra.mxu0 0.0
    %2192 = vmatprep.subr.mxu0 0.0
    %2193 = vmatpush1.msra.mxu0 0.0
    %2194 = vmatprep.subr.mxu0 0.0
    %2195 = vmatpush1.msra.mxu0 0.0
    %2196 = vmatprep.subr.mxu0 0.0
    %2197 = vmatpush1.msra.mxu0 0.0
    %2198 = vmatprep.subr.mxu0 0.0
    %2199 = vmatpush1.msra.mxu0 0.0
    %2200 = vmatprep.subr.mxu0 0.0
    %2201 = vmatpush1.msra.mxu0 0.0
    %2202 = vmatprep.subr.mxu0 0.0
    %2203 = vmatpush1.msra.mxu0 0.0
    %2204 = vmatprep.mubr.f32.mxu0 0.0
    %2205 = vmatmul.mubr.f32.gmra.mrb[0].mxu0 %v2138
    %v2206 = vpop.f32.mrb[0].mxu0
    %v2207 = vadd.f32 %v2135, %v2206
    %v2208 = vpop.f32.mrb[0].mxu0
    %2209 = vdwg.mxu0
    %2210 = vst [vmem:[%s544] sm:$0x3] %v2207
    %v2211 = vld [vmem:[%s1533] sm:$0x3]
    %v2212 = vld [vmem:[%s6] sm:$0xff]
    %v2213 = vld [vmem:[%s6 + $0x8] sm:$0xff]
    %v2214 = vld [vmem:[%s6 + $0x10] sm:$0xff]
    %v2215 = vld [vmem:[%s6 + $0x18] sm:$0xff]
    %v2216 = vld [vmem:[%s8] sm:$0x1]
    %v2218 = vlaneseq
    %v2219 = vshrl.u32 %v2218, 7
    %v2220 = vsub.s32 0, %v2219
    %v2221 = vrot.slane %v2216, %v2220
    %v2224 = vsel %vm815, %v2211, 0
    %2226 = vmatprep.subr.mxu0 0.0
    %2227 = vmatpush1.msra.mxu0 %v2212
    %2228 = vmatprep.subr.mxu0 0.0
    %2229 = vmatpush1.msra.mxu0 %v2213
    %2230 = vmatprep.subr.mxu0 0.0
    %2231 = vmatpush1.msra.mxu0 %v2214
    %2232 = vmatprep.subr.mxu0 0.0
    %2233 = vmatpush1.msra.mxu0 %v2215
    %2234 = vmatprep.subr.mxu0 0.0
    %2235 = vmatpush1.msra.mxu0 0.0
    %2236 = vmatprep.subr.mxu0 0.0
    %2237 = vmatpush1.msra.mxu0 0.0
    %2238 = vmatprep.subr.mxu0 0.0
    %2239 = vmatpush1.msra.mxu0 0.0
    %2240 = vmatprep.subr.mxu0 0.0
    %2241 = vmatpush1.msra.mxu0 0.0
    %2242 = vmatprep.subr.mxu0 0.0
    %2243 = vmatpush1.msra.mxu0 0.0
    %2244 = vmatprep.subr.mxu0 0.0
    %2245 = vmatpush1.msra.mxu0 0.0
    %2246 = vmatprep.subr.mxu0 0.0
    %2247 = vmatpush1.msra.mxu0 0.0
    %2248 = vmatprep.subr.mxu0 0.0
    %2249 = vmatpush1.msra.mxu0 0.0
    %2250 = vmatprep.subr.mxu0 0.0
    %2251 = vmatpush1.msra.mxu0 0.0
    %2252 = vmatprep.subr.mxu0 0.0
    %2253 = vmatpush1.msra.mxu0 0.0
    %2254 = vmatprep.subr.mxu0 0.0
    %2255 = vmatpush1.msra.mxu0 0.0
    %2256 = vmatprep.subr.mxu0 0.0
    %2257 = vmatpush1.msra.mxu0 0.0
    %2258 = vmatprep.subr.mxu0 0.0
    %2259 = vmatpush1.msra.mxu0 0.0
    %2260 = vmatprep.subr.mxu0 0.0
    %2261 = vmatpush1.msra.mxu0 0.0
    %2262 = vmatprep.subr.mxu0 0.0
    %2263 = vmatpush1.msra.mxu0 0.0
    %2264 = vmatprep.subr.mxu0 0.0
    %2265 = vmatpush1.msra.mxu0 0.0
    %2266 = vmatprep.subr.mxu0 0.0
    %2267 = vmatpush1.msra.mxu0 0.0
    %2268 = vmatprep.subr.mxu0 0.0
    %2269 = vmatpush1.msra.mxu0 0.0
    %2270 = vmatprep.subr.mxu0 0.0
    %2271 = vmatpush1.msra.mxu0 0.0
    %2272 = vmatprep.subr.mxu0 0.0
    %2273 = vmatpush1.msra.mxu0 0.0
    %2274 = vmatprep.subr.mxu0 0.0
    %2275 = vmatpush1.msra.mxu0 0.0
    %2276 = vmatprep.subr.mxu0 0.0
    %2277 = vmatpush1.msra.mxu0 0.0
    %2278 = vmatprep.subr.mxu0 0.0
    %2279 = vmatpush1.msra.mxu0 0.0
    %2280 = vmatprep.subr.mxu0 0.0
    %2281 = vmatpush1.msra.mxu0 0.0
    %2282 = vmatprep.subr.mxu0 0.0
    %2283 = vmatpush1.msra.mxu0 0.0
    %2284 = vmatprep.subr.mxu0 0.0
    %2285 = vmatpush1.msra.mxu0 0.0
    %2286 = vmatprep.subr.mxu0 0.0
    %2287 = vmatpush1.msra.mxu0 0.0
    %2288 = vmatprep.subr.mxu0 0.0
    %2289 = vmatpush1.msra.mxu0 0.0
    %2290 = vmatprep.mubr.f32.mxu0 0.0
    %2291 = vmatmul.mubr.f32.gmra.mrb[0].mxu0 %v2224
    %v2292 = vpop.f32.mrb[0].mxu0
    %v2293 = vadd.f32 %v2221, %v2292
    %v2294 = vpop.f32.mrb[0].mxu0
    %2295 = vdwg.mxu0
    %2296 = vst [vmem:[%s630] sm:$0x3] %v2293
    %v2297 = vld [vmem:[%s1654] sm:$0x3]
    %v2298 = vld [vmem:[%s6] sm:$0xff]
    %v2299 = vld [vmem:[%s6 + $0x8] sm:$0xff]
    %v2300 = vld [vmem:[%s6 + $0x10] sm:$0xff]
    %v2301 = vld [vmem:[%s6 + $0x18] sm:$0xff]
    %v2302 = vld [vmem:[%s8] sm:$0x1]
    %v2304 = vlaneseq
    %v2305 = vshrl.u32 %v2304, 7
    %v2306 = vsub.s32 0, %v2305
    %v2307 = vrot.slane %v2302, %v2306
    %v2310 = vsel %vm815, %v2297, 0
    %2312 = vmatprep.subr.mxu0 0.0
    %2313 = vmatpush1.msra.mxu0 %v2298
    %2314 = vmatprep.subr.mxu0 0.0
    %2315 = vmatpush1.msra.mxu0 %v2299
    %2316 = vmatprep.subr.mxu0 0.0
    %2317 = vmatpush1.msra.mxu0 %v2300
    %2318 = vmatprep.subr.mxu0 0.0
    %2319 = vmatpush1.msra.mxu0 %v2301
    %2320 = vmatprep.subr.mxu0 0.0
    %2321 = vmatpush1.msra.mxu0 0.0
    %2322 = vmatprep.subr.mxu0 0.0
    %2323 = vmatpush1.msra.mxu0 0.0
    %2324 = vmatprep.subr.mxu0 0.0
    %2325 = vmatpush1.msra.mxu0 0.0
    %2326 = vmatprep.subr.mxu0 0.0
    %2327 = vmatpush1.msra.mxu0 0.0
    %2328 = vmatprep.subr.mxu0 0.0
    %2329 = vmatpush1.msra.mxu0 0.0
    %2330 = vmatprep.subr.mxu0 0.0
    %2331 = vmatpush1.msra.mxu0 0.0
    %2332 = vmatprep.subr.mxu0 0.0
    %2333 = vmatpush1.msra.mxu0 0.0
    %2334 = vmatprep.subr.mxu0 0.0
    %2335 = vmatpush1.msra.mxu0 0.0
    %2336 = vmatprep.subr.mxu0 0.0
    %2337 = vmatpush1.msra.mxu0 0.0
    %2338 = vmatprep.subr.mxu0 0.0
    %2339 = vmatpush1.msra.mxu0 0.0
    %2340 = vmatprep.subr.mxu0 0.0
    %2341 = vmatpush1.msra.mxu0 0.0
    %2342 = vmatprep.subr.mxu0 0.0
    %2343 = vmatpush1.msra.mxu0 0.0
    %2344 = vmatprep.subr.mxu0 0.0
    %2345 = vmatpush1.msra.mxu0 0.0
    %2346 = vmatprep.subr.mxu0 0.0
    %2347 = vmatpush1.msra.mxu0 0.0
    %2348 = vmatprep.subr.mxu0 0.0
    %2349 = vmatpush1.msra.mxu0 0.0
    %2350 = vmatprep.subr.mxu0 0.0
    %2351 = vmatpush1.msra.mxu0 0.0
    %2352 = vmatprep.subr.mxu0 0.0
    %2353 = vmatpush1.msra.mxu0 0.0
    %2354 = vmatprep.subr.mxu0 0.0
    %2355 = vmatpush1.msra.mxu0 0.0
    %2356 = vmatprep.subr.mxu0 0.0
    %2357 = vmatpush1.msra.mxu0 0.0
    %2358 = vmatprep.subr.mxu0 0.0
    %2359 = vmatpush1.msra.mxu0 0.0
    %2360 = vmatprep.subr.mxu0 0.0
    %2361 = vmatpush1.msra.mxu0 0.0
    %2362 = vmatprep.subr.mxu0 0.0
    %2363 = vmatpush1.msra.mxu0 0.0
    %2364 = vmatprep.subr.mxu0 0.0
    %2365 = vmatpush1.msra.mxu0 0.0
    %2366 = vmatprep.subr.mxu0 0.0
    %2367 = vmatpush1.msra.mxu0 0.0
    %2368 = vmatprep.subr.mxu0 0.0
    %2369 = vmatpush1.msra.mxu0 0.0
    %2370 = vmatprep.subr.mxu0 0.0
    %2371 = vmatpush1.msra.mxu0 0.0
    %2372 = vmatprep.subr.mxu0 0.0
    %2373 = vmatpush1.msra.mxu0 0.0
    %2374 = vmatprep.subr.mxu0 0.0
    %2375 = vmatpush1.msra.mxu0 0.0
    %2376 = vmatprep.mubr.f32.mxu0 0.0
    %2377 = vmatmul.mubr.f32.gmra.mrb[0].mxu0 %v2310
    %v2378 = vpop.f32.mrb[0].mxu0
    %v2379 = vadd.f32 %v2307, %v2378
    %v2380 = vpop.f32.mrb[0].mxu0
    %2381 = vdwg.mxu0
    %2382 = vst [vmem:[%s716] sm:$0x3] %v2379
    %v2383 = vld [vmem:[%s1775] sm:$0x3]
    %v2384 = vld [vmem:[%s6] sm:$0xff]
    %v2385 = vld [vmem:[%s6 + $0x8] sm:$0xff]
    %v2386 = vld [vmem:[%s6 + $0x10] sm:$0xff]
    %v2387 = vld [vmem:[%s6 + $0x18] sm:$0xff]
    %v2388 = vld [vmem:[%s8] sm:$0x1]
    %v2390 = vlaneseq
    %v2391 = vshrl.u32 %v2390, 7
    %v2392 = vsub.s32 0, %v2391
    %v2393 = vrot.slane %v2388, %v2392
    %v2396 = vsel %vm815, %v2383, 0
    %2398 = vmatprep.subr.mxu0 0.0
    %2399 = vmatpush1.msra.mxu0 %v2384
    %2400 = vmatprep.subr.mxu0 0.0
    %2401 = vmatpush1.msra.mxu0 %v2385
    %2402 = vmatprep.subr.mxu0 0.0
    %2403 = vmatpush1.msra.mxu0 %v2386
    %2404 = vmatprep.subr.mxu0 0.0
    %2405 = vmatpush1.msra.mxu0 %v2387
    %2406 = vmatprep.subr.mxu0 0.0
    %2407 = vmatpush1.msra.mxu0 0.0
    %2408 = vmatprep.subr.mxu0 0.0
    %2409 = vmatpush1.msra.mxu0 0.0
    %2410 = vmatprep.subr.mxu0 0.0
    %2411 = vmatpush1.msra.mxu0 0.0
    %2412 = vmatprep.subr.mxu0 0.0
    %2413 = vmatpush1.msra.mxu0 0.0
    %2414 = vmatprep.subr.mxu0 0.0
    %2415 = vmatpush1.msra.mxu0 0.0
    %2416 = vmatprep.subr.mxu0 0.0
    %2417 = vmatpush1.msra.mxu0 0.0
    %2418 = vmatprep.subr.mxu0 0.0
    %2419 = vmatpush1.msra.mxu0 0.0
    %2420 = vmatprep.subr.mxu0 0.0
    %2421 = vmatpush1.msra.mxu0 0.0
    %2422 = vmatprep.subr.mxu0 0.0
    %2423 = vmatpush1.msra.mxu0 0.0
    %2424 = vmatprep.subr.mxu0 0.0
    %2425 = vmatpush1.msra.mxu0 0.0
    %2426 = vmatprep.subr.mxu0 0.0
    %2427 = vmatpush1.msra.mxu0 0.0
    %2428 = vmatprep.subr.mxu0 0.0
    %2429 = vmatpush1.msra.mxu0 0.0
    %2430 = vmatprep.subr.mxu0 0.0
    %2431 = vmatpush1.msra.mxu0 0.0
    %2432 = vmatprep.subr.mxu0 0.0
    %2433 = vmatpush1.msra.mxu0 0.0
    %2434 = vmatprep.subr.mxu0 0.0
    %2435 = vmatpush1.msra.mxu0 0.0
    %2436 = vmatprep.subr.mxu0 0.0
    %2437 = vmatpush1.msra.mxu0 0.0
    %2438 = vmatprep.subr.mxu0 0.0
    %2439 = vmatpush1.msra.mxu0 0.0
    %2440 = vmatprep.subr.mxu0 0.0
    %2441 = vmatpush1.msra.mxu0 0.0
    %2442 = vmatprep.subr.mxu0 0.0
    %2443 = vmatpush1.msra.mxu0 0.0
    %2444 = vmatprep.subr.mxu0 0.0
    %2445 = vmatpush1.msra.mxu0 0.0
    %2446 = vmatprep.subr.mxu0 0.0
    %2447 = vmatpush1.msra.mxu0 0.0
    %2448 = vmatprep.subr.mxu0 0.0
    %2449 = vmatpush1.msra.mxu0 0.0
    %2450 = vmatprep.subr.mxu0 0.0
    %2451 = vmatpush1.msra.mxu0 0.0
    %2452 = vmatprep.subr.mxu0 0.0
    %2453 = vmatpush1.msra.mxu0 0.0
    %2454 = vmatprep.subr.mxu0 0.0
    %2455 = vmatpush1.msra.mxu0 0.0
    %2456 = vmatprep.subr.mxu0 0.0
    %2457 = vmatpush1.msra.mxu0 0.0
    %2458 = vmatprep.subr.mxu0 0.0
    %2459 = vmatpush1.msra.mxu0 0.0
    %2460 = vmatprep.subr.mxu0 0.0
    %2461 = vmatpush1.msra.mxu0 0.0
    %2462 = vmatprep.mubr.f32.mxu0 0.0
    %2463 = vmatmul.mubr.f32.gmra.mrb[0].mxu0 %v2396
    %v2464 = vpop.f32.mrb[0].mxu0
    %v2465 = vadd.f32 %v2393, %v2464
    %v2466 = vpop.f32.mrb[0].mxu0
    %2467 = vdwg.mxu0
    %2468 = vst [vmem:[%s802] sm:$0x3] %v2465
    %s2469 = scalar_lea.vmem [#allocation9], 2
    %v2470 = vld [vmem:[%s2469] sm:$0x3]
    %2471 = vst.msk [vmem:[#allocation4] sm:$0x3] %vm805, %v2470
    %s2472 = scalar_lea.vmem [#allocation11], 2
    %v2473 = vld [vmem:[%s2472] sm:$0x3]
    %2474 = vst.msk [vmem:[#allocation5] sm:$0x3] %vm805, %v2473
    %v2475 = vld [vmem:[#allocation3] sm:$0x3]
    %v2476 = vld [vmem:[#allocation4] sm:$0x3]
    %v2477 = vld [vmem:[%s7] sm:$0xff]
    %v2478 = vld [vmem:[%s7 + $0x8] sm:$0xff]
    %v2479 = vld [vmem:[%s7 + $0x10] sm:$0xff]
    %v2480 = vld [vmem:[%s7 + $0x18] sm:$0xff]
    %v2482 = vsel %vm815, %v2476, 0
    %2484 = vmatprep.subr.mxu0 0.0
    %2485 = vmatpush1.msra.mxu0 %v2477
    %2486 = vmatprep.subr.mxu0 0.0
    %2487 = vmatpush1.msra.mxu0 %v2478
    %2488 = vmatprep.subr.mxu0 0.0
    %2489 = vmatpush1.msra.mxu0 %v2479
    %2490 = vmatprep.subr.mxu0 0.0
    %2491 = vmatpush1.msra.mxu0 %v2480
    %2492 = vmatprep.subr.mxu0 0.0
    %2493 = vmatpush1.msra.mxu0 0.0
    %2494 = vmatprep.subr.mxu0 0.0
    %2495 = vmatpush1.msra.mxu0 0.0
    %2496 = vmatprep.subr.mxu0 0.0
    %2497 = vmatpush1.msra.mxu0 0.0
    %2498 = vmatprep.subr.mxu0 0.0
    %2499 = vmatpush1.msra.mxu0 0.0
    %2500 = vmatprep.subr.mxu0 0.0
    %2501 = vmatpush1.msra.mxu0 0.0
    %2502 = vmatprep.subr.mxu0 0.0
    %2503 = vmatpush1.msra.mxu0 0.0
    %2504 = vmatprep.subr.mxu0 0.0
    %2505 = vmatpush1.msra.mxu0 0.0
    %2506 = vmatprep.subr.mxu0 0.0
    %2507 = vmatpush1.msra.mxu0 0.0
    %2508 = vmatprep.subr.mxu0 0.0
    %2509 = vmatpush1.msra.mxu0 0.0
    %2510 = vmatprep.subr.mxu0 0.0
    %2511 = vmatpush1.msra.mxu0 0.0
    %2512 = vmatprep.subr.mxu0 0.0
    %2513 = vmatpush1.msra.mxu0 0.0
    %2514 = vmatprep.subr.mxu0 0.0
    %2515 = vmatpush1.msra.mxu0 0.0
    %2516 = vmatprep.subr.mxu0 0.0
    %2517 = vmatpush1.msra.mxu0 0.0
    %2518 = vmatprep.subr.mxu0 0.0
    %2519 = vmatpush1.msra.mxu0 0.0
    %2520 = vmatprep.subr.mxu0 0.0
    %2521 = vmatpush1.msra.mxu0 0.0
    %2522 = vmatprep.subr.mxu0 0.0
    %2523 = vmatpush1.msra.mxu0 0.0
    %2524 = vmatprep.subr.mxu0 0.0
    %2525 = vmatpush1.msra.mxu0 0.0
    %2526 = vmatprep.subr.mxu0 0.0
    %2527 = vmatpush1.msra.mxu0 0.0
    %2528 = vmatprep.subr.mxu0 0.0
    %2529 = vmatpush1.msra.mxu0 0.0
    %2530 = vmatprep.subr.mxu0 0.0
    %2531 = vmatpush1.msra.mxu0 0.0
    %2532 = vmatprep.subr.mxu0 0.0
    %2533 = vmatpush1.msra.mxu0 0.0
    %2534 = vmatprep.subr.mxu0 0.0
    %2535 = vmatpush1.msra.mxu0 0.0
    %2536 = vmatprep.subr.mxu0 0.0
    %2537 = vmatpush1.msra.mxu0 0.0
    %2538 = vmatprep.subr.mxu0 0.0
    %2539 = vmatpush1.msra.mxu0 0.0
    %2540 = vmatprep.subr.mxu0 0.0
    %2541 = vmatpush1.msra.mxu0 0.0
    %2542 = vmatprep.subr.mxu0 0.0
    %2543 = vmatpush1.msra.mxu0 0.0
    %2544 = vmatprep.subr.mxu0 0.0
    %2545 = vmatpush1.msra.mxu0 0.0
    %2546 = vmatprep.subr.mxu0 0.0
    %2547 = vmatpush1.msra.mxu0 0.0
    %2548 = vmatprep.mubr.f32.mxu0 0.0
    %2549 = vmatmul.mubr.f32.gmra.mrb[0].mxu0 %v2482
    %v2550 = vpop.f32.mrb[0].mxu0
    %v2551 = vadd.f32 0.0, %v2550
    %v2552 = vpop.f32.mrb[0].mxu0
    %2553 = vdwg.mxu0
    %v2554 = vadd.f32 %v2475, %v2551
    %v2555 = vxor.u32 %v2554, 2147483648
    %v2556 = vmul.f32 %v2555, 1.442695
    %v2557 = vpow.pop %v2556
    %v2558 = vadd.f32 %v2557, 1.0
    %v2559 = vrcp.pop %v2558
    %v2560 = vmul.f32 1.0, %v2559
    %v2561 = vtanh.pop %v2554
    %v2562 = vld [vmem:[#allocation5] sm:$0x3]
    %2564 = vrot.lane.b32.xlu0 %v2562, 32
    %v2565 = vpop.permute.xlu0 %2564
    %v2567 = vmul.f32 %v2560, %v2565
    %2569 = vrot.lane.b32.xlu0 %v2561, 32
    %v2570 = vpop.permute.xlu0 %2569
    %v2572 = vmul.f32 %v2560, %v2570
    %2574 = vrot.lane.b32.xlu0 %v2572, 32
    %v2575 = vpop.permute.xlu0 %2574
    %v2577 = vadd.f32 %v2567, %v2575
    %v2578 = vtanh.pop %v2577
    %2580 = vrot.lane.b32.xlu0 %v2578, 32
    %v2581 = vpop.permute.xlu0 %2580
    %v2583 = vmul.f32 %v2560, %v2581
    %2585 = vrot.lane.b32.xlu0 %v2577, 96
    %v2586 = vpop.permute.xlu0 %2585
    %2588 = vst.msk [vmem:[#allocation5] sm:$0x3] %vm805, %v2586
    %2590 = vrot.lane.b32.xlu0 %v2583, 64
    %v2591 = vpop.permute.xlu0 %2590
    %2593 = vst.msk [vmem:[#allocation4] sm:$0x3] %vm805, %v2591
    %v2594 = vld [vmem:[%s286] sm:$0x3]
    %v2595 = vld [vmem:[#allocation4] sm:$0x3]
    %v2596 = vld [vmem:[%s7] sm:$0xff]
    %v2597 = vld [vmem:[%s7 + $0x8] sm:$0xff]
    %v2598 = vld [vmem:[%s7 + $0x10] sm:$0xff]
    %v2599 = vld [vmem:[%s7 + $0x18] sm:$0xff]
    %v2601 = vsel %vm815, %v2595, 0
    %2603 = vmatprep.subr.mxu0 0.0
    %2604 = vmatpush1.msra.mxu0 %v2596
    %2605 = vmatprep.subr.mxu0 0.0
    %2606 = vmatpush1.msra.mxu0 %v2597
    %2607 = vmatprep.subr.mxu0 0.0
    %2608 = vmatpush1.msra.mxu0 %v2598
    %2609 = vmatprep.subr.mxu0 0.0
    %2610 = vmatpush1.msra.mxu0 %v2599
    %2611 = vmatprep.subr.mxu0 0.0
    %2612 = vmatpush1.msra.mxu0 0.0
    %2613 = vmatprep.subr.mxu0 0.0
    %2614 = vmatpush1.msra.mxu0 0.0
    %2615 = vmatprep.subr.mxu0 0.0
    %2616 = vmatpush1.msra.mxu0 0.0
    %2617 = vmatprep.subr.mxu0 0.0
    %2618 = vmatpush1.msra.mxu0 0.0
    %2619 = vmatprep.subr.mxu0 0.0
    %2620 = vmatpush1.msra.mxu0 0.0
    %2621 = vmatprep.subr.mxu0 0.0
    %2622 = vmatpush1.msra.mxu0 0.0
    %2623 = vmatprep.subr.mxu0 0.0
    %2624 = vmatpush1.msra.mxu0 0.0
    %2625 = vmatprep.subr.mxu0 0.0
    %2626 = vmatpush1.msra.mxu0 0.0
    %2627 = vmatprep.subr.mxu0 0.0
    %2628 = vmatpush1.msra.mxu0 0.0
    %2629 = vmatprep.subr.mxu0 0.0
    %2630 = vmatpush1.msra.mxu0 0.0
    %2631 = vmatprep.subr.mxu0 0.0
    %2632 = vmatpush1.msra.mxu0 0.0
    %2633 = vmatprep.subr.mxu0 0.0
    %2634 = vmatpush1.msra.mxu0 0.0
    %2635 = vmatprep.subr.mxu0 0.0
    %2636 = vmatpush1.msra.mxu0 0.0
    %2637 = vmatprep.subr.mxu0 0.0
    %2638 = vmatpush1.msra.mxu0 0.0
    %2639 = vmatprep.subr.mxu0 0.0
    %2640 = vmatpush1.msra.mxu0 0.0
    %2641 = vmatprep.subr.mxu0 0.0
    %2642 = vmatpush1.msra.mxu0 0.0
    %2643 = vmatprep.subr.mxu0 0.0
    %2644 = vmatpush1.msra.mxu0 0.0
    %2645 = vmatprep.subr.mxu0 0.0
    %2646 = vmatpush1.msra.mxu0 0.0
    %2647 = vmatprep.subr.mxu0 0.0
    %2648 = vmatpush1.msra.mxu0 0.0
    %2649 = vmatprep.subr.mxu0 0.0
    %2650 = vmatpush1.msra.mxu0 0.0
    %2651 = vmatprep.subr.mxu0 0.0
    %2652 = vmatpush1.msra.mxu0 0.0
    %2653 = vmatprep.subr.mxu0 0.0
    %2654 = vmatpush1.msra.mxu0 0.0
    %2655 = vmatprep.subr.mxu0 0.0
    %2656 = vmatpush1.msra.mxu0 0.0
    %2657 = vmatprep.subr.mxu0 0.0
    %2658 = vmatpush1.msra.mxu0 0.0
    %2659 = vmatprep.subr.mxu0 0.0
    %2660 = vmatpush1.msra.mxu0 0.0
    %2661 = vmatprep.subr.mxu0 0.0
    %2662 = vmatpush1.msra.mxu0 0.0
    %2663 = vmatprep.subr.mxu0 0.0
    %2664 = vmatpush1.msra.mxu0 0.0
    %2665 = vmatprep.subr.mxu0 0.0
    %2666 = vmatpush1.msra.mxu0 0.0
    %2667 = vmatprep.mubr.f32.mxu0 0.0
    %2668 = vmatmul.mubr.f32.gmra.mrb[0].mxu0 %v2601
    %v2669 = vpop.f32.mrb[0].mxu0
    %v2670 = vadd.f32 0.0, %v2669
    %v2671 = vpop.f32.mrb[0].mxu0
    %2672 = vdwg.mxu0
    %v2673 = vadd.f32 %v2594, %v2670
    %v2674 = vxor.u32 %v2673, 2147483648
    %v2675 = vmul.f32 %v2674, 1.442695
    %v2676 = vpow.pop %v2675
    %v2677 = vadd.f32 %v2676, 1.0
    %v2678 = vrcp.pop %v2677
    %v2679 = vmul.f32 1.0, %v2678
    %v2680 = vtanh.pop %v2673
    %v2681 = vld [vmem:[#allocation5] sm:$0x3]
    %2683 = vrot.lane.b32.xlu0 %v2681, 32
    %v2684 = vpop.permute.xlu0 %2683
    %v2686 = vmul.f32 %v2679, %v2684
    %2688 = vrot.lane.b32.xlu0 %v2680, 32
    %v2689 = vpop.permute.xlu0 %2688
    %v2691 = vmul.f32 %v2679, %v2689
    %2693 = vrot.lane.b32.xlu0 %v2691, 32
    %v2694 = vpop.permute.xlu0 %2693
    %v2696 = vadd.f32 %v2686, %v2694
    %v2697 = vtanh.pop %v2696
    %2699 = vrot.lane.b32.xlu0 %v2697, 32
    %v2700 = vpop.permute.xlu0 %2699
    %v2702 = vmul.f32 %v2679, %v2700
    %2704 = vrot.lane.b32.xlu0 %v2696, 96
    %v2705 = vpop.permute.xlu0 %2704
    %2707 = vst.msk [vmem:[#allocation5] sm:$0x3] %vm805, %v2705
    %2709 = vrot.lane.b32.xlu0 %v2702, 64
    %v2710 = vpop.permute.xlu0 %2709
    %2712 = vst.msk [vmem:[#allocation4] sm:$0x3] %vm805, %v2710
    %v2713 = vld [vmem:[%s372] sm:$0x3]
    %v2714 = vld [vmem:[#allocation4] sm:$0x3]
    %v2715 = vld [vmem:[%s7] sm:$0xff]
    %v2716 = vld [vmem:[%s7 + $0x8] sm:$0xff]
    %v2717 = vld [vmem:[%s7 + $0x10] sm:$0xff]
    %v2718 = vld [vmem:[%s7 + $0x18] sm:$0xff]
    %v2720 = vsel %vm815, %v2714, 0
    %2722 = vmatprep.subr.mxu0 0.0
    %2723 = vmatpush1.msra.mxu0 %v2715
    %2724 = vmatprep.subr.mxu0 0.0
    %2725 = vmatpush1.msra.mxu0 %v2716
    %2726 = vmatprep.subr.mxu0 0.0
    %2727 = vmatpush1.msra.mxu0 %v2717
    %2728 = vmatprep.subr.mxu0 0.0
    %2729 = vmatpush1.msra.mxu0 %v2718
    %2730 = vmatprep.subr.mxu0 0.0
    %2731 = vmatpush1.msra.mxu0 0.0
    %2732 = vmatprep.subr.mxu0 0.0
    %2733 = vmatpush1.msra.mxu0 0.0
    %2734 = vmatprep.subr.mxu0 0.0
    %2735 = vmatpush1.msra.mxu0 0.0
    %2736 = vmatprep.subr.mxu0 0.0
    %2737 = vmatpush1.msra.mxu0 0.0
    %2738 = vmatprep.subr.mxu0 0.0
    %2739 = vmatpush1.msra.mxu0 0.0
    %2740 = vmatprep.subr.mxu0 0.0
    %2741 = vmatpush1.msra.mxu0 0.0
    %2742 = vmatprep.subr.mxu0 0.0
    %2743 = vmatpush1.msra.mxu0 0.0
    %2744 = vmatprep.subr.mxu0 0.0
    %2745 = vmatpush1.msra.mxu0 0.0
    %2746 = vmatprep.subr.mxu0 0.0
    %2747 = vmatpush1.msra.mxu0 0.0
    %2748 = vmatprep.subr.mxu0 0.0
    %2749 = vmatpush1.msra.mxu0 0.0
    %2750 = vmatprep.subr.mxu0 0.0
    %2751 = vmatpush1.msra.mxu0 0.0
    %2752 = vmatprep.subr.mxu0 0.0
    %2753 = vmatpush1.msra.mxu0 0.0
    %2754 = vmatprep.subr.mxu0 0.0
    %2755 = vmatpush1.msra.mxu0 0.0
    %2756 = vmatprep.subr.mxu0 0.0
    %2757 = vmatpush1.msra.mxu0 0.0
    %2758 = vmatprep.subr.mxu0 0.0
    %2759 = vmatpush1.msra.mxu0 0.0
    %2760 = vmatprep.subr.mxu0 0.0
    %2761 = vmatpush1.msra.mxu0 0.0
    %2762 = vmatprep.subr.mxu0 0.0
    %2763 = vmatpush1.msra.mxu0 0.0
    %2764 = vmatprep.subr.mxu0 0.0
    %2765 = vmatpush1.msra.mxu0 0.0
    %2766 = vmatprep.subr.mxu0 0.0
    %2767 = vmatpush1.msra.mxu0 0.0
    %2768 = vmatprep.subr.mxu0 0.0
    %2769 = vmatpush1.msra.mxu0 0.0
    %2770 = vmatprep.subr.mxu0 0.0
    %2771 = vmatpush1.msra.mxu0 0.0
    %2772 = vmatprep.subr.mxu0 0.0
    %2773 = vmatpush1.msra.mxu0 0.0
    %2774 = vmatprep.subr.mxu0 0.0
    %2775 = vmatpush1.msra.mxu0 0.0
    %2776 = vmatprep.subr.mxu0 0.0
    %2777 = vmatpush1.msra.mxu0 0.0
    %2778 = vmatprep.subr.mxu0 0.0
    %2779 = vmatpush1.msra.mxu0 0.0
    %2780 = vmatprep.subr.mxu0 0.0
    %2781 = vmatpush1.msra.mxu0 0.0
    %2782 = vmatprep.subr.mxu0 0.0
    %2783 = vmatpush1.msra.mxu0 0.0
    %2784 = vmatprep.subr.mxu0 0.0
    %2785 = vmatpush1.msra.mxu0 0.0
    %2786 = vmatprep.mubr.f32.mxu0 0.0
    %2787 = vmatmul.mubr.f32.gmra.mrb[0].mxu0 %v2720
    %v2788 = vpop.f32.mrb[0].mxu0
    %v2789 = vadd.f32 0.0, %v2788
    %v2790 = vpop.f32.mrb[0].mxu0
    %2791 = vdwg.mxu0
    %v2792 = vadd.f32 %v2713, %v2789
    %v2793 = vxor.u32 %v2792, 2147483648
    %v2794 = vmul.f32 %v2793, 1.442695
    %v2795 = vpow.pop %v2794
    %v2796 = vadd.f32 %v2795, 1.0
    %v2797 = vrcp.pop %v2796
    %v2798 = vmul.f32 1.0, %v2797
    %v2799 = vtanh.pop %v2792
    %v2800 = vld [vmem:[#allocation5] sm:$0x3]
    %2802 = vrot.lane.b32.xlu0 %v2800, 32
    %v2803 = vpop.permute.xlu0 %2802
    %v2805 = vmul.f32 %v2798, %v2803
    %2807 = vrot.lane.b32.xlu0 %v2799, 32
    %v2808 = vpop.permute.xlu0 %2807
    %v2810 = vmul.f32 %v2798, %v2808
    %2812 = vrot.lane.b32.xlu0 %v2810, 32
    %v2813 = vpop.permute.xlu0 %2812
    %v2815 = vadd.f32 %v2805, %v2813
    %v2816 = vtanh.pop %v2815
    %2818 = vrot.lane.b32.xlu0 %v2816, 32
    %v2819 = vpop.permute.xlu0 %2818
    %v2821 = vmul.f32 %v2798, %v2819
    %2823 = vrot.lane.b32.xlu0 %v2815, 96
    %v2824 = vpop.permute.xlu0 %2823
    %2826 = vst.msk [vmem:[#allocation5] sm:$0x3] %vm805, %v2824
    %2828 = vrot.lane.b32.xlu0 %v2821, 64
    %v2829 = vpop.permute.xlu0 %2828
    %2831 = vst.msk [vmem:[#allocation4] sm:$0x3] %vm805, %v2829
    %v2832 = vld [vmem:[%s458] sm:$0x3]
    %v2833 = vld [vmem:[#allocation4] sm:$0x3]
    %v2834 = vld [vmem:[%s7] sm:$0xff]
    %v2835 = vld [vmem:[%s7 + $0x8] sm:$0xff]
    %v2836 = vld [vmem:[%s7 + $0x10] sm:$0xff]
    %v2837 = vld [vmem:[%s7 + $0x18] sm:$0xff]
    %v2839 = vsel %vm815, %v2833, 0
    %2841 = vmatprep.subr.mxu0 0.0
    %2842 = vmatpush1.msra.mxu0 %v2834
    %2843 = vmatprep.subr.mxu0 0.0
    %2844 = vmatpush1.msra.mxu0 %v2835
    %2845 = vmatprep.subr.mxu0 0.0
    %2846 = vmatpush1.msra.mxu0 %v2836
    %2847 = vmatprep.subr.mxu0 0.0
    %2848 = vmatpush1.msra.mxu0 %v2837
    %2849 = vmatprep.subr.mxu0 0.0
    %2850 = vmatpush1.msra.mxu0 0.0
    %2851 = vmatprep.subr.mxu0 0.0
    %2852 = vmatpush1.msra.mxu0 0.0
    %2853 = vmatprep.subr.mxu0 0.0
    %2854 = vmatpush1.msra.mxu0 0.0
    %2855 = vmatprep.subr.mxu0 0.0
    %2856 = vmatpush1.msra.mxu0 0.0
    %2857 = vmatprep.subr.mxu0 0.0
    %2858 = vmatpush1.msra.mxu0 0.0
    %2859 = vmatprep.subr.mxu0 0.0
    %2860 = vmatpush1.msra.mxu0 0.0
    %2861 = vmatprep.subr.mxu0 0.0
    %2862 = vmatpush1.msra.mxu0 0.0
    %2863 = vmatprep.subr.mxu0 0.0
    %2864 = vmatpush1.msra.mxu0 0.0
    %2865 = vmatprep.subr.mxu0 0.0
    %2866 = vmatpush1.msra.mxu0 0.0
    %2867 = vmatprep.subr.mxu0 0.0
    %2868 = vmatpush1.msra.mxu0 0.0
    %2869 = vmatprep.subr.mxu0 0.0
    %2870 = vmatpush1.msra.mxu0 0.0
    %2871 = vmatprep.subr.mxu0 0.0
    %2872 = vmatpush1.msra.mxu0 0.0
    %2873 = vmatprep.subr.mxu0 0.0
    %2874 = vmatpush1.msra.mxu0 0.0
    %2875 = vmatprep.subr.mxu0 0.0
    %2876 = vmatpush1.msra.mxu0 0.0
    %2877 = vmatprep.subr.mxu0 0.0
    %2878 = vmatpush1.msra.mxu0 0.0
    %2879 = vmatprep.subr.mxu0 0.0
    %2880 = vmatpush1.msra.mxu0 0.0
    %2881 = vmatprep.subr.mxu0 0.0
    %2882 = vmatpush1.msra.mxu0 0.0
    %2883 = vmatprep.subr.mxu0 0.0
    %2884 = vmatpush1.msra.mxu0 0.0
    %2885 = vmatprep.subr.mxu0 0.0
    %2886 = vmatpush1.msra.mxu0 0.0
    %2887 = vmatprep.subr.mxu0 0.0
    %2888 = vmatpush1.msra.mxu0 0.0
    %2889 = vmatprep.subr.mxu0 0.0
    %2890 = vmatpush1.msra.mxu0 0.0
    %2891 = vmatprep.subr.mxu0 0.0
    %2892 = vmatpush1.msra.mxu0 0.0
    %2893 = vmatprep.subr.mxu0 0.0
    %2894 = vmatpush1.msra.mxu0 0.0
    %2895 = vmatprep.subr.mxu0 0.0
    %2896 = vmatpush1.msra.mxu0 0.0
    %2897 = vmatprep.subr.mxu0 0.0
    %2898 = vmatpush1.msra.mxu0 0.0
    %2899 = vmatprep.subr.mxu0 0.0
    %2900 = vmatpush1.msra.mxu0 0.0
    %2901 = vmatprep.subr.mxu0 0.0
    %2902 = vmatpush1.msra.mxu0 0.0
    %2903 = vmatprep.subr.mxu0 0.0
    %2904 = vmatpush1.msra.mxu0 0.0
    %2905 = vmatprep.mubr.f32.mxu0 0.0
    %2906 = vmatmul.mubr.f32.gmra.mrb[0].mxu0 %v2839
    %v2907 = vpop.f32.mrb[0].mxu0
    %v2908 = vadd.f32 0.0, %v2907
    %v2909 = vpop.f32.mrb[0].mxu0
    %2910 = vdwg.mxu0
    %v2911 = vadd.f32 %v2832, %v2908
    %v2912 = vxor.u32 %v2911, 2147483648
    %v2913 = vmul.f32 %v2912, 1.442695
    %v2914 = vpow.pop %v2913
    %v2915 = vadd.f32 %v2914, 1.0
    %v2916 = vrcp.pop %v2915
    %v2917 = vmul.f32 1.0, %v2916
    %v2918 = vtanh.pop %v2911
    %v2919 = vld [vmem:[#allocation5] sm:$0x3]
    %2921 = vrot.lane.b32.xlu0 %v2919, 32
    %v2922 = vpop.permute.xlu0 %2921
    %v2924 = vmul.f32 %v2917, %v2922
    %2926 = vrot.lane.b32.xlu0 %v2918, 32
    %v2927 = vpop.permute.xlu0 %2926
    %v2929 = vmul.f32 %v2917, %v2927
    %2931 = vrot.lane.b32.xlu0 %v2929, 32
    %v2932 = vpop.permute.xlu0 %2931
    %v2934 = vadd.f32 %v2924, %v2932
    %v2935 = vtanh.pop %v2934
    %2937 = vrot.lane.b32.xlu0 %v2935, 32
    %v2938 = vpop.permute.xlu0 %2937
    %v2940 = vmul.f32 %v2917, %v2938
    %2942 = vrot.lane.b32.xlu0 %v2934, 96
    %v2943 = vpop.permute.xlu0 %2942
    %2945 = vst.msk [vmem:[#allocation5] sm:$0x3] %vm805, %v2943
    %2947 = vrot.lane.b32.xlu0 %v2940, 64
    %v2948 = vpop.permute.xlu0 %2947
    %2950 = vst.msk [vmem:[#allocation4] sm:$0x3] %vm805, %v2948
    %v2951 = vld [vmem:[%s544] sm:$0x3]
    %v2952 = vld [vmem:[#allocation4] sm:$0x3]
    %v2953 = vld [vmem:[%s7] sm:$0xff]
    %v2954 = vld [vmem:[%s7 + $0x8] sm:$0xff]
    %v2955 = vld [vmem:[%s7 + $0x10] sm:$0xff]
    %v2956 = vld [vmem:[%s7 + $0x18] sm:$0xff]
    %v2958 = vsel %vm815, %v2952, 0
    %2960 = vmatprep.subr.mxu0 0.0
    %2961 = vmatpush1.msra.mxu0 %v2953
    %2962 = vmatprep.subr.mxu0 0.0
    %2963 = vmatpush1.msra.mxu0 %v2954
    %2964 = vmatprep.subr.mxu0 0.0
    %2965 = vmatpush1.msra.mxu0 %v2955
    %2966 = vmatprep.subr.mxu0 0.0
    %2967 = vmatpush1.msra.mxu0 %v2956
    %2968 = vmatprep.subr.mxu0 0.0
    %2969 = vmatpush1.msra.mxu0 0.0
    %2970 = vmatprep.subr.mxu0 0.0
    %2971 = vmatpush1.msra.mxu0 0.0
    %2972 = vmatprep.subr.mxu0 0.0
    %2973 = vmatpush1.msra.mxu0 0.0
    %2974 = vmatprep.subr.mxu0 0.0
    %2975 = vmatpush1.msra.mxu0 0.0
    %2976 = vmatprep.subr.mxu0 0.0
    %2977 = vmatpush1.msra.mxu0 0.0
    %2978 = vmatprep.subr.mxu0 0.0
    %2979 = vmatpush1.msra.mxu0 0.0
    %2980 = vmatprep.subr.mxu0 0.0
    %2981 = vmatpush1.msra.mxu0 0.0
    %2982 = vmatprep.subr.mxu0 0.0
    %2983 = vmatpush1.msra.mxu0 0.0
    %2984 = vmatprep.subr.mxu0 0.0
    %2985 = vmatpush1.msra.mxu0 0.0
    %2986 = vmatprep.subr.mxu0 0.0
    %2987 = vmatpush1.msra.mxu0 0.0
    %2988 = vmatprep.subr.mxu0 0.0
    %2989 = vmatpush1.msra.mxu0 0.0
    %2990 = vmatprep.subr.mxu0 0.0
    %2991 = vmatpush1.msra.mxu0 0.0
    %2992 = vmatprep.subr.mxu0 0.0
    %2993 = vmatpush1.msra.mxu0 0.0
    %2994 = vmatprep.subr.mxu0 0.0
    %2995 = vmatpush1.msra.mxu0 0.0
    %2996 = vmatprep.subr.mxu0 0.0
    %2997 = vmatpush1.msra.mxu0 0.0
    %2998 = vmatprep.subr.mxu0 0.0
    %2999 = vmatpush1.msra.mxu0 0.0
    %3000 = vmatprep.subr.mxu0 0.0
    %3001 = vmatpush1.msra.mxu0 0.0
    %3002 = vmatprep.subr.mxu0 0.0
    %3003 = vmatpush1.msra.mxu0 0.0
    %3004 = vmatprep.subr.mxu0 0.0
    %3005 = vmatpush1.msra.mxu0 0.0
    %3006 = vmatprep.subr.mxu0 0.0
    %3007 = vmatpush1.msra.mxu0 0.0
    %3008 = vmatprep.subr.mxu0 0.0
    %3009 = vmatpush1.msra.mxu0 0.0
    %3010 = vmatprep.subr.mxu0 0.0
    %3011 = vmatpush1.msra.mxu0 0.0
    %3012 = vmatprep.subr.mxu0 0.0
    %3013 = vmatpush1.msra.mxu0 0.0
    %3014 = vmatprep.subr.mxu0 0.0
    %3015 = vmatpush1.msra.mxu0 0.0
    %3016 = vmatprep.subr.mxu0 0.0
    %3017 = vmatpush1.msra.mxu0 0.0
    %3018 = vmatprep.subr.mxu0 0.0
    %3019 = vmatpush1.msra.mxu0 0.0
    %3020 = vmatprep.subr.mxu0 0.0
    %3021 = vmatpush1.msra.mxu0 0.0
    %3022 = vmatprep.subr.mxu0 0.0
    %3023 = vmatpush1.msra.mxu0 0.0
    %3024 = vmatprep.mubr.f32.mxu0 0.0
    %3025 = vmatmul.mubr.f32.gmra.mrb[0].mxu0 %v2958
    %v3026 = vpop.f32.mrb[0].mxu0
    %v3027 = vadd.f32 0.0, %v3026
    %v3028 = vpop.f32.mrb[0].mxu0
    %3029 = vdwg.mxu0
    %v3030 = vadd.f32 %v2951, %v3027
    %v3031 = vxor.u32 %v3030, 2147483648
    %v3032 = vmul.f32 %v3031, 1.442695
    %v3033 = vpow.pop %v3032
    %v3034 = vadd.f32 %v3033, 1.0
    %v3035 = vrcp.pop %v3034
    %v3036 = vmul.f32 1.0, %v3035
    %v3037 = vtanh.pop %v3030
    %v3038 = vld [vmem:[#allocation5] sm:$0x3]
    %3040 = vrot.lane.b32.xlu0 %v3038, 32
    %v3041 = vpop.permute.xlu0 %3040
    %v3043 = vmul.f32 %v3036, %v3041
    %3045 = vrot.lane.b32.xlu0 %v3037, 32
    %v3046 = vpop.permute.xlu0 %3045
    %v3048 = vmul.f32 %v3036, %v3046
    %3050 = vrot.lane.b32.xlu0 %v3048, 32
    %v3051 = vpop.permute.xlu0 %3050
    %v3053 = vadd.f32 %v3043, %v3051
    %v3054 = vtanh.pop %v3053
    %3056 = vrot.lane.b32.xlu0 %v3054, 32
    %v3057 = vpop.permute.xlu0 %3056
    %v3059 = vmul.f32 %v3036, %v3057
    %3061 = vrot.lane.b32.xlu0 %v3053, 96
    %v3062 = vpop.permute.xlu0 %3061
    %3064 = vst.msk [vmem:[#allocation5] sm:$0x3] %vm805, %v3062
    %3066 = vrot.lane.b32.xlu0 %v3059, 64
    %v3067 = vpop.permute.xlu0 %3066
    %3069 = vst.msk [vmem:[#allocation4] sm:$0x3] %vm805, %v3067
    %v3070 = vld [vmem:[%s630] sm:$0x3]
    %v3071 = vld [vmem:[#allocation4] sm:$0x3]
    %v3072 = vld [vmem:[%s7] sm:$0xff]
    %v3073 = vld [vmem:[%s7 + $0x8] sm:$0xff]
    %v3074 = vld [vmem:[%s7 + $0x10] sm:$0xff]
    %v3075 = vld [vmem:[%s7 + $0x18] sm:$0xff]
    %v3077 = vsel %vm815, %v3071, 0
    %3079 = vmatprep.subr.mxu0 0.0
    %3080 = vmatpush1.msra.mxu0 %v3072
    %3081 = vmatprep.subr.mxu0 0.0
    %3082 = vmatpush1.msra.mxu0 %v3073
    %3083 = vmatprep.subr.mxu0 0.0
    %3084 = vmatpush1.msra.mxu0 %v3074
    %3085 = vmatprep.subr.mxu0 0.0
    %3086 = vmatpush1.msra.mxu0 %v3075
    %3087 = vmatprep.subr.mxu0 0.0
    %3088 = vmatpush1.msra.mxu0 0.0
    %3089 = vmatprep.subr.mxu0 0.0
    %3090 = vmatpush1.msra.mxu0 0.0
    %3091 = vmatprep.subr.mxu0 0.0
    %3092 = vmatpush1.msra.mxu0 0.0
    %3093 = vmatprep.subr.mxu0 0.0
    %3094 = vmatpush1.msra.mxu0 0.0
    %3095 = vmatprep.subr.mxu0 0.0
    %3096 = vmatpush1.msra.mxu0 0.0
    %3097 = vmatprep.subr.mxu0 0.0
    %3098 = vmatpush1.msra.mxu0 0.0
    %3099 = vmatprep.subr.mxu0 0.0
    %3100 = vmatpush1.msra.mxu0 0.0
    %3101 = vmatprep.subr.mxu0 0.0
    %3102 = vmatpush1.msra.mxu0 0.0
    %3103 = vmatprep.subr.mxu0 0.0
    %3104 = vmatpush1.msra.mxu0 0.0
    %3105 = vmatprep.subr.mxu0 0.0
    %3106 = vmatpush1.msra.mxu0 0.0
    %3107 = vmatprep.subr.mxu0 0.0
    %3108 = vmatpush1.msra.mxu0 0.0
    %3109 = vmatprep.subr.mxu0 0.0
    %3110 = vmatpush1.msra.mxu0 0.0
    %3111 = vmatprep.subr.mxu0 0.0
    %3112 = vmatpush1.msra.mxu0 0.0
    %3113 = vmatprep.subr.mxu0 0.0
    %3114 = vmatpush1.msra.mxu0 0.0
    %3115 = vmatprep.subr.mxu0 0.0
    %3116 = vmatpush1.msra.mxu0 0.0
    %3117 = vmatprep.subr.mxu0 0.0
    %3118 = vmatpush1.msra.mxu0 0.0
    %3119 = vmatprep.subr.mxu0 0.0
    %3120 = vmatpush1.msra.mxu0 0.0
    %3121 = vmatprep.subr.mxu0 0.0
    %3122 = vmatpush1.msra.mxu0 0.0
    %3123 = vmatprep.subr.mxu0 0.0
    %3124 = vmatpush1.msra.mxu0 0.0
    %3125 = vmatprep.subr.mxu0 0.0
    %3126 = vmatpush1.msra.mxu0 0.0
    %3127 = vmatprep.subr.mxu0 0.0
    %3128 = vmatpush1.msra.mxu0 0.0
    %3129 = vmatprep.subr.mxu0 0.0
    %3130 = vmatpush1.msra.mxu0 0.0
    %3131 = vmatprep.subr.mxu0 0.0
    %3132 = vmatpush1.msra.mxu0 0.0
    %3133 = vmatprep.subr.mxu0 0.0
    %3134 = vmatpush1.msra.mxu0 0.0
    %3135 = vmatprep.subr.mxu0 0.0
    %3136 = vmatpush1.msra.mxu0 0.0
    %3137 = vmatprep.subr.mxu0 0.0
    %3138 = vmatpush1.msra.mxu0 0.0
    %3139 = vmatprep.subr.mxu0 0.0
    %3140 = vmatpush1.msra.mxu0 0.0
    %3141 = vmatprep.subr.mxu0 0.0
    %3142 = vmatpush1.msra.mxu0 0.0
    %3143 = vmatprep.mubr.f32.mxu0 0.0
    %3144 = vmatmul.mubr.f32.gmra.mrb[0].mxu0 %v3077
    %v3145 = vpop.f32.mrb[0].mxu0
    %v3146 = vadd.f32 0.0, %v3145
    %v3147 = vpop.f32.mrb[0].mxu0
    %3148 = vdwg.mxu0
    %v3149 = vadd.f32 %v3070, %v3146
    %v3150 = vxor.u32 %v3149, 2147483648
    %v3151 = vmul.f32 %v3150, 1.442695
    %v3152 = vpow.pop %v3151
    %v3153 = vadd.f32 %v3152, 1.0
    %v3154 = vrcp.pop %v3153
    %v3155 = vmul.f32 1.0, %v3154
    %v3156 = vtanh.pop %v3149
    %v3157 = vld [vmem:[#allocation5] sm:$0x3]
    %3159 = vrot.lane.b32.xlu0 %v3157, 32
    %v3160 = vpop.permute.xlu0 %3159
    %v3162 = vmul.f32 %v3155, %v3160
    %3164 = vrot.lane.b32.xlu0 %v3156, 32
    %v3165 = vpop.permute.xlu0 %3164
    %v3167 = vmul.f32 %v3155, %v3165
    %3169 = vrot.lane.b32.xlu0 %v3167, 32
    %v3170 = vpop.permute.xlu0 %3169
    %v3172 = vadd.f32 %v3162, %v3170
    %v3173 = vtanh.pop %v3172
    %3175 = vrot.lane.b32.xlu0 %v3173, 32
    %v3176 = vpop.permute.xlu0 %3175
    %v3178 = vmul.f32 %v3155, %v3176
    %3180 = vrot.lane.b32.xlu0 %v3172, 96
    %v3181 = vpop.permute.xlu0 %3180
    %3183 = vst.msk [vmem:[#allocation5] sm:$0x3] %vm805, %v3181
    %3185 = vrot.lane.b32.xlu0 %v3178, 64
    %v3186 = vpop.permute.xlu0 %3185
    %3188 = vst.msk [vmem:[#allocation4] sm:$0x3] %vm805, %v3186
    %v3189 = vld [vmem:[%s716] sm:$0x3]
    %v3190 = vld [vmem:[#allocation4] sm:$0x3]
    %v3191 = vld [vmem:[%s7] sm:$0xff]
    %v3192 = vld [vmem:[%s7 + $0x8] sm:$0xff]
    %v3193 = vld [vmem:[%s7 + $0x10] sm:$0xff]
    %v3194 = vld [vmem:[%s7 + $0x18] sm:$0xff]
    %v3196 = vsel %vm815, %v3190, 0
    %3198 = vmatprep.subr.mxu0 0.0
    %3199 = vmatpush1.msra.mxu0 %v3191
    %3200 = vmatprep.subr.mxu0 0.0
    %3201 = vmatpush1.msra.mxu0 %v3192
    %3202 = vmatprep.subr.mxu0 0.0
    %3203 = vmatpush1.msra.mxu0 %v3193
    %3204 = vmatprep.subr.mxu0 0.0
    %3205 = vmatpush1.msra.mxu0 %v3194
    %3206 = vmatprep.subr.mxu0 0.0
    %3207 = vmatpush1.msra.mxu0 0.0
    %3208 = vmatprep.subr.mxu0 0.0
    %3209 = vmatpush1.msra.mxu0 0.0
    %3210 = vmatprep.subr.mxu0 0.0
    %3211 = vmatpush1.msra.mxu0 0.0
    %3212 = vmatprep.subr.mxu0 0.0
    %3213 = vmatpush1.msra.mxu0 0.0
    %3214 = vmatprep.subr.mxu0 0.0
    %3215 = vmatpush1.msra.mxu0 0.0
    %3216 = vmatprep.subr.mxu0 0.0
    %3217 = vmatpush1.msra.mxu0 0.0
    %3218 = vmatprep.subr.mxu0 0.0
    %3219 = vmatpush1.msra.mxu0 0.0
    %3220 = vmatprep.subr.mxu0 0.0
    %3221 = vmatpush1.msra.mxu0 0.0
    %3222 = vmatprep.subr.mxu0 0.0
    %3223 = vmatpush1.msra.mxu0 0.0
    %3224 = vmatprep.subr.mxu0 0.0
    %3225 = vmatpush1.msra.mxu0 0.0
    %3226 = vmatprep.subr.mxu0 0.0
    %3227 = vmatpush1.msra.mxu0 0.0
    %3228 = vmatprep.subr.mxu0 0.0
    %3229 = vmatpush1.msra.mxu0 0.0
    %3230 = vmatprep.subr.mxu0 0.0
    %3231 = vmatpush1.msra.mxu0 0.0
    %3232 = vmatprep.subr.mxu0 0.0
    %3233 = vmatpush1.msra.mxu0 0.0
    %3234 = vmatprep.subr.mxu0 0.0
    %3235 = vmatpush1.msra.mxu0 0.0
    %3236 = vmatprep.subr.mxu0 0.0
    %3237 = vmatpush1.msra.mxu0 0.0
    %3238 = vmatprep.subr.mxu0 0.0
    %3239 = vmatpush1.msra.mxu0 0.0
    %3240 = vmatprep.subr.mxu0 0.0
    %3241 = vmatpush1.msra.mxu0 0.0
    %3242 = vmatprep.subr.mxu0 0.0
    %3243 = vmatpush1.msra.mxu0 0.0
    %3244 = vmatprep.subr.mxu0 0.0
    %3245 = vmatpush1.msra.mxu0 0.0
    %3246 = vmatprep.subr.mxu0 0.0
    %3247 = vmatpush1.msra.mxu0 0.0
    %3248 = vmatprep.subr.mxu0 0.0
    %3249 = vmatpush1.msra.mxu0 0.0
    %3250 = vmatprep.subr.mxu0 0.0
    %3251 = vmatpush1.msra.mxu0 0.0
    %3252 = vmatprep.subr.mxu0 0.0
    %3253 = vmatpush1.msra.mxu0 0.0
    %3254 = vmatprep.subr.mxu0 0.0
    %3255 = vmatpush1.msra.mxu0 0.0
    %3256 = vmatprep.subr.mxu0 0.0
    %3257 = vmatpush1.msra.mxu0 0.0
    %3258 = vmatprep.subr.mxu0 0.0
    %3259 = vmatpush1.msra.mxu0 0.0
    %3260 = vmatprep.subr.mxu0 0.0
    %3261 = vmatpush1.msra.mxu0 0.0
    %3262 = vmatprep.mubr.f32.mxu0 0.0
    %3263 = vmatmul.mubr.f32.gmra.mrb[0].mxu0 %v3196
    %v3264 = vpop.f32.mrb[0].mxu0
    %v3265 = vadd.f32 0.0, %v3264
    %v3266 = vpop.f32.mrb[0].mxu0
    %3267 = vdwg.mxu0
    %v3268 = vadd.f32 %v3189, %v3265
    %v3269 = vxor.u32 %v3268, 2147483648
    %v3270 = vmul.f32 %v3269, 1.442695
    %v3271 = vpow.pop %v3270
    %v3272 = vadd.f32 %v3271, 1.0
    %v3273 = vrcp.pop %v3272
    %v3274 = vmul.f32 1.0, %v3273
    %v3275 = vtanh.pop %v3268
    %v3276 = vld [vmem:[#allocation5] sm:$0x3]
    %3278 = vrot.lane.b32.xlu0 %v3276, 32
    %v3279 = vpop.permute.xlu0 %3278
    %v3281 = vmul.f32 %v3274, %v3279
    %3283 = vrot.lane.b32.xlu0 %v3275, 32
    %v3284 = vpop.permute.xlu0 %3283
    %v3286 = vmul.f32 %v3274, %v3284
    %3288 = vrot.lane.b32.xlu0 %v3286, 32
    %v3289 = vpop.permute.xlu0 %3288
    %v3291 = vadd.f32 %v3281, %v3289
    %v3292 = vtanh.pop %v3291
    %3294 = vrot.lane.b32.xlu0 %v3292, 32
    %v3295 = vpop.permute.xlu0 %3294
    %v3297 = vmul.f32 %v3274, %v3295
    %3299 = vrot.lane.b32.xlu0 %v3291, 96
    %v3300 = vpop.permute.xlu0 %3299
    %3302 = vst.msk [vmem:[#allocation5] sm:$0x3] %vm805, %v3300
    %3304 = vrot.lane.b32.xlu0 %v3297, 64
    %v3305 = vpop.permute.xlu0 %3304
    %3307 = vst.msk [vmem:[#allocation4] sm:$0x3] %vm805, %v3305
    %v3308 = vld [vmem:[%s802] sm:$0x3]
    %v3309 = vld [vmem:[#allocation4] sm:$0x3]
    %v3310 = vld [vmem:[%s7] sm:$0xff]
    %v3311 = vld [vmem:[%s7 + $0x8] sm:$0xff]
    %v3312 = vld [vmem:[%s7 + $0x10] sm:$0xff]
    %v3313 = vld [vmem:[%s7 + $0x18] sm:$0xff]
    %v3315 = vsel %vm815, %v3309, 0
    %3317 = vmatprep.subr.mxu0 0.0
    %3318 = vmatpush1.msra.mxu0 %v3310
    %3319 = vmatprep.subr.mxu0 0.0
    %3320 = vmatpush1.msra.mxu0 %v3311
    %3321 = vmatprep.subr.mxu0 0.0
    %3322 = vmatpush1.msra.mxu0 %v3312
    %3323 = vmatprep.subr.mxu0 0.0
    %3324 = vmatpush1.msra.mxu0 %v3313
    %3325 = vmatprep.subr.mxu0 0.0
    %3326 = vmatpush1.msra.mxu0 0.0
    %3327 = vmatprep.subr.mxu0 0.0
    %3328 = vmatpush1.msra.mxu0 0.0
    %3329 = vmatprep.subr.mxu0 0.0
    %3330 = vmatpush1.msra.mxu0 0.0
    %3331 = vmatprep.subr.mxu0 0.0
    %3332 = vmatpush1.msra.mxu0 0.0
    %3333 = vmatprep.subr.mxu0 0.0
    %3334 = vmatpush1.msra.mxu0 0.0
    %3335 = vmatprep.subr.mxu0 0.0
    %3336 = vmatpush1.msra.mxu0 0.0
    %3337 = vmatprep.subr.mxu0 0.0
    %3338 = vmatpush1.msra.mxu0 0.0
    %3339 = vmatprep.subr.mxu0 0.0
    %3340 = vmatpush1.msra.mxu0 0.0
    %3341 = vmatprep.subr.mxu0 0.0
    %3342 = vmatpush1.msra.mxu0 0.0
    %3343 = vmatprep.subr.mxu0 0.0
    %3344 = vmatpush1.msra.mxu0 0.0
    %3345 = vmatprep.subr.mxu0 0.0
    %3346 = vmatpush1.msra.mxu0 0.0
    %3347 = vmatprep.subr.mxu0 0.0
    %3348 = vmatpush1.msra.mxu0 0.0
    %3349 = vmatprep.subr.mxu0 0.0
    %3350 = vmatpush1.msra.mxu0 0.0
    %3351 = vmatprep.subr.mxu0 0.0
    %3352 = vmatpush1.msra.mxu0 0.0
    %3353 = vmatprep.subr.mxu0 0.0
    %3354 = vmatpush1.msra.mxu0 0.0
    %3355 = vmatprep.subr.mxu0 0.0
    %3356 = vmatpush1.msra.mxu0 0.0
    %3357 = vmatprep.subr.mxu0 0.0
    %3358 = vmatpush1.msra.mxu0 0.0
    %3359 = vmatprep.subr.mxu0 0.0
    %3360 = vmatpush1.msra.mxu0 0.0
    %3361 = vmatprep.subr.mxu0 0.0
    %3362 = vmatpush1.msra.mxu0 0.0
    %3363 = vmatprep.subr.mxu0 0.0
    %3364 = vmatpush1.msra.mxu0 0.0
    %3365 = vmatprep.subr.mxu0 0.0
    %3366 = vmatpush1.msra.mxu0 0.0
    %3367 = vmatprep.subr.mxu0 0.0
    %3368 = vmatpush1.msra.mxu0 0.0
    %3369 = vmatprep.subr.mxu0 0.0
    %3370 = vmatpush1.msra.mxu0 0.0
    %3371 = vmatprep.subr.mxu0 0.0
    %3372 = vmatpush1.msra.mxu0 0.0
    %3373 = vmatprep.subr.mxu0 0.0
    %3374 = vmatpush1.msra.mxu0 0.0
    %3375 = vmatprep.subr.mxu0 0.0
    %3376 = vmatpush1.msra.mxu0 0.0
    %3377 = vmatprep.subr.mxu0 0.0
    %3378 = vmatpush1.msra.mxu0 0.0
    %3379 = vmatprep.subr.mxu0 0.0
    %3380 = vmatpush1.msra.mxu0 0.0
    %3381 = vmatprep.mubr.f32.mxu0 0.0
    %3382 = vmatmul.mubr.f32.gmra.mrb[0].mxu0 %v3315
    %v3383 = vpop.f32.mrb[0].mxu0
    %v3384 = vadd.f32 0.0, %v3383
    %v3385 = vpop.f32.mrb[0].mxu0
    %3386 = vdwg.mxu0
    %v3387 = vadd.f32 %v3308, %v3384
    %v3388 = vxor.u32 %v3387, 2147483648
    %v3389 = vmul.f32 %v3388, 1.442695
    %v3390 = vpow.pop %v3389
    %v3391 = vadd.f32 %v3390, 1.0
    %v3392 = vrcp.pop %v3391
    %v3393 = vmul.f32 1.0, %v3392
    %v3394 = vtanh.pop %v3387
    %v3395 = vld [vmem:[#allocation5] sm:$0x3]
    %3397 = vrot.lane.b32.xlu0 %v3395, 32
    %v3398 = vpop.permute.xlu0 %3397
    %v3400 = vmul.f32 %v3393, %v3398
    %3402 = vrot.lane.b32.xlu0 %v3394, 32
    %v3403 = vpop.permute.xlu0 %3402
    %v3405 = vmul.f32 %v3393, %v3403
    %3407 = vrot.lane.b32.xlu0 %v3405, 32
    %v3408 = vpop.permute.xlu0 %3407
    %v3410 = vadd.f32 %v3400, %v3408
    %v3411 = vtanh.pop %v3410
    %3413 = vrot.lane.b32.xlu0 %v3411, 32
    %v3414 = vpop.permute.xlu0 %3413
    %v3416 = vmul.f32 %v3393, %v3414
    %3418 = vrot.lane.b32.xlu0 %v3410, 96
    %v3419 = vpop.permute.xlu0 %3418
    %3421 = vst.msk [vmem:[#allocation5] sm:$0x3] %vm805, %v3419
    %3423 = vrot.lane.b32.xlu0 %v3416, 64
    %v3424 = vpop.permute.xlu0 %3423
    %3426 = vst.msk [vmem:[#allocation4] sm:$0x3] %vm805, %v3424
    %v3427 = vld [vmem:[#allocation4] sm:$0x3]
    %s3428 = scalar_lea.vmem [#allocation16], 2
    %3429 = vst.msk [vmem:[%s3428] sm:$0x3] %vm805, %v3427
    %v3430 = vld [vmem:[#allocation5] sm:$0x3]
    %s3431 = scalar_lea.vmem [#allocation18], 2
    %3432 = vst.msk [vmem:[%s3431] sm:$0x3] %vm805, %v3430
    %v3433 = vld [vmem:[#allocation4] sm:$0x3]
    %v3434 = vld [vmem:[#allocation14] sm:$0xff]
    %v3435 = vld [vmem:[#allocation14 + $0x8] sm:$0xff]
    %v3436 = vld [vmem:[#allocation14 + $0x10] sm:$0xff]
    %v3437 = vld [vmem:[#allocation14 + $0x18] sm:$0xff]
    %v3438 = vld [vmem:[%s10] sm:$0x1]
    %v3440 = vlaneseq
    %v3441 = vshrl.u32 %v3440, 7
    %v3442 = vsub.s32 0, %v3441
    %v3443 = vrot.slane %v3438, %v3442
    %v3446 = vsel %vm815, %v3433, 0
    %3448 = vmatprep.subr.mxu0 0.0
    %3449 = vmatpush1.msra.mxu0 %v3434
    %3450 = vmatprep.subr.mxu0 0.0
    %3451 = vmatpush1.msra.mxu0 %v3435
    %3452 = vmatprep.subr.mxu0 0.0
    %3453 = vmatpush1.msra.mxu0 %v3436
    %3454 = vmatprep.subr.mxu0 0.0
    %3455 = vmatpush1.msra.mxu0 %v3437
    %3456 = vmatprep.subr.mxu0 0.0
    %3457 = vmatpush1.msra.mxu0 0.0
    %3458 = vmatprep.subr.mxu0 0.0
    %3459 = vmatpush1.msra.mxu0 0.0
    %3460 = vmatprep.subr.mxu0 0.0
    %3461 = vmatpush1.msra.mxu0 0.0
    %3462 = vmatprep.subr.mxu0 0.0
    %3463 = vmatpush1.msra.mxu0 0.0
    %3464 = vmatprep.subr.mxu0 0.0
    %3465 = vmatpush1.msra.mxu0 0.0
    %3466 = vmatprep.subr.mxu0 0.0
    %3467 = vmatpush1.msra.mxu0 0.0
    %3468 = vmatprep.subr.mxu0 0.0
    %3469 = vmatpush1.msra.mxu0 0.0
    %3470 = vmatprep.subr.mxu0 0.0
    %3471 = vmatpush1.msra.mxu0 0.0
    %3472 = vmatprep.subr.mxu0 0.0
    %3473 = vmatpush1.msra.mxu0 0.0
    %3474 = vmatprep.subr.mxu0 0.0
    %3475 = vmatpush1.msra.mxu0 0.0
    %3476 = vmatprep.subr.mxu0 0.0
    %3477 = vmatpush1.msra.mxu0 0.0
    %3478 = vmatprep.subr.mxu0 0.0
    %3479 = vmatpush1.msra.mxu0 0.0
    %3480 = vmatprep.subr.mxu0 0.0
    %3481 = vmatpush1.msra.mxu0 0.0
    %3482 = vmatprep.subr.mxu0 0.0
    %3483 = vmatpush1.msra.mxu0 0.0
    %3484 = vmatprep.subr.mxu0 0.0
    %3485 = vmatpush1.msra.mxu0 0.0
    %3486 = vmatprep.subr.mxu0 0.0
    %3487 = vmatpush1.msra.mxu0 0.0
    %3488 = vmatprep.subr.mxu0 0.0
    %3489 = vmatpush1.msra.mxu0 0.0
    %3490 = vmatprep.subr.mxu0 0.0
    %3491 = vmatpush1.msra.mxu0 0.0
    %3492 = vmatprep.subr.mxu0 0.0
    %3493 = vmatpush1.msra.mxu0 0.0
    %3494 = vmatprep.subr.mxu0 0.0
    %3495 = vmatpush1.msra.mxu0 0.0
    %3496 = vmatprep.subr.mxu0 0.0
    %3497 = vmatpush1.msra.mxu0 0.0
    %3498 = vmatprep.subr.mxu0 0.0
    %3499 = vmatpush1.msra.mxu0 0.0
    %3500 = vmatprep.subr.mxu0 0.0
    %3501 = vmatpush1.msra.mxu0 0.0
    %3502 = vmatprep.subr.mxu0 0.0
    %3503 = vmatpush1.msra.mxu0 0.0
    %3504 = vmatprep.subr.mxu0 0.0
    %3505 = vmatpush1.msra.mxu0 0.0
    %3506 = vmatprep.subr.mxu0 0.0
    %3507 = vmatpush1.msra.mxu0 0.0
    %3508 = vmatprep.subr.mxu0 0.0
    %3509 = vmatpush1.msra.mxu0 0.0
    %3510 = vmatprep.subr.mxu0 0.0
    %3511 = vmatpush1.msra.mxu0 0.0
    %3512 = vmatprep.mubr.f32.mxu0 0.0
    %3513 = vmatmul.mubr.f32.gmra.mrb[0].mxu0 %v3446
    %v3514 = vpop.f32.mrb[0].mxu0
    %v3515 = vadd.f32 %v3443, %v3514
    %v3516 = vpop.f32.mrb[0].mxu0
    %3517 = vdwg.mxu0
    %v3518 = vmax.f32 %v3515, 0.0
    %v3519 = vld [vmem:[%s11] sm:$0xff]
    %v3520 = vld [vmem:[%s11 + $0x8] sm:$0xff]
    %v3521 = vld [vmem:[%s11 + $0x10] sm:$0xff]
    %v3522 = vld [vmem:[%s11 + $0x18] sm:$0xff]
    %v3523 = vld [vmem:[%s11 + $0x20] sm:$0xff]
    %v3524 = vld [vmem:[%s11 + $0x28] sm:$0xff]
    %v3525 = vld [vmem:[%s11 + $0x30] sm:$0xff]
    %v3526 = vld [vmem:[%s11 + $0x38] sm:$0xff]
    %v3527 = vld [vmem:[%s12] sm:$0x1]
    %v3529 = vlaneseq
    %v3530 = vshrl.u32 %v3529, 7
    %v3531 = vsub.s32 0, %v3530
    %v3532 = vrot.slane %v3527, %v3531
    %vm3534 = vcmask 523264
    %v3536 = vsel %vm3534, %v3518, 0
    %3538 = vmatprep.subr.mxu0 0.0
    %3539 = vmatpush1.msra.mxu0 %v3519
    %3540 = vmatprep.subr.mxu0 0.0
    %3541 = vmatpush1.msra.mxu0 %v3520
    %3542 = vmatprep.subr.mxu0 0.0
    %3543 = vmatpush1.msra.mxu0 %v3521
    %3544 = vmatprep.subr.mxu0 0.0
    %3545 = vmatpush1.msra.mxu0 %v3522
    %3546 = vmatprep.subr.mxu0 0.0
    %3547 = vmatpush1.msra.mxu0 %v3523
    %3548 = vmatprep.subr.mxu0 0.0
    %3549 = vmatpush1.msra.mxu0 %v3524
    %3550 = vmatprep.subr.mxu0 0.0
    %3551 = vmatpush1.msra.mxu0 %v3525
    %3552 = vmatprep.subr.mxu0 0.0
    %3553 = vmatpush1.msra.mxu0 %v3526
    %3554 = vmatprep.subr.mxu0 0.0
    %3555 = vmatpush1.msra.mxu0 0.0
    %3556 = vmatprep.subr.mxu0 0.0
    %3557 = vmatpush1.msra.mxu0 0.0
    %3558 = vmatprep.subr.mxu0 0.0
    %3559 = vmatpush1.msra.mxu0 0.0
    %3560 = vmatprep.subr.mxu0 0.0
    %3561 = vmatpush1.msra.mxu0 0.0
    %3562 = vmatprep.subr.mxu0 0.0
    %3563 = vmatpush1.msra.mxu0 0.0
    %3564 = vmatprep.subr.mxu0 0.0
    %3565 = vmatpush1.msra.mxu0 0.0
    %3566 = vmatprep.subr.mxu0 0.0
    %3567 = vmatpush1.msra.mxu0 0.0
    %3568 = vmatprep.subr.mxu0 0.0
    %3569 = vmatpush1.msra.mxu0 0.0
    %3570 = vmatprep.subr.mxu0 0.0
    %3571 = vmatpush1.msra.mxu0 0.0
    %3572 = vmatprep.subr.mxu0 0.0
    %3573 = vmatpush1.msra.mxu0 0.0
    %3574 = vmatprep.subr.mxu0 0.0
    %3575 = vmatpush1.msra.mxu0 0.0
    %3576 = vmatprep.subr.mxu0 0.0
    %3577 = vmatpush1.msra.mxu0 0.0
    %3578 = vmatprep.subr.mxu0 0.0
    %3579 = vmatpush1.msra.mxu0 0.0
    %3580 = vmatprep.subr.mxu0 0.0
    %3581 = vmatpush1.msra.mxu0 0.0
    %3582 = vmatprep.subr.mxu0 0.0
    %3583 = vmatpush1.msra.mxu0 0.0
    %3584 = vmatprep.subr.mxu0 0.0
    %3585 = vmatpush1.msra.mxu0 0.0
    %3586 = vmatprep.subr.mxu0 0.0
    %3587 = vmatpush1.msra.mxu0 0.0
    %3588 = vmatprep.subr.mxu0 0.0
    %3589 = vmatpush1.msra.mxu0 0.0
    %3590 = vmatprep.subr.mxu0 0.0
    %3591 = vmatpush1.msra.mxu0 0.0
    %3592 = vmatprep.subr.mxu0 0.0
    %3593 = vmatpush1.msra.mxu0 0.0
    %3594 = vmatprep.subr.mxu0 0.0
    %3595 = vmatpush1.msra.mxu0 0.0
    %3596 = vmatprep.subr.mxu0 0.0
    %3597 = vmatpush1.msra.mxu0 0.0
    %3598 = vmatprep.subr.mxu0 0.0
    %3599 = vmatpush1.msra.mxu0 0.0
    %3600 = vmatprep.subr.mxu0 0.0
    %3601 = vmatpush1.msra.mxu0 0.0
    %3602 = vmatprep.mubr.f32.mxu0 0.0
    %3603 = vmatmul.mubr.f32.gmra.mrb[0].mxu0 %v3536
    %v3604 = vpop.f32.mrb[0].mxu0
    %v3605 = vadd.f32 %v3532, %v3604
    %v3606 = vpop.f32.mrb[0].mxu0
    %3607 = vdwg.mxu0
    %vm3608 = vcmask 58368
    %3609 = vst.msk [vmem:[#allocation15] sm:$0x3] %vm3608, %v3605
    // Predicated region
    $region74: #{tpu_custom_call.1} parent=1 // pred_check
      _
    $region75: #{tpu_custom_call.1} parent=1 // pred_check_branch
      %3611 = sbr.rel (0) target = $region77
    $region76: #{tpu_custom_call.1} parent=1 // pred_region
      %s3613 = ssub.s32 32, 32
      %3614 = vsyncadd [#allocation8], %s3613
      %s3616 = sshll.u32 [#allocation15], 4
      %s3617 = int_to_ptr.vmem [resolvable:$true] %s3616
      %3619 = dma.vmem_to_hbm [thread:$0]  %s3617, 32, %s13, [#allocation8]
    $region77: #{tpu_custom_call.1} parent=1 // pred_fallthru
      _
    // Predicated region
    $region78: #{tpu_custom_call.1} parent=1 // pred_check
      _
    $region79: #{tpu_custom_call.1} parent=1 // pred_check_branch
      %3621 = sbr.rel (0) target = $region81
    $region80: #{tpu_custom_call.1} parent=1 // pred_region
      %s3623 = ssub.s32 64, 64
      %3624 = vsyncadd [#allocation17], %s3623
      %s3625 = sshll.u32 [#allocation16], 4
      %s3626 = int_to_ptr.vmem [resolvable:$true] %s3625
      %3631 = dma.vmem_to_hbm [thread:$0]  %s3626, 64, %s14, [#allocation17], 32, 32, 2
    $region81: #{tpu_custom_call.1} parent=1 // pred_fallthru
      _
    // Predicated region
    $region82: #{tpu_custom_call.1} parent=1 // pred_check
      _
    $region83: #{tpu_custom_call.1} parent=1 // pred_check_branch
      %3633 = sbr.rel (0) target = $region85
    $region84: #{tpu_custom_call.1} parent=1 // pred_region
      %s3635 = ssub.s32 64, 64
      %3636 = vsyncadd [#allocation17], %s3635
      %s3637 = sshll.u32 [#allocation18], 4
      %s3638 = int_to_ptr.vmem [resolvable:$true] %s3637
      %3643 = dma.vmem_to_hbm [thread:$0]  %s3638, 64, %s15, [#allocation17], 32, 32, 2
    $region85: #{tpu_custom_call.1} parent=1 // pred_fallthru
      _
    // Predicated region
    $region86: #{tpu_custom_call.1} parent=1 // pred_check
      _
    $region87: #{tpu_custom_call.1} parent=1 // pred_check_branch
      %3645 = sbr.rel (0) target = $region89
    $region88: #{tpu_custom_call.1} parent=1 // pred_region
      %3646 = dma.done [#allocation8], 32
    $region89: #{tpu_custom_call.1} parent=1 // pred_fallthru
      _
    // Predicated region
    $region90: #{tpu_custom_call.1} parent=1 // pred_check
      _
    $region91: #{tpu_custom_call.1} parent=1 // pred_check_branch
      %3648 = sbr.rel (0) target = $region93
    $region92: #{tpu_custom_call.1} parent=1 // pred_region
      %3649 = dma.done [#allocation17], 64
    $region93: #{tpu_custom_call.1} parent=1 // pred_fallthru
      _
    // Predicated region
    $region94: #{tpu_custom_call.1} parent=1 // pred_check
      _
    $region95: #{tpu_custom_call.1} parent=1 // pred_check_branch
      %3651 = sbr.rel (0) target = $region97
    $region96: #{tpu_custom_call.1} parent=1 // pred_region
      %3652 = dma.done [#allocation17], 64
    $region97: #{tpu_custom_call.1} parent=1 // pred_fallthru
      _
    %3653 = vsyncpa [#allocation7], 1
    %3654 = vsyncpa [#allocation10], 1
    %3655 = vsyncpa [#allocation13], 1
    %3656 = vsyncpa [#allocation8], 1
    %3657 = vsyncpa [#allocation17], 1

</llo_original>
